<compile_context>
chip_gen: v5e
topology: v5e:2x2
jax: 0.10.0
libtpu: 0.0.40
codegen_flags: <defaults>
</compile_context>

<pallas_src>
import jax
import jax.numpy as jnp
from jax import lax
from jax.experimental import pallas as pl
from jax.experimental.pallas import tpu as pltpu

N, C_IN, C_OUT, H, W = 2, 3, 32, 16, 16   # group_norm(32) needs C_OUT % 32 == 0
HP, WP = H + 2, W + 2                     # zero-padded spatial extent
HW = H * W                                # matmul M dimension (256)
GROUPS = 32
EPS = 1e-5


def residual_block_kernel(x_ref, w1s_ref, w2_ref, bs_ref, out_ref,
                          xpad_ref, hpad_ref):
    # x_ref   : (1, C_IN, H*W) f32     NCHW-flat input for this image
    # w1s_ref : (9*C_IN, 2*C_OUT) f32  fused [conv1 | shortcut-at-center-tap]
    # w2_ref  : (9*C_OUT, C_OUT) bf16  conv2 taps, row = (dy*3+dx)*C_OUT + c
    # bs_ref  : (1, C_OUT) f32         shortcut bias (conv biases cancelled by GN)
    # out_ref : (1, C_OUT, H*W) f32    lane-dense NCHW output
    # xpad/hpad : VMEM scratch, zero-halo padded activations for the 3x3 convs

    def zero_border(pad_ref, c):
        # only the 1-pixel halo; the interior is fully overwritten each step
        z_row = jnp.zeros((1, WP, c), pad_ref.dtype)
        z_col = jnp.zeros((HP, 1, c), pad_ref.dtype)
        pad_ref[0:1, :, :] = z_row
        pad_ref[HP - 1:HP, :, :] = z_row
        pad_ref[:, 0:1, :] = z_col
        pad_ref[:, WP - 1:WP, :] = z_col

    def tap(pad_ref, dy, dx, c):
        # shifted 16x16 window, flattened to (HW, c); leading-dim merge only
        return pad_ref[dy:dy + H, dx:dx + W, :].reshape(HW, c)

    def gn_relu(a):
        # GroupNorm(32) with C_OUT == GROUPS -> per-channel, per-image stats
        mean = jnp.mean(a, axis=0, keepdims=True)            # (1, C_OUT)
        d = a - mean
        var = jnp.mean(d * d, axis=0, keepdims=True)         # two-pass, stable
        return jnp.maximum(d * lax.rsqrt(var + EPS), 0.0)

    # ---- layout fix: (C_IN, HW) -> (HW, C_IN); tiny 2-D transpose ----
    x_t = x_ref[0].T                                         # (HW, C_IN) f32

    # ---- conv1 (3x3, pad 1) + fused 1x1 shortcut: (256x27)@(27x64) f32 ----
    zero_border(xpad_ref, C_IN)
    xpad_ref[1:H + 1, 1:W + 1, :] = x_t.reshape(H, W, C_IN).astype(xpad_ref.dtype)
    p1 = jnp.concatenate([tap(xpad_ref, dy, dx, C_IN)
                          for dy in range(3) for dx in range(3)], axis=-1)
    a = jnp.dot(p1, w1s_ref[...], preferred_element_type=jnp.float32)  # (HW, 64)
    h1 = gn_relu(a[:, :C_OUT])          # conv1 bias dropped: cancelled by GN mean
    sc = a[:, C_OUT:] + bs_ref[...]     # shortcut path keeps its bias (no GN)

    # ---- conv2 (3x3, pad 1): bf16 im2col, K accumulated in 3 dy-chunks ----
    zero_border(hpad_ref, C_OUT)
    hpad_ref[1:H + 1, 1:W + 1, :] = h1.reshape(H, W, C_OUT).astype(hpad_ref.dtype)
    a2 = jnp.zeros((HW, C_OUT), jnp.float32)
    for dy in range(3):
        p = jnp.concatenate([tap(hpad_ref, dy, dx, C_OUT)
                             for dx in range(3)], axis=-1)             # (HW, 96) bf16
        a2 = a2 + jnp.dot(p, w2_ref[dy * 3 * C_OUT:(dy + 1) * 3 * C_OUT, :],
                          preferred_element_type=jnp.float32)
    h2 = gn_relu(a2)                     # conv2 bias likewise dropped

    # ---- residual add, then lane-dense NCHW store: (HW, C) -> (C, HW) ----
    out_ref[0] = (h2 + sc).T


def residual_block(x_nchw, params):
    """x_nchw: (N, C_IN, H, W) float32 -> (N, C_OUT, H, W) float32."""
    w1, b1, w2, b2, ws, bs = params        # w1/w2 HWIO, ws (C_IN, C_OUT)
    del b1, b2                             # exactly cancelled by GroupNorm (1 ch/group)
    assert C_OUT == GROUPS, "per-channel GN path assumes channels-per-group == 1"

    x_in = x_nchw.reshape(N, C_IN, HW)                       # free reshape, no transpose

    # fused conv1 | shortcut weight: shortcut lives on the center-tap rows
    w1_r = w1.reshape(9 * C_IN, C_OUT)
    ws_center = jnp.zeros((9 * C_IN, C_OUT), jnp.float32).at[4 * C_IN:5 * C_IN, :].set(ws)
    w1s = jnp.concatenate([w1_r, ws_center], axis=1)         # (27, 64) f32
    w2_r = w2.reshape(9 * C_OUT, C_OUT).astype(jnp.bfloat16) # (288, 32) bf16
    bs_2 = bs.reshape(1, C_OUT).astype(jnp.float32)

    out = pl.pallas_call(
        residual_block_kernel,
        out_shape=jax.ShapeDtypeStruct((N, C_OUT, HW), jnp.float32),
        grid_spec=pltpu.PrefetchScalarGridSpec(
            num_scalar_prefetch=0,
            grid=(N,),                                       # one program per image
            in_specs=[
                pl.BlockSpec((1, C_IN, HW), lambda b: (b, 0, 0)),
                pl.BlockSpec((9 * C_IN, 2 * C_OUT), lambda b: (0, 0)),
                pl.BlockSpec((9 * C_OUT, C_OUT), lambda b: (0, 0)),
                pl.BlockSpec((1, C_OUT), lambda b: (0, 0)),
            ],
            out_specs=pl.BlockSpec((1, C_OUT, HW), lambda b: (b, 0, 0)),
            scratch_shapes=[
                pltpu.VMEM((HP, WP, C_IN), jnp.float32),     # padded x   (f32, tiny)
                pltpu.VMEM((HP, WP, C_OUT), jnp.bfloat16),   # padded h1  (bf16)
            ],
        ),
        compiler_params=pltpu.CompilerParams(
            dimension_semantics=("parallel",)),              # v7x: 1 image / TC
    )(x_in, w1s, w2_r, bs_2)

    return out.reshape(N, C_OUT, H, W)                       # free reshape (no transpose)


def reference_forward(x, params):
    """Pure-JAX NCHW reference (matches the PyTorch module semantics, f32)."""
    w1, b1, w2, b2, ws, bs = params
    w1_oihw = jnp.transpose(w1, (3, 2, 0, 1))
    w2_oihw = jnp.transpose(w2, (3, 2, 0, 1))
    ws_oihw = jnp.transpose(ws, (1, 0))[:, :, None, None]

    def conv(z, w, b, pad):
        y = lax.conv_general_dilated(z, w, (1, 1), [(pad, pad), (pad, pad)],
                                     dimension_numbers=('NCHW', 'OIHW', 'NCHW'))
        return y + b[None, :, None, None]

    def gn(z):
        n, c, h, w = z.shape
        zr = z.reshape(n, GROUPS, c // GROUPS, h, w)
        mean = zr.mean(axis=(2, 3, 4), keepdims=True)
        var = zr.var(axis=(2, 3, 4), keepdims=True)
        return ((zr - mean) * lax.rsqrt(var + EPS)).reshape(n, c, h, w)

    h = jax.nn.relu(gn(conv(x, w1_oihw, b1, 1)))
    h = jax.nn.relu(gn(conv(h, w2_oihw, b2, 1)))
    return h + conv(x, ws_oihw, bs, 0)


if __name__ == "__main__":
    key = jax.random.PRNGKey(0)
    k = jax.random.split(key, 7)
    x = jax.random.normal(k[0], (N, C_IN, H, W), jnp.float32)
    w1 = jax.random.normal(k[1], (3, 3, C_IN, C_OUT), jnp.float32) * 0.1
    b1 = jax.random.normal(k[2], (C_OUT,), jnp.float32) * 0.1
    w2 = jax.random.normal(k[3], (3, 3, C_OUT, C_OUT), jnp.float32) * 0.1
    b2 = jax.random.normal(k[4], (C_OUT,), jnp.float32) * 0.1
    ws = jax.random.normal(k[5], (C_IN, C_OUT), jnp.float32) * 0.1
    bs = jax.random.normal(k[6], (C_OUT,), jnp.float32) * 0.1
    params = (w1, b1, w2, b2, ws, bs)

    out = jax.block_until_ready(residual_block(x, params))
    assert out.shape == (N, C_OUT, H, W)

    ref = reference_forward(x, params)
    err = float(jnp.max(jnp.abs(out - ref)))
    # conv2 uses bf16 MXU operands (f32 accumulation) -> loosened tolerance vs f32 ref
    assert jnp.allclose(out, ref, atol=3e-2, rtol=3e-2), f"max abs err {err}"
    print("KERNEL_OK")
</pallas_src>

<mosaic_0001>
module attributes {stable_mosaic.version = 11 : i64} {
  func.func @residual_block_kernel(%arg0: i32, %arg1: memref<1x3x256xf32, #tpu.memory_space<vmem>>, %arg2: memref<27x64xf32, #tpu.memory_space<vmem>>, %arg3: memref<288x32xbf16, #tpu.memory_space<vmem>>, %arg4: memref<1x32xf32, #tpu.memory_space<vmem>>, %arg5: memref<1x32x256xf32, #tpu.memory_space<vmem>>, %arg6: memref<18x18x3xf32, #tpu.memory_space<vmem>>, %arg7: memref<18x18x32xbf16, #tpu.memory_space<vmem>>) attributes {dimension_semantics = [#tpu.dimension_semantics<parallel>], iteration_bounds = array<i64: 2>, scalar_prefetch = 0 : i64, scratch_operands = 2 : i64, tpu.core_type = #tpu.core_type<tc>, window_params = [{transform_indices = @transform_0, window_bounds = array<i64: 1, 3, 256>}, {pipeline_mode = #tpu.pipeline_mode<synchronous>, transform_indices = @transform_1, window_bounds = array<i64: 27, 64>}, {pipeline_mode = #tpu.pipeline_mode<synchronous>, transform_indices = @transform_2, window_bounds = array<i64: 288, 32>}, {pipeline_mode = #tpu.pipeline_mode<synchronous>, transform_indices = @transform_3, window_bounds = array<i64: 1, 32>}, {transform_indices = @transform_4, window_bounds = array<i64: 1, 32, 256>}]} {
    %c0 = arith.constant 0 : index
    %c0_0 = arith.constant 0 : index
    %c0_1 = arith.constant 0 : index
    %0 = vector.load %arg1[%c0, %c0_0, %c0_1] : memref<1x3x256xf32, #tpu.memory_space<vmem>>, vector<1x3x256xf32>
    %1 = vector.shape_cast %0 : vector<1x3x256xf32> to vector<3x256xf32>
    %2 = tpu.transpose %1, [1, 0] : vector<3x256xf32> -> vector<256x3xf32>
    %cst = arith.constant 0.000000e+00 : f32
    %3 = vector.broadcast %cst : f32 to vector<1x18x3xf32>
    %cst_2 = arith.constant 0.000000e+00 : f32
    %4 = vector.broadcast %cst_2 : f32 to vector<18x1x3xf32>
    %c0_3 = arith.constant 0 : index
    %c0_4 = arith.constant 0 : index
    %c0_5 = arith.constant 0 : index
    %5 = vector.load %arg6[%c0_3, %c0_4, %c0_5] : memref<18x18x3xf32, #tpu.memory_space<vmem>>, vector<1x18x3xf32>
    tpu.vector_store %arg6[%c0_3, %c0_4, %c0_5], %3 {strides = array<i32>} : memref<18x18x3xf32, #tpu.memory_space<vmem>>, vector<1x18x3xf32>,
    %c17 = arith.constant 17 : index
    %c0_6 = arith.constant 0 : index
    %c0_7 = arith.constant 0 : index
    %6 = vector.load %arg6[%c17, %c0_6, %c0_7] : memref<18x18x3xf32, #tpu.memory_space<vmem>>, vector<1x18x3xf32>
    tpu.vector_store %arg6[%c17, %c0_6, %c0_7], %3 {strides = array<i32>} : memref<18x18x3xf32, #tpu.memory_space<vmem>>, vector<1x18x3xf32>,
    %c0_8 = arith.constant 0 : index
    %c0_9 = arith.constant 0 : index
    %c0_10 = arith.constant 0 : index
    %7 = vector.load %arg6[%c0_8, %c0_9, %c0_10] : memref<18x18x3xf32, #tpu.memory_space<vmem>>, vector<18x1x3xf32>
    tpu.vector_store %arg6[%c0_8, %c0_9, %c0_10], %4 {strides = array<i32>} : memref<18x18x3xf32, #tpu.memory_space<vmem>>, vector<18x1x3xf32>,
    %c0_11 = arith.constant 0 : index
    %c17_12 = arith.constant 17 : index
    %c0_13 = arith.constant 0 : index
    %8 = vector.load %arg6[%c0_11, %c17_12, %c0_13] : memref<18x18x3xf32, #tpu.memory_space<vmem>>, vector<18x1x3xf32>
    tpu.vector_store %arg6[%c0_11, %c17_12, %c0_13], %4 {strides = array<i32>} : memref<18x18x3xf32, #tpu.memory_space<vmem>>, vector<18x1x3xf32>,
    %9 = vector.shape_cast %2 : vector<256x3xf32> to vector<16x16x3xf32>
    %c1 = arith.constant 1 : index
    %c1_14 = arith.constant 1 : index
    %c0_15 = arith.constant 0 : index
    %10 = vector.load %arg6[%c1, %c1_14, %c0_15] : memref<18x18x3xf32, #tpu.memory_space<vmem>>, vector<16x16x3xf32>
    tpu.vector_store %arg6[%c1, %c1_14, %c0_15], %9 {strides = array<i32>} : memref<18x18x3xf32, #tpu.memory_space<vmem>>, vector<16x16x3xf32>,
    %c0_16 = arith.constant 0 : index
    %c0_17 = arith.constant 0 : index
    %c0_18 = arith.constant 0 : index
    %11 = vector.load %arg6[%c0_16, %c0_17, %c0_18] : memref<18x18x3xf32, #tpu.memory_space<vmem>>, vector<16x16x3xf32>
    %12 = vector.shape_cast %11 : vector<16x16x3xf32> to vector<256x3xf32>
    %c0_19 = arith.constant 0 : index
    %c1_20 = arith.constant 1 : index
    %c0_21 = arith.constant 0 : index
    %13 = vector.load %arg6[%c0_19, %c1_20, %c0_21] : memref<18x18x3xf32, #tpu.memory_space<vmem>>, vector<16x16x3xf32>
    %14 = vector.shape_cast %13 : vector<16x16x3xf32> to vector<256x3xf32>
    %c0_22 = arith.constant 0 : index
    %c2 = arith.constant 2 : index
    %c0_23 = arith.constant 0 : index
    %15 = vector.load %arg6[%c0_22, %c2, %c0_23] : memref<18x18x3xf32, #tpu.memory_space<vmem>>, vector<16x16x3xf32>
    %16 = vector.shape_cast %15 : vector<16x16x3xf32> to vector<256x3xf32>
    %c1_24 = arith.constant 1 : index
    %c0_25 = arith.constant 0 : index
    %c0_26 = arith.constant 0 : index
    %17 = vector.load %arg6[%c1_24, %c0_25, %c0_26] : memref<18x18x3xf32, #tpu.memory_space<vmem>>, vector<16x16x3xf32>
    %18 = vector.shape_cast %17 : vector<16x16x3xf32> to vector<256x3xf32>
    %c1_27 = arith.constant 1 : index
    %c1_28 = arith.constant 1 : index
    %c0_29 = arith.constant 0 : index
    %19 = vector.load %arg6[%c1_27, %c1_28, %c0_29] : memref<18x18x3xf32, #tpu.memory_space<vmem>>, vector<16x16x3xf32>
    %20 = vector.shape_cast %19 : vector<16x16x3xf32> to vector<256x3xf32>
    %c1_30 = arith.constant 1 : index
    %c2_31 = arith.constant 2 : index
    %c0_32 = arith.constant 0 : index
    %21 = vector.load %arg6[%c1_30, %c2_31, %c0_32] : memref<18x18x3xf32, #tpu.memory_space<vmem>>, vector<16x16x3xf32>
    %22 = vector.shape_cast %21 : vector<16x16x3xf32> to vector<256x3xf32>
    %c2_33 = arith.constant 2 : index
    %c0_34 = arith.constant 0 : index
    %c0_35 = arith.constant 0 : index
    %23 = vector.load %arg6[%c2_33, %c0_34, %c0_35] : memref<18x18x3xf32, #tpu.memory_space<vmem>>, vector<16x16x3xf32>
    %24 = vector.shape_cast %23 : vector<16x16x3xf32> to vector<256x3xf32>
    %c2_36 = arith.constant 2 : index
    %c1_37 = arith.constant 1 : index
    %c0_38 = arith.constant 0 : index
    %25 = vector.load %arg6[%c2_36, %c1_37, %c0_38] : memref<18x18x3xf32, #tpu.memory_space<vmem>>, vector<16x16x3xf32>
    %26 = vector.shape_cast %25 : vector<16x16x3xf32> to vector<256x3xf32>
    %c2_39 = arith.constant 2 : index
    %c2_40 = arith.constant 2 : index
    %c0_41 = arith.constant 0 : index
    %27 = vector.load %arg6[%c2_39, %c2_40, %c0_41] : memref<18x18x3xf32, #tpu.memory_space<vmem>>, vector<16x16x3xf32>
    %28 = vector.shape_cast %27 : vector<16x16x3xf32> to vector<256x3xf32>
    %29 = tpu.concatenate %12, %14, %16, %18, %20, %22, %24, %26, %28 in 1 : vector<256x3xf32>, vector<256x3xf32>, vector<256x3xf32>, vector<256x3xf32>, vector<256x3xf32>, vector<256x3xf32>, vector<256x3xf32>, vector<256x3xf32>, vector<256x3xf32> -> vector<256x27xf32>
    %c0_42 = arith.constant 0 : index
    %c0_43 = arith.constant 0 : index
    %30 = vector.load %arg2[%c0_42, %c0_43] : memref<27x64xf32, #tpu.memory_space<vmem>>, vector<27x64xf32>
    %cst_44 = arith.constant dense<0.000000e+00> : vector<256x64xf32>
    %31 = tpu.matmul %29, %30, %cst_44 {dimension_numbers = #tpu.dot_dimension_numbers<[1], [0], [0], [1], [0, 0, 1, 1], [], []>} : vector<256x27xf32>, vector<27x64xf32>, vector<256x64xf32> -> vector<256x64xf32>
    %32 = vector.extract_strided_slice %31 {offsets = [0, 0], sizes = [256, 32], strides = [1, 1]} : vector<256x64xf32> to vector<256x32xf32>
    %cst_45 = arith.constant dense<0.000000e+00> : vector<32xf32>
    %33 = vector.multi_reduction <add>, %32, %cst_45 [0] : vector<256x32xf32> to vector<32xf32>
    %34 = vector.shape_cast %33 : vector<32xf32> to vector<1x32xf32>
    %cst_46 = arith.constant 2.560000e+02 : f32
    %35 = vector.broadcast %cst_46 : f32 to vector<1x32xf32>
    %36 = arith.divf %34, %35 : vector<1x32xf32>
    %37 = vector.broadcast %36 : vector<1x32xf32> to vector<256x32xf32>
    %38 = arith.subf %32, %37 : vector<256x32xf32>
    %39 = arith.mulf %38, %38 : vector<256x32xf32>
    %cst_47 = arith.constant dense<0.000000e+00> : vector<32xf32>
    %40 = vector.multi_reduction <add>, %39, %cst_47 [0] : vector<256x32xf32> to vector<32xf32>
    %41 = vector.shape_cast %40 : vector<32xf32> to vector<1x32xf32>
    %cst_48 = arith.constant 2.560000e+02 : f32
    %42 = vector.broadcast %cst_48 : f32 to vector<1x32xf32>
    %43 = arith.divf %41, %42 : vector<1x32xf32>
    %cst_49 = arith.constant 9.99999974E-6 : f32
    %44 = vector.broadcast %cst_49 : f32 to vector<1x32xf32>
    %45 = arith.addf %43, %44 : vector<1x32xf32>
    %46 = math.rsqrt %45 : vector<1x32xf32>
    %47 = vector.broadcast %46 : vector<1x32xf32> to vector<256x32xf32>
    %48 = arith.mulf %38, %47 : vector<256x32xf32>
    %cst_50 = arith.constant 0.000000e+00 : f32
    %49 = vector.broadcast %cst_50 : f32 to vector<256x32xf32>
    %50 = arith.maximumf %48, %49 : vector<256x32xf32>
    %51 = vector.extract_strided_slice %31 {offsets = [0, 32], sizes = [256, 32], strides = [1, 1]} : vector<256x64xf32> to vector<256x32xf32>
    %c0_51 = arith.constant 0 : index
    %c0_52 = arith.constant 0 : index
    %52 = vector.load %arg4[%c0_51, %c0_52] : memref<1x32xf32, #tpu.memory_space<vmem>>, vector<1x32xf32>
    %53 = vector.broadcast %52 : vector<1x32xf32> to vector<256x32xf32>
    %54 = arith.addf %51, %53 : vector<256x32xf32>
    %cst_53 = arith.constant 0.000000e+00 : bf16
    %55 = vector.broadcast %cst_53 : bf16 to vector<1x18x32xbf16>
    %cst_54 = arith.constant 0.000000e+00 : bf16
    %56 = vector.broadcast %cst_54 : bf16 to vector<18x1x32xbf16>
    %c0_55 = arith.constant 0 : index
    %c0_56 = arith.constant 0 : index
    %c0_57 = arith.constant 0 : index
    %57 = vector.load %arg7[%c0_55, %c0_56, %c0_57] : memref<18x18x32xbf16, #tpu.memory_space<vmem>>, vector<1x18x32xbf16>
    tpu.vector_store %arg7[%c0_55, %c0_56, %c0_57], %55 {strides = array<i32>} : memref<18x18x32xbf16, #tpu.memory_space<vmem>>, vector<1x18x32xbf16>,
    %c17_58 = arith.constant 17 : index
    %c0_59 = arith.constant 0 : index
    %c0_60 = arith.constant 0 : index
    %58 = vector.load %arg7[%c17_58, %c0_59, %c0_60] : memref<18x18x32xbf16, #tpu.memory_space<vmem>>, vector<1x18x32xbf16>
    tpu.vector_store %arg7[%c17_58, %c0_59, %c0_60], %55 {strides = array<i32>} : memref<18x18x32xbf16, #tpu.memory_space<vmem>>, vector<1x18x32xbf16>,
    %c0_61 = arith.constant 0 : index
    %c0_62 = arith.constant 0 : index
    %c0_63 = arith.constant 0 : index
    %59 = vector.load %arg7[%c0_61, %c0_62, %c0_63] : memref<18x18x32xbf16, #tpu.memory_space<vmem>>, vector<18x1x32xbf16>
    tpu.vector_store %arg7[%c0_61, %c0_62, %c0_63], %56 {strides = array<i32>} : memref<18x18x32xbf16, #tpu.memory_space<vmem>>, vector<18x1x32xbf16>,
    %c0_64 = arith.constant 0 : index
    %c17_65 = arith.constant 17 : index
    %c0_66 = arith.constant 0 : index
    %60 = vector.load %arg7[%c0_64, %c17_65, %c0_66] : memref<18x18x32xbf16, #tpu.memory_space<vmem>>, vector<18x1x32xbf16>
    tpu.vector_store %arg7[%c0_64, %c17_65, %c0_66], %56 {strides = array<i32>} : memref<18x18x32xbf16, #tpu.memory_space<vmem>>, vector<18x1x32xbf16>,
    %61 = vector.shape_cast %50 : vector<256x32xf32> to vector<16x16x32xf32>
    %62 = arith.truncf %61 : vector<16x16x32xf32> to vector<16x16x32xbf16>
    %c1_67 = arith.constant 1 : index
    %c1_68 = arith.constant 1 : index
    %c0_69 = arith.constant 0 : index
    %63 = vector.load %arg7[%c1_67, %c1_68, %c0_69] : memref<18x18x32xbf16, #tpu.memory_space<vmem>>, vector<16x16x32xbf16>
    tpu.vector_store %arg7[%c1_67, %c1_68, %c0_69], %62 {strides = array<i32>} : memref<18x18x32xbf16, #tpu.memory_space<vmem>>, vector<16x16x32xbf16>,
    %cst_70 = arith.constant 0.000000e+00 : f32
    %64 = vector.broadcast %cst_70 : f32 to vector<256x32xf32>
    %c0_71 = arith.constant 0 : index
    %c0_72 = arith.constant 0 : index
    %c0_73 = arith.constant 0 : index
    %65 = vector.load %arg7[%c0_71, %c0_72, %c0_73] : memref<18x18x32xbf16, #tpu.memory_space<vmem>>, vector<16x16x32xbf16>
    %66 = vector.shape_cast %65 : vector<16x16x32xbf16> to vector<256x32xbf16>
    %c0_74 = arith.constant 0 : index
    %c1_75 = arith.constant 1 : index
    %c0_76 = arith.constant 0 : index
    %67 = vector.load %arg7[%c0_74, %c1_75, %c0_76] : memref<18x18x32xbf16, #tpu.memory_space<vmem>>, vector<16x16x32xbf16>
    %68 = vector.shape_cast %67 : vector<16x16x32xbf16> to vector<256x32xbf16>
    %c0_77 = arith.constant 0 : index
    %c2_78 = arith.constant 2 : index
    %c0_79 = arith.constant 0 : index
    %69 = vector.load %arg7[%c0_77, %c2_78, %c0_79] : memref<18x18x32xbf16, #tpu.memory_space<vmem>>, vector<16x16x32xbf16>
    %70 = vector.shape_cast %69 : vector<16x16x32xbf16> to vector<256x32xbf16>
    %71 = tpu.concatenate %66, %68, %70 in 1 : vector<256x32xbf16>, vector<256x32xbf16>, vector<256x32xbf16> -> vector<256x96xbf16>
    %c0_80 = arith.constant 0 : index
    %c0_81 = arith.constant 0 : index
    %72 = vector.load %arg3[%c0_80, %c0_81] : memref<288x32xbf16, #tpu.memory_space<vmem>>, vector<96x32xbf16>
    %cst_82 = arith.constant dense<0.000000e+00> : vector<256x32xf32>
    %73 = tpu.matmul %71, %72, %cst_82 {dimension_numbers = #tpu.dot_dimension_numbers<[1], [0], [0], [1], [0, 0, 1, 1], [], []>} : vector<256x96xbf16>, vector<96x32xbf16>, vector<256x32xf32> -> vector<256x32xf32>
    %74 = arith.addf %64, %73 : vector<256x32xf32>
    %c1_83 = arith.constant 1 : index
    %c0_84 = arith.constant 0 : index
    %c0_85 = arith.constant 0 : index
    %75 = vector.load %arg7[%c1_83, %c0_84, %c0_85] : memref<18x18x32xbf16, #tpu.memory_space<vmem>>, vector<16x16x32xbf16>
    %76 = vector.shape_cast %75 : vector<16x16x32xbf16> to vector<256x32xbf16>
    %c1_86 = arith.constant 1 : index
    %c1_87 = arith.constant 1 : index
    %c0_88 = arith.constant 0 : index
    %77 = vector.load %arg7[%c1_86, %c1_87, %c0_88] : memref<18x18x32xbf16, #tpu.memory_space<vmem>>, vector<16x16x32xbf16>
    %78 = vector.shape_cast %77 : vector<16x16x32xbf16> to vector<256x32xbf16>
    %c1_89 = arith.constant 1 : index
    %c2_90 = arith.constant 2 : index
    %c0_91 = arith.constant 0 : index
    %79 = vector.load %arg7[%c1_89, %c2_90, %c0_91] : memref<18x18x32xbf16, #tpu.memory_space<vmem>>, vector<16x16x32xbf16>
    %80 = vector.shape_cast %79 : vector<16x16x32xbf16> to vector<256x32xbf16>
    %81 = tpu.concatenate %76, %78, %80 in 1 : vector<256x32xbf16>, vector<256x32xbf16>, vector<256x32xbf16> -> vector<256x96xbf16>
    %c96 = arith.constant 96 : index
    %c0_92 = arith.constant 0 : index
    %82 = vector.load %arg3[%c96, %c0_92] : memref<288x32xbf16, #tpu.memory_space<vmem>>, vector<96x32xbf16>
    %cst_93 = arith.constant dense<0.000000e+00> : vector<256x32xf32>
    %83 = tpu.matmul %81, %82, %cst_93 {dimension_numbers = #tpu.dot_dimension_numbers<[1], [0], [0], [1], [0, 0, 1, 1], [], []>} : vector<256x96xbf16>, vector<96x32xbf16>, vector<256x32xf32> -> vector<256x32xf32>
    %84 = arith.addf %74, %83 : vector<256x32xf32>
    %c2_94 = arith.constant 2 : index
    %c0_95 = arith.constant 0 : index
    %c0_96 = arith.constant 0 : index
    %85 = vector.load %arg7[%c2_94, %c0_95, %c0_96] : memref<18x18x32xbf16, #tpu.memory_space<vmem>>, vector<16x16x32xbf16>
    %86 = vector.shape_cast %85 : vector<16x16x32xbf16> to vector<256x32xbf16>
    %c2_97 = arith.constant 2 : index
    %c1_98 = arith.constant 1 : index
    %c0_99 = arith.constant 0 : index
    %87 = vector.load %arg7[%c2_97, %c1_98, %c0_99] : memref<18x18x32xbf16, #tpu.memory_space<vmem>>, vector<16x16x32xbf16>
    %88 = vector.shape_cast %87 : vector<16x16x32xbf16> to vector<256x32xbf16>
    %c2_100 = arith.constant 2 : index
    %c2_101 = arith.constant 2 : index
    %c0_102 = arith.constant 0 : index
    %89 = vector.load %arg7[%c2_100, %c2_101, %c0_102] : memref<18x18x32xbf16, #tpu.memory_space<vmem>>, vector<16x16x32xbf16>
    %90 = vector.shape_cast %89 : vector<16x16x32xbf16> to vector<256x32xbf16>
    %91 = tpu.concatenate %86, %88, %90 in 1 : vector<256x32xbf16>, vector<256x32xbf16>, vector<256x32xbf16> -> vector<256x96xbf16>
    %c192 = arith.constant 192 : index
    %c0_103 = arith.constant 0 : index
    %92 = vector.load %arg3[%c192, %c0_103] : memref<288x32xbf16, #tpu.memory_space<vmem>>, vector<96x32xbf16>
    %cst_104 = arith.constant dense<0.000000e+00> : vector<256x32xf32>
    %93 = tpu.matmul %91, %92, %cst_104 {dimension_numbers = #tpu.dot_dimension_numbers<[1], [0], [0], [1], [0, 0, 1, 1], [], []>} : vector<256x96xbf16>, vector<96x32xbf16>, vector<256x32xf32> -> vector<256x32xf32>
    %94 = arith.addf %84, %93 : vector<256x32xf32>
    %cst_105 = arith.constant dense<0.000000e+00> : vector<32xf32>
    %95 = vector.multi_reduction <add>, %94, %cst_105 [0] : vector<256x32xf32> to vector<32xf32>
    %96 = vector.shape_cast %95 : vector<32xf32> to vector<1x32xf32>
    %cst_106 = arith.constant 2.560000e+02 : f32
    %97 = vector.broadcast %cst_106 : f32 to vector<1x32xf32>
    %98 = arith.divf %96, %97 : vector<1x32xf32>
    %99 = vector.broadcast %98 : vector<1x32xf32> to vector<256x32xf32>
    %100 = arith.subf %94, %99 : vector<256x32xf32>
    %101 = arith.mulf %100, %100 : vector<256x32xf32>
    %cst_107 = arith.constant dense<0.000000e+00> : vector<32xf32>
    %102 = vector.multi_reduction <add>, %101, %cst_107 [0] : vector<256x32xf32> to vector<32xf32>
    %103 = vector.shape_cast %102 : vector<32xf32> to vector<1x32xf32>
    %cst_108 = arith.constant 2.560000e+02 : f32
    %104 = vector.broadcast %cst_108 : f32 to vector<1x32xf32>
    %105 = arith.divf %103, %104 : vector<1x32xf32>
    %cst_109 = arith.constant 9.99999974E-6 : f32
    %106 = vector.broadcast %cst_109 : f32 to vector<1x32xf32>
    %107 = arith.addf %105, %106 : vector<1x32xf32>
    %108 = math.rsqrt %107 : vector<1x32xf32>
    %109 = vector.broadcast %108 : vector<1x32xf32> to vector<256x32xf32>
    %110 = arith.mulf %100, %109 : vector<256x32xf32>
    %cst_110 = arith.constant 0.000000e+00 : f32
    %111 = vector.broadcast %cst_110 : f32 to vector<256x32xf32>
    %112 = arith.maximumf %110, %111 : vector<256x32xf32>
    %113 = arith.addf %112, %54 : vector<256x32xf32>
    %114 = tpu.transpose %113, [1, 0] : vector<256x32xf32> -> vector<32x256xf32>
    %c0_111 = arith.constant 0 : index
    %c0_112 = arith.constant 0 : index
    %c0_113 = arith.constant 0 : index
    %115 = vector.load %arg5[%c0_111, %c0_112, %c0_113] : memref<1x32x256xf32, #tpu.memory_space<vmem>>, vector<1x32x256xf32>
    %116 = vector.shape_cast %115 : vector<1x32x256xf32> to vector<32x256xf32>
    %117 = vector.shape_cast %114 : vector<32x256xf32> to vector<1x32x256xf32>
    tpu.vector_store %arg5[%c0_111, %c0_112, %c0_113], %117 {strides = array<i32>} : memref<1x32x256xf32, #tpu.memory_space<vmem>>, vector<1x32x256xf32>,
    return
  }
  func.func @transform_0(%arg0: i32) -> (i32, i32, i32) {
    %c0_i32 = arith.constant 0 : i32
    %c0_i32_0 = arith.constant 0 : i32
    %c0_i32_1 = arith.constant 0 : i32
    return %arg0, %c0_i32, %c0_i32_0 : i32, i32, i32
  }
  func.func @transform_1(%arg0: i32) -> (i32, i32) {
    %c0_i32 = arith.constant 0 : i32
    %c0_i32_0 = arith.constant 0 : i32
    %c0_i32_1 = arith.constant 0 : i32
    return %c0_i32, %c0_i32_0 : i32, i32
  }
  func.func @transform_2(%arg0: i32) -> (i32, i32) {
    %c0_i32 = arith.constant 0 : i32
    %c0_i32_0 = arith.constant 0 : i32
    %c0_i32_1 = arith.constant 0 : i32
    return %c0_i32, %c0_i32_0 : i32, i32
  }
  func.func @transform_3(%arg0: i32) -> (i32, i32) {
    %c0_i32 = arith.constant 0 : i32
    %c0_i32_0 = arith.constant 0 : i32
    %c0_i32_1 = arith.constant 0 : i32
    return %c0_i32, %c0_i32_0 : i32, i32
  }
  func.func @transform_4(%arg0: i32) -> (i32, i32, i32) {
    %c0_i32 = arith.constant 0 : i32
    %c0_i32_0 = arith.constant 0 : i32
    %c0_i32_1 = arith.constant 0 : i32
    return %arg0, %c0_i32, %c0_i32_0 : i32, i32, i32
  }
}

</mosaic_0001>

<llo_original>
// kernel: tpu_custom_call.1
$region0: #{tpu_custom_call.1}
  #allocation0 [shape = 'u32[]', space=smem, size = 0x4, offset = 0x4, fixed_abs, tag = 'smem constant byte address 0x4 - core index']
  #allocation1 [shape = 'u32[72,128]{1,0:T(1,128)}', space=vmem, size = 0x9000, scoped, tag = 'internal scratch']
  #allocation2 [shape = 'f32[18,18,3]{2,1,0:T(8,128)}', space=vmem, size = 0x36000, scoped, tag = 'scratch operand']
  #allocation3 [shape = 'bf16[18,18,32]{2,1,0:T(8,128)(2,1)}', space=vmem, size = 0x1b000, scoped, tag = 'scratch operand']
  %s0 = inlined_call_operand.vmem [shape: f32[2,3,256], index: 0, kind: input, shape index: {}]
  %s1 = inlined_call_operand.vmem [shape: f32[27,64], index: 1, kind: input, shape index: {}]
  %s2 = inlined_call_operand.vmem [shape: bf16[288,32], index: 2, kind: input, shape index: {}]
  %s3 = inlined_call_operand.vmem [shape: f32[1,32], index: 3, kind: input, shape index: {}]
  %s4 = inlined_call_operand.hbm [shape: f32[2,32,256], index: 4, kind: output, shape index: {}]
  %s5 = sld [smem:[#allocation0]]
  $region49: #{tpu_custom_call.1} parent=0
    _
  %s7 = ssub.s32 1, %s5
  %s8 = scalar_select 0, %s7, %s5
  $region1: #{tpu_custom_call.1} parent=0
    #allocation4 [shape = 'u8[65536]{0}', space=vmem, size = 0x10000, scoped, tag = 'output window, operand 0']
    #allocation5 [shape = 's32[2]{0}', space=sflag, size = 0x8, scoped, tag = 'scoped memory for tpu_custom_call.1']
    %9 = vsyncpa [#allocation5], 0
    %s10 = scalar_lea.sflag [#allocation5], 1
    %11 = vsyncpa %s10, 0
    loop: start=0, step=1, limit=4
    $region2: #{tpu_custom_call.1} parent=1 // loop_pre_header
      _
    $region3: #{tpu_custom_call.1} parent=1 // loop_header
      %s13 = sphi 0, %s17
      %p14 = scmp.ge.s32.totalorder %s13, 4
      %s23 = sphi 0, %s25
      %s26 = sphi 0, %s23
      %s27 = sphi 0, %s26
      %s43 = sphi 0, %s27
      %s47 = sphi 0, %s47
      %s49 = sphi 0, %s47
      %s50 = sphi 0, %s49
      %s64 = sphi 0, %s50
      %s68 = sphi 0, %s68
      %s70 = sphi 0, %s68
      %s71 = sphi 0, %s70
      %s85 = sphi 0, %s71
      %s89 = sphi 0, %s89
      %s91 = sphi 0, %s89
      %s92 = sphi 0, %s91
      %s106 = sphi 0, %s92
      %s112 = sphi 0, %s114
      %s115 = sphi 0, %s112
      %s116 = sphi 0, %s115
      %s132 = sphi 0, %s116
    $region4: #{tpu_custom_call.1} parent=1 // loop_header_branch
      %16 = sbr.rel (%p14) target = $region8
    $region5: #{tpu_custom_call.1} parent=1 // loop_body
      %s18 = ssub.s32 %s13, 1
      %s19 = ssub.s32 %s13, 2
      %s20 = sadd.s32 %s13, 1
      %s21 = ssub.s32 %s13, %s20
      %p22 = scmp.eq.s32.totalorder %s21, 0
      %s24 = sadd.s32 %s23, 1
      %s25 = scalar_select %p22, %s23, %s24
      %p28 = pneg %p22
      %p29 = scmp.eq.s32.totalorder %s13, 1
      %p30 = por %p28, %p29
      %p31 = scmp.ne.s32.totalorder %s23, %s26
      %p32 = scmp.eq.s32.totalorder %s13, 0
      %p33 = por %p31, %p32
      %p34 = scmp.ne.s32.totalorder %s23, %s26
      %p35 = scmp.eq.s32.totalorder %s18, 1
      %p36 = por %p34, %p35
      %p37 = scmp.ne.s32.totalorder %s26, %s27
      %p38 = scmp.eq.s32.totalorder %s18, 0
      %p39 = por %p37, %p38
      %p40 = scmp.ne.s32.totalorder %s26, %s27
      %p41 = scmp.eq.s32.totalorder %s19, 1
      %p42 = por %p40, %p41
      %p44 = scmp.ne.s32.totalorder %s27, %s43
      %p45 = scmp.eq.s32.totalorder %s19, 0
      %p46 = por %p44, %p45
      %s48 = sadd.s32 %s47, 1
      %p51 = scmp.eq.s32.totalorder %s13, 1
      %p52 = scmp.ne.s32.totalorder %s47, %s49
      %p53 = scmp.eq.s32.totalorder %s13, 0
      %p54 = por %p52, %p53
      %p55 = scmp.ne.s32.totalorder %s47, %s49
      %p56 = scmp.eq.s32.totalorder %s18, 1
      %p57 = por %p55, %p56
      %p58 = scmp.ne.s32.totalorder %s49, %s50
      %p59 = scmp.eq.s32.totalorder %s18, 0
      %p60 = por %p58, %p59
      %p61 = scmp.ne.s32.totalorder %s49, %s50
      %p62 = scmp.eq.s32.totalorder %s19, 1
      %p63 = por %p61, %p62
      %p65 = scmp.ne.s32.totalorder %s50, %s64
      %p66 = scmp.eq.s32.totalorder %s19, 0
      %p67 = por %p65, %p66
      %s69 = sadd.s32 %s68, 1
      %p72 = scmp.eq.s32.totalorder %s13, 1
      %p73 = scmp.ne.s32.totalorder %s68, %s70
      %p74 = scmp.eq.s32.totalorder %s13, 0
      %p75 = por %p73, %p74
      %p76 = scmp.ne.s32.totalorder %s68, %s70
      %p77 = scmp.eq.s32.totalorder %s18, 1
      %p78 = por %p76, %p77
      %p79 = scmp.ne.s32.totalorder %s70, %s71
      %p80 = scmp.eq.s32.totalorder %s18, 0
      %p81 = por %p79, %p80
      %p82 = scmp.ne.s32.totalorder %s70, %s71
      %p83 = scmp.eq.s32.totalorder %s19, 1
      %p84 = por %p82, %p83
      %p86 = scmp.ne.s32.totalorder %s71, %s85
      %p87 = scmp.eq.s32.totalorder %s19, 0
      %p88 = por %p86, %p87
      %s90 = sadd.s32 %s89, 1
      %p93 = scmp.eq.s32.totalorder %s13, 1
      %p94 = scmp.ne.s32.totalorder %s89, %s91
      %p95 = scmp.eq.s32.totalorder %s13, 0
      %p96 = por %p94, %p95
      %p97 = scmp.ne.s32.totalorder %s89, %s91
      %p98 = scmp.eq.s32.totalorder %s18, 1
      %p99 = por %p97, %p98
      %p100 = scmp.ne.s32.totalorder %s91, %s92
      %p101 = scmp.eq.s32.totalorder %s18, 0
      %p102 = por %p100, %p101
      %p103 = scmp.ne.s32.totalorder %s91, %s92
      %p104 = scmp.eq.s32.totalorder %s19, 1
      %p105 = por %p103, %p104
      %p107 = scmp.ne.s32.totalorder %s92, %s106
      %p108 = scmp.eq.s32.totalorder %s19, 0
      %p109 = por %p107, %p108
      %s110 = ssub.s32 %s13, %s20
      %p111 = scmp.eq.s32.totalorder %s110, 0
      %s113 = sadd.s32 %s112, 1
      %s114 = scalar_select %p111, %s112, %s113
      %p117 = pneg %p111
      %p118 = scmp.eq.s32.totalorder %s13, 1
      %p119 = por %p117, %p118
      %p120 = scmp.ne.s32.totalorder %s112, %s115
      %p121 = scmp.eq.s32.totalorder %s13, 0
      %p122 = por %p120, %p121
      %p123 = scmp.ne.s32.totalorder %s112, %s115
      %p124 = scmp.eq.s32.totalorder %s18, 1
      %p125 = por %p123, %p124
      %p126 = scmp.ne.s32.totalorder %s115, %s116
      %p127 = scmp.eq.s32.totalorder %s18, 0
      %p128 = por %p126, %p127
      %p129 = scmp.ne.s32.totalorder %s115, %s116
      %p130 = scmp.eq.s32.totalorder %s19, 1
      %p131 = por %p129, %p130
      %p133 = scmp.ne.s32.totalorder %s116, %s132
      %p134 = scmp.eq.s32.totalorder %s19, 0
      %p135 = por %p133, %p134
      %p136 = scmp.le.s32.totalorder 1, %s13
      %p137 = scmp.lt.s32.totalorder %s13, 3
      %p138 = pnand %p136, %p137
      %p139 = pneg %p138
      // Predicated region
      $region9: #{tpu_custom_call.1} parent=5 // pred_check
        _
      $region10: #{tpu_custom_call.1} parent=5 // pred_check_branch
        %141 = sbr.rel (%p138) target = $region12
      $region11: #{tpu_custom_call.1} parent=5 // pred_region
        %s142 = ssub.s32 %s13, 1
        // Predicated region
        $region13: #{tpu_custom_call.1} parent=11 // pred_check
          %p143 = pneg %p60
        $region14: #{tpu_custom_call.1} parent=11 // pred_check_branch
          %145 = sbr.rel (%p143) target = $region16
        $region15: #{tpu_custom_call.1} parent=11 // pred_region
          _
        $region16: #{tpu_custom_call.1} parent=11 // pred_fallthru
          _
        // Predicated region
        $region17: #{tpu_custom_call.1} parent=11 // pred_check
          %p146 = pneg %p81
        $region18: #{tpu_custom_call.1} parent=11 // pred_check_branch
          %148 = sbr.rel (%p146) target = $region20
        $region19: #{tpu_custom_call.1} parent=11 // pred_region
          _
        $region20: #{tpu_custom_call.1} parent=11 // pred_fallthru
          _
        // Predicated region
        $region21: #{tpu_custom_call.1} parent=11 // pred_check
          %p149 = pneg %p102
        $region22: #{tpu_custom_call.1} parent=11 // pred_check_branch
          %151 = sbr.rel (%p149) target = $region24
        $region23: #{tpu_custom_call.1} parent=11 // pred_region
          _
        $region24: #{tpu_custom_call.1} parent=11 // pred_fallthru
          _
      $region12: #{tpu_custom_call.1} parent=5 // pred_fallthru
        _
      %p152 = scmp.lt.s32.totalorder %s13, 2
      // Predicated region
      $region25: #{tpu_custom_call.1} parent=5 // pred_check
        %p153 = pneg %p152
      $region26: #{tpu_custom_call.1} parent=5 // pred_check_branch
        %155 = sbr.rel (%p153) target = $region28
      $region27: #{tpu_custom_call.1} parent=5 // pred_region
        // Predicated region
        $region29: #{tpu_custom_call.1} parent=27 // pred_check
          %p156 = pneg %p33
        $region30: #{tpu_custom_call.1} parent=27 // pred_check_branch
          %158 = sbr.rel (%p156) target = $region32
        $region31: #{tpu_custom_call.1} parent=27 // pred_region
          %p159 = scmp.lt.s32.totalorder %s13, 1
          %s160 = scalar_select %p159, %s13, 1
          %s161 = smul.addr %s160, 2
          %s162 = smul.addr %s161, 4
          %s163 = scalar_lea.vmem %s0, %s162
        $region32: #{tpu_custom_call.1} parent=27 // pred_fallthru
          _
      $region28: #{tpu_custom_call.1} parent=5 // pred_fallthru
        _
      %p164 = scmp.le.s32.totalorder 1, %s13
      %p165 = scmp.lt.s32.totalorder %s13, 3
      %p166 = pnand %p164, %p165
      %p167 = pneg %p166
      // Predicated region
      $region33: #{tpu_custom_call.1} parent=5 // pred_check
        _
      $region34: #{tpu_custom_call.1} parent=5 // pred_check_branch
        %169 = sbr.rel (%p166) target = $region36
      $region35: #{tpu_custom_call.1} parent=5 // pred_region
        %s170 = ssub.s32 %s13, 1
        %p171 = scmp.lt.s32.totalorder %s18, 1
        %s172 = scalar_select %p171, %s18, 1
        %s173 = smul.addr %s172, 2
        %s174 = smul.addr %s173, 4
        %s175 = scalar_lea.vmem %s0, %s174
        %p176 = pneg %p39
        %p177 = pneg %p36
        %p178 = pneg %p60
        %p179 = pneg %p57
        %p180 = pneg %p81
        %p181 = pneg %p78
        %p182 = pneg %p102
        %p183 = pneg %p99
        %p184 = pneg %p128
        %p185 = pneg %p125
        %s186 = sand.u32 %s115, 1
        %s187 = scalar_lea.sflag [#allocation5], %s186
        %s188 = sand.u32 %s115, 1
        %s189 = smul.addr %s188, 64
        %s190 = scalar_lea.vmem [#allocation4], %s189
        %p191 = scmp.lt.s32.totalorder %s18, 1
        %s192 = scalar_select %p191, %s18, 1
        %s193 = smul.addr %s192, 2
        %s194 = smul.addr %s193, 4
        %s195 = scalar_lea.vmem %s0, %s194
        %v197 = vld [vmem:[%s195] sm:$0x77]
        %199 = vst [vmem:[#allocation1] ss:$2 sm:$0xff] %v197
        %v200 = vld.sshfl [vmem:[#allocation1] sm:$0xff pattern:$0x75316420]
        %v201 = vld.sshfl [vmem:[#allocation1 + $0x8] sm:$0xff pattern:$0x75316420]
        %204 = vxpose.xlu0.b32.start [1/16] %v200, 128
        %205 = vxpose.xlu0.b32.cont [2/16] 0.0, 128
        %206 = vxpose.xlu0.b32.cont [3/16] 0.0, 128
        %207 = vxpose.xlu0.b32.cont [4/16] 0.0, 128
        %208 = vxpose.xlu0.b32.cont [5/16] 0.0, 128
        %209 = vxpose.xlu0.b32.cont [6/16] 0.0, 128
        %210 = vxpose.xlu0.b32.cont [7/16] 0.0, 128
        %211 = vxpose.xlu0.b32.cont [8/16] 0.0, 128
        %212 = vxpose.xlu0.b32.cont [9/16] 0.0, 128
        %213 = vxpose.xlu0.b32.cont [10/16] 0.0, 128
        %214 = vxpose.xlu0.b32.cont [11/16] 0.0, 128
        %215 = vxpose.xlu0.b32.cont [12/16] 0.0, 128
        %216 = vxpose.xlu0.b32.cont [13/16] 0.0, 128
        %217 = vxpose.xlu0.b32.cont [14/16] 0.0, 128
        %218 = vxpose.xlu0.b32.cont [15/16] 0.0, 128
        %219 = vxpose.xlu0.b32.end [16/16] 0.0, 128
        %v220 = vpop.trf.xlu0
        %v221 = vpop.trf.xlu0
        %v222 = vpop.trf.xlu0
        %v223 = vpop.trf.xlu0
        %v224 = vpop.trf.xlu0
        %v225 = vpop.trf.xlu0
        %v226 = vpop.trf.xlu0
        %v227 = vpop.trf.xlu0
        %v228 = vpop.trf.xlu0
        %v229 = vpop.trf.xlu0
        %v230 = vpop.trf.xlu0
        %v231 = vpop.trf.xlu0
        %v232 = vpop.trf.xlu0
        %v233 = vpop.trf.xlu0
        %v234 = vpop.trf.xlu0
        %v235 = vpop.trf.xlu0
        %236 = vxpose.xlu0.b32.start [1/16] %v201, 128
        %237 = vxpose.xlu0.b32.cont [2/16] 0.0, 128
        %238 = vxpose.xlu0.b32.cont [3/16] 0.0, 128
        %239 = vxpose.xlu0.b32.cont [4/16] 0.0, 128
        %240 = vxpose.xlu0.b32.cont [5/16] 0.0, 128
        %241 = vxpose.xlu0.b32.cont [6/16] 0.0, 128
        %242 = vxpose.xlu0.b32.cont [7/16] 0.0, 128
        %243 = vxpose.xlu0.b32.cont [8/16] 0.0, 128
        %244 = vxpose.xlu0.b32.cont [9/16] 0.0, 128
        %245 = vxpose.xlu0.b32.cont [10/16] 0.0, 128
        %246 = vxpose.xlu0.b32.cont [11/16] 0.0, 128
        %247 = vxpose.xlu0.b32.cont [12/16] 0.0, 128
        %248 = vxpose.xlu0.b32.cont [13/16] 0.0, 128
        %249 = vxpose.xlu0.b32.cont [14/16] 0.0, 128
        %250 = vxpose.xlu0.b32.cont [15/16] 0.0, 128
        %251 = vxpose.xlu0.b32.end [16/16] 0.0, 128
        %v252 = vpop.trf.xlu0
        %v253 = vpop.trf.xlu0
        %v254 = vpop.trf.xlu0
        %v255 = vpop.trf.xlu0
        %v256 = vpop.trf.xlu0
        %v257 = vpop.trf.xlu0
        %v258 = vpop.trf.xlu0
        %v259 = vpop.trf.xlu0
        %v260 = vpop.trf.xlu0
        %v261 = vpop.trf.xlu0
        %v262 = vpop.trf.xlu0
        %v263 = vpop.trf.xlu0
        %v264 = vpop.trf.xlu0
        %v265 = vpop.trf.xlu0
        %v266 = vpop.trf.xlu0
        %v267 = vpop.trf.xlu0
        %vm268 = vcmask 23552
        %269 = vst.msk [vmem:[#allocation2] sm:$0xff] %vm268, 0.0
        %270 = vst.msk [vmem:[#allocation2 + $0x8] sm:$0xff] %vm268, 0.0
        %vm271 = vcmask 17408
        %272 = vst.msk [vmem:[#allocation2 + $0x10] sm:$0x3] %vm271, 0.0
        %s273 = scalar_lea.vmem [#allocation2], 408
        %274 = vst.msk [vmem:[%s273] sm:$0xff] %vm268, 0.0
        %275 = vst.msk [vmem:[%s273 + $0x8] sm:$0xff] %vm268, 0.0
        %276 = vst.msk [vmem:[%s273 + $0x10] sm:$0x3] %vm271, 0.0
        %vm277 = vcmask 16384
        %278 = vst.msk [vmem:[#allocation2] sm:$0x1] %vm277, 0.0
        %279 = vst.msk [vmem:[#allocation2 + $0x18] sm:$0x1] %vm277, 0.0
        %280 = vst.msk [vmem:[#allocation2 + $0x30] sm:$0x1] %vm277, 0.0
        %281 = vst.msk [vmem:[#allocation2 + $0x48] sm:$0x1] %vm277, 0.0
        %282 = vst.msk [vmem:[#allocation2 + $0x60] sm:$0x1] %vm277, 0.0
        %283 = vst.msk [vmem:[#allocation2 + $0x78] sm:$0x1] %vm277, 0.0
        %284 = vst.msk [vmem:[#allocation2 + $0x90] sm:$0x1] %vm277, 0.0
        %285 = vst.msk [vmem:[#allocation2 + $0xa8] sm:$0x1] %vm277, 0.0
        %286 = vst.msk [vmem:[#allocation2 + $0xc0] sm:$0x1] %vm277, 0.0
        %287 = vst.msk [vmem:[#allocation2 + $0xd8] sm:$0x1] %vm277, 0.0
        %288 = vst.msk [vmem:[#allocation2 + $0xf0] sm:$0x1] %vm277, 0.0
        %289 = vst.msk [vmem:[#allocation2 + $0x108] sm:$0x1] %vm277, 0.0
        %290 = vst.msk [vmem:[#allocation2 + $0x120] sm:$0x1] %vm277, 0.0
        %291 = vst.msk [vmem:[#allocation2 + $0x138] sm:$0x1] %vm277, 0.0
        %292 = vst.msk [vmem:[#allocation2 + $0x150] sm:$0x1] %vm277, 0.0
        %293 = vst.msk [vmem:[#allocation2 + $0x168] sm:$0x1] %vm277, 0.0
        %294 = vst.msk [vmem:[#allocation2 + $0x180] sm:$0x1] %vm277, 0.0
        %295 = vst.msk [vmem:[#allocation2 + $0x198] sm:$0x1] %vm277, 0.0
        %296 = vst.msk [vmem:[#allocation2 + $0x11] sm:$0x1] %vm277, 0.0
        %297 = vst.msk [vmem:[#allocation2 + $0x29] sm:$0x1] %vm277, 0.0
        %298 = vst.msk [vmem:[#allocation2 + $0x41] sm:$0x1] %vm277, 0.0
        %299 = vst.msk [vmem:[#allocation2 + $0x59] sm:$0x1] %vm277, 0.0
        %300 = vst.msk [vmem:[#allocation2 + $0x71] sm:$0x1] %vm277, 0.0
        %301 = vst.msk [vmem:[#allocation2 + $0x89] sm:$0x1] %vm277, 0.0
        %302 = vst.msk [vmem:[#allocation2 + $0xa1] sm:$0x1] %vm277, 0.0
        %303 = vst.msk [vmem:[#allocation2 + $0xb9] sm:$0x1] %vm277, 0.0
        %304 = vst.msk [vmem:[#allocation2 + $0xd1] sm:$0x1] %vm277, 0.0
        %305 = vst.msk [vmem:[#allocation2 + $0xe9] sm:$0x1] %vm277, 0.0
        %306 = vst.msk [vmem:[#allocation2 + $0x101] sm:$0x1] %vm277, 0.0
        %307 = vst.msk [vmem:[#allocation2 + $0x119] sm:$0x1] %vm277, 0.0
        %308 = vst.msk [vmem:[#allocation2 + $0x131] sm:$0x1] %vm277, 0.0
        %309 = vst.msk [vmem:[#allocation2 + $0x149] sm:$0x1] %vm277, 0.0
        %310 = vst.msk [vmem:[#allocation2 + $0x161] sm:$0x1] %vm277, 0.0
        %311 = vst.msk [vmem:[#allocation2 + $0x179] sm:$0x1] %vm277, 0.0
        %312 = vst.msk [vmem:[#allocation2 + $0x191] sm:$0x1] %vm277, 0.0
        %313 = vst.msk [vmem:[#allocation2 + $0x1a9] sm:$0x1] %vm277, 0.0
        %s314 = scalar_lea.vmem [#allocation2], 24
        %315 = vst.msk [vmem:[%s314 + $0x1] sm:$0xff] %vm268, %v220
        %316 = vst.msk [vmem:[%s314 + $0x9] sm:$0xff] %vm268, %v221
        %317 = vst.msk [vmem:[%s314 + $0x19] sm:$0xff] %vm268, %v222
        %318 = vst.msk [vmem:[%s314 + $0x21] sm:$0xff] %vm268, %v223
        %319 = vst.msk [vmem:[%s314 + $0x31] sm:$0xff] %vm268, %v224
        %320 = vst.msk [vmem:[%s314 + $0x39] sm:$0xff] %vm268, %v225
        %321 = vst.msk [vmem:[%s314 + $0x49] sm:$0xff] %vm268, %v226
        %322 = vst.msk [vmem:[%s314 + $0x51] sm:$0xff] %vm268, %v227
        %323 = vst.msk [vmem:[%s314 + $0x61] sm:$0xff] %vm268, %v228
        %324 = vst.msk [vmem:[%s314 + $0x69] sm:$0xff] %vm268, %v229
        %325 = vst.msk [vmem:[%s314 + $0x79] sm:$0xff] %vm268, %v230
        %326 = vst.msk [vmem:[%s314 + $0x81] sm:$0xff] %vm268, %v231
        %327 = vst.msk [vmem:[%s314 + $0x91] sm:$0xff] %vm268, %v232
        %328 = vst.msk [vmem:[%s314 + $0x99] sm:$0xff] %vm268, %v233
        %329 = vst.msk [vmem:[%s314 + $0xa9] sm:$0xff] %vm268, %v234
        %330 = vst.msk [vmem:[%s314 + $0xb1] sm:$0xff] %vm268, %v235
        %331 = vst.msk [vmem:[%s314 + $0xc1] sm:$0xff] %vm268, %v252
        %332 = vst.msk [vmem:[%s314 + $0xc9] sm:$0xff] %vm268, %v253
        %333 = vst.msk [vmem:[%s314 + $0xd9] sm:$0xff] %vm268, %v254
        %334 = vst.msk [vmem:[%s314 + $0xe1] sm:$0xff] %vm268, %v255
        %335 = vst.msk [vmem:[%s314 + $0xf1] sm:$0xff] %vm268, %v256
        %336 = vst.msk [vmem:[%s314 + $0xf9] sm:$0xff] %vm268, %v257
        %337 = vst.msk [vmem:[%s314 + $0x109] sm:$0xff] %vm268, %v258
        %338 = vst.msk [vmem:[%s314 + $0x111] sm:$0xff] %vm268, %v259
        %339 = vst.msk [vmem:[%s314 + $0x121] sm:$0xff] %vm268, %v260
        %340 = vst.msk [vmem:[%s314 + $0x129] sm:$0xff] %vm268, %v261
        %341 = vst.msk [vmem:[%s314 + $0x139] sm:$0xff] %vm268, %v262
        %342 = vst.msk [vmem:[%s314 + $0x141] sm:$0xff] %vm268, %v263
        %343 = vst.msk [vmem:[%s314 + $0x151] sm:$0xff] %vm268, %v264
        %344 = vst.msk [vmem:[%s314 + $0x159] sm:$0xff] %vm268, %v265
        %345 = vst.msk [vmem:[%s314 + $0x169] sm:$0xff] %vm268, %v266
        %346 = vst.msk [vmem:[%s314 + $0x171] sm:$0xff] %vm268, %v267
        %v347 = vld [vmem:[#allocation2] sm:$0xff]
        %v348 = vld [vmem:[#allocation2 + $0x8] sm:$0xff]
        %v349 = vld [vmem:[#allocation2 + $0x18] sm:$0xff]
        %v350 = vld [vmem:[#allocation2 + $0x20] sm:$0xff]
        %v351 = vld [vmem:[#allocation2 + $0x30] sm:$0xff]
        %v352 = vld [vmem:[#allocation2 + $0x38] sm:$0xff]
        %v353 = vld [vmem:[#allocation2 + $0x48] sm:$0xff]
        %v354 = vld [vmem:[#allocation2 + $0x50] sm:$0xff]
        %v355 = vld [vmem:[#allocation2 + $0x60] sm:$0xff]
        %v356 = vld [vmem:[#allocation2 + $0x68] sm:$0xff]
        %v357 = vld [vmem:[#allocation2 + $0x78] sm:$0xff]
        %v358 = vld [vmem:[#allocation2 + $0x80] sm:$0xff]
        %v359 = vld [vmem:[#allocation2 + $0x90] sm:$0xff]
        %v360 = vld [vmem:[#allocation2 + $0x98] sm:$0xff]
        %v361 = vld [vmem:[#allocation2 + $0xa8] sm:$0xff]
        %v362 = vld [vmem:[#allocation2 + $0xb0] sm:$0xff]
        %v363 = vld [vmem:[#allocation2 + $0xc0] sm:$0xff]
        %v364 = vld [vmem:[#allocation2 + $0xc8] sm:$0xff]
        %v365 = vld [vmem:[#allocation2 + $0xd8] sm:$0xff]
        %v366 = vld [vmem:[#allocation2 + $0xe0] sm:$0xff]
        %v367 = vld [vmem:[#allocation2 + $0xf0] sm:$0xff]
        %v368 = vld [vmem:[#allocation2 + $0xf8] sm:$0xff]
        %v369 = vld [vmem:[#allocation2 + $0x108] sm:$0xff]
        %v370 = vld [vmem:[#allocation2 + $0x110] sm:$0xff]
        %v371 = vld [vmem:[#allocation2 + $0x120] sm:$0xff]
        %v372 = vld [vmem:[#allocation2 + $0x128] sm:$0xff]
        %v373 = vld [vmem:[#allocation2 + $0x138] sm:$0xff]
        %v374 = vld [vmem:[#allocation2 + $0x140] sm:$0xff]
        %v375 = vld [vmem:[#allocation2 + $0x150] sm:$0xff]
        %v376 = vld [vmem:[#allocation2 + $0x158] sm:$0xff]
        %v377 = vld [vmem:[#allocation2 + $0x168] sm:$0xff]
        %v378 = vld [vmem:[#allocation2 + $0x170] sm:$0xff]
        %v379 = vld [vmem:[#allocation2 + $0x1] sm:$0xff]
        %v380 = vld [vmem:[#allocation2 + $0x9] sm:$0xff]
        %v381 = vld [vmem:[#allocation2 + $0x19] sm:$0xff]
        %v382 = vld [vmem:[#allocation2 + $0x21] sm:$0xff]
        %v383 = vld [vmem:[#allocation2 + $0x31] sm:$0xff]
        %v384 = vld [vmem:[#allocation2 + $0x39] sm:$0xff]
        %v385 = vld [vmem:[#allocation2 + $0x49] sm:$0xff]
        %v386 = vld [vmem:[#allocation2 + $0x51] sm:$0xff]
        %v387 = vld [vmem:[#allocation2 + $0x61] sm:$0xff]
        %v388 = vld [vmem:[#allocation2 + $0x69] sm:$0xff]
        %v389 = vld [vmem:[#allocation2 + $0x79] sm:$0xff]
        %v390 = vld [vmem:[#allocation2 + $0x81] sm:$0xff]
        %v391 = vld [vmem:[#allocation2 + $0x91] sm:$0xff]
        %v392 = vld [vmem:[#allocation2 + $0x99] sm:$0xff]
        %v393 = vld [vmem:[#allocation2 + $0xa9] sm:$0xff]
        %v394 = vld [vmem:[#allocation2 + $0xb1] sm:$0xff]
        %v395 = vld [vmem:[#allocation2 + $0xc1] sm:$0xff]
        %v396 = vld [vmem:[#allocation2 + $0xc9] sm:$0xff]
        %v397 = vld [vmem:[#allocation2 + $0xd9] sm:$0xff]
        %v398 = vld [vmem:[#allocation2 + $0xe1] sm:$0xff]
        %v399 = vld [vmem:[#allocation2 + $0xf1] sm:$0xff]
        %v400 = vld [vmem:[#allocation2 + $0xf9] sm:$0xff]
        %v401 = vld [vmem:[#allocation2 + $0x109] sm:$0xff]
        %v402 = vld [vmem:[#allocation2 + $0x111] sm:$0xff]
        %v403 = vld [vmem:[#allocation2 + $0x121] sm:$0xff]
        %v404 = vld [vmem:[#allocation2 + $0x129] sm:$0xff]
        %v405 = vld [vmem:[#allocation2 + $0x139] sm:$0xff]
        %v406 = vld [vmem:[#allocation2 + $0x141] sm:$0xff]
        %v407 = vld [vmem:[#allocation2 + $0x151] sm:$0xff]
        %v408 = vld [vmem:[#allocation2 + $0x159] sm:$0xff]
        %v409 = vld [vmem:[#allocation2 + $0x169] sm:$0xff]
        %v410 = vld [vmem:[#allocation2 + $0x171] sm:$0xff]
        %v411 = vld [vmem:[#allocation2 + $0x2] sm:$0xff]
        %v412 = vld [vmem:[#allocation2 + $0xa] sm:$0xff]
        %v413 = vld [vmem:[#allocation2 + $0x1a] sm:$0xff]
        %v414 = vld [vmem:[#allocation2 + $0x22] sm:$0xff]
        %v415 = vld [vmem:[#allocation2 + $0x32] sm:$0xff]
        %v416 = vld [vmem:[#allocation2 + $0x3a] sm:$0xff]
        %v417 = vld [vmem:[#allocation2 + $0x4a] sm:$0xff]
        %v418 = vld [vmem:[#allocation2 + $0x52] sm:$0xff]
        %v419 = vld [vmem:[#allocation2 + $0x62] sm:$0xff]
        %v420 = vld [vmem:[#allocation2 + $0x6a] sm:$0xff]
        %v421 = vld [vmem:[#allocation2 + $0x7a] sm:$0xff]
        %v422 = vld [vmem:[#allocation2 + $0x82] sm:$0xff]
        %v423 = vld [vmem:[#allocation2 + $0x92] sm:$0xff]
        %v424 = vld [vmem:[#allocation2 + $0x9a] sm:$0xff]
        %v425 = vld [vmem:[#allocation2 + $0xaa] sm:$0xff]
        %v426 = vld [vmem:[#allocation2 + $0xb2] sm:$0xff]
        %v427 = vld [vmem:[#allocation2 + $0xc2] sm:$0xff]
        %v428 = vld [vmem:[#allocation2 + $0xca] sm:$0xff]
        %v429 = vld [vmem:[#allocation2 + $0xda] sm:$0xff]
        %v430 = vld [vmem:[#allocation2 + $0xe2] sm:$0xff]
        %v431 = vld [vmem:[#allocation2 + $0xf2] sm:$0xff]
        %v432 = vld [vmem:[#allocation2 + $0xfa] sm:$0xff]
        %v433 = vld [vmem:[#allocation2 + $0x10a] sm:$0xff]
        %v434 = vld [vmem:[#allocation2 + $0x112] sm:$0xff]
        %v435 = vld [vmem:[#allocation2 + $0x122] sm:$0xff]
        %v436 = vld [vmem:[#allocation2 + $0x12a] sm:$0xff]
        %v437 = vld [vmem:[#allocation2 + $0x13a] sm:$0xff]
        %v438 = vld [vmem:[#allocation2 + $0x142] sm:$0xff]
        %v439 = vld [vmem:[#allocation2 + $0x152] sm:$0xff]
        %v440 = vld [vmem:[#allocation2 + $0x15a] sm:$0xff]
        %v441 = vld [vmem:[#allocation2 + $0x16a] sm:$0xff]
        %v442 = vld [vmem:[#allocation2 + $0x172] sm:$0xff]
        %v443 = vld [vmem:[%s314] sm:$0xff]
        %v444 = vld [vmem:[%s314 + $0x8] sm:$0xff]
        %v445 = vld [vmem:[%s314 + $0x18] sm:$0xff]
        %v446 = vld [vmem:[%s314 + $0x20] sm:$0xff]
        %v447 = vld [vmem:[%s314 + $0x30] sm:$0xff]
        %v448 = vld [vmem:[%s314 + $0x38] sm:$0xff]
        %v449 = vld [vmem:[%s314 + $0x48] sm:$0xff]
        %v450 = vld [vmem:[%s314 + $0x50] sm:$0xff]
        %v451 = vld [vmem:[%s314 + $0x60] sm:$0xff]
        %v452 = vld [vmem:[%s314 + $0x68] sm:$0xff]
        %v453 = vld [vmem:[%s314 + $0x78] sm:$0xff]
        %v454 = vld [vmem:[%s314 + $0x80] sm:$0xff]
        %v455 = vld [vmem:[%s314 + $0x90] sm:$0xff]
        %v456 = vld [vmem:[%s314 + $0x98] sm:$0xff]
        %v457 = vld [vmem:[%s314 + $0xa8] sm:$0xff]
        %v458 = vld [vmem:[%s314 + $0xb0] sm:$0xff]
        %v459 = vld [vmem:[%s314 + $0xc0] sm:$0xff]
        %v460 = vld [vmem:[%s314 + $0xc8] sm:$0xff]
        %v461 = vld [vmem:[%s314 + $0xd8] sm:$0xff]
        %v462 = vld [vmem:[%s314 + $0xe0] sm:$0xff]
        %v463 = vld [vmem:[%s314 + $0xf0] sm:$0xff]
        %v464 = vld [vmem:[%s314 + $0xf8] sm:$0xff]
        %v465 = vld [vmem:[%s314 + $0x108] sm:$0xff]
        %v466 = vld [vmem:[%s314 + $0x110] sm:$0xff]
        %v467 = vld [vmem:[%s314 + $0x120] sm:$0xff]
        %v468 = vld [vmem:[%s314 + $0x128] sm:$0xff]
        %v469 = vld [vmem:[%s314 + $0x138] sm:$0xff]
        %v470 = vld [vmem:[%s314 + $0x140] sm:$0xff]
        %v471 = vld [vmem:[%s314 + $0x150] sm:$0xff]
        %v472 = vld [vmem:[%s314 + $0x158] sm:$0xff]
        %v473 = vld [vmem:[%s314 + $0x168] sm:$0xff]
        %v474 = vld [vmem:[%s314 + $0x170] sm:$0xff]
        %v475 = vld [vmem:[%s314 + $0x1] sm:$0xff]
        %v476 = vld [vmem:[%s314 + $0x9] sm:$0xff]
        %v477 = vld [vmem:[%s314 + $0x19] sm:$0xff]
        %v478 = vld [vmem:[%s314 + $0x21] sm:$0xff]
        %v479 = vld [vmem:[%s314 + $0x31] sm:$0xff]
        %v480 = vld [vmem:[%s314 + $0x39] sm:$0xff]
        %v481 = vld [vmem:[%s314 + $0x49] sm:$0xff]
        %v482 = vld [vmem:[%s314 + $0x51] sm:$0xff]
        %v483 = vld [vmem:[%s314 + $0x61] sm:$0xff]
        %v484 = vld [vmem:[%s314 + $0x69] sm:$0xff]
        %v485 = vld [vmem:[%s314 + $0x79] sm:$0xff]
        %v486 = vld [vmem:[%s314 + $0x81] sm:$0xff]
        %v487 = vld [vmem:[%s314 + $0x91] sm:$0xff]
        %v488 = vld [vmem:[%s314 + $0x99] sm:$0xff]
        %v489 = vld [vmem:[%s314 + $0xa9] sm:$0xff]
        %v490 = vld [vmem:[%s314 + $0xb1] sm:$0xff]
        %v491 = vld [vmem:[%s314 + $0xc1] sm:$0xff]
        %v492 = vld [vmem:[%s314 + $0xc9] sm:$0xff]
        %v493 = vld [vmem:[%s314 + $0xd9] sm:$0xff]
        %v494 = vld [vmem:[%s314 + $0xe1] sm:$0xff]
        %v495 = vld [vmem:[%s314 + $0xf1] sm:$0xff]
        %v496 = vld [vmem:[%s314 + $0xf9] sm:$0xff]
        %v497 = vld [vmem:[%s314 + $0x109] sm:$0xff]
        %v498 = vld [vmem:[%s314 + $0x111] sm:$0xff]
        %v499 = vld [vmem:[%s314 + $0x121] sm:$0xff]
        %v500 = vld [vmem:[%s314 + $0x129] sm:$0xff]
        %v501 = vld [vmem:[%s314 + $0x139] sm:$0xff]
        %v502 = vld [vmem:[%s314 + $0x141] sm:$0xff]
        %v503 = vld [vmem:[%s314 + $0x151] sm:$0xff]
        %v504 = vld [vmem:[%s314 + $0x159] sm:$0xff]
        %v505 = vld [vmem:[%s314 + $0x169] sm:$0xff]
        %v506 = vld [vmem:[%s314 + $0x171] sm:$0xff]
        %v507 = vld [vmem:[%s314 + $0x2] sm:$0xff]
        %v508 = vld [vmem:[%s314 + $0xa] sm:$0xff]
        %v509 = vld [vmem:[%s314 + $0x1a] sm:$0xff]
        %v510 = vld [vmem:[%s314 + $0x22] sm:$0xff]
        %v511 = vld [vmem:[%s314 + $0x32] sm:$0xff]
        %v512 = vld [vmem:[%s314 + $0x3a] sm:$0xff]
        %v513 = vld [vmem:[%s314 + $0x4a] sm:$0xff]
        %v514 = vld [vmem:[%s314 + $0x52] sm:$0xff]
        %v515 = vld [vmem:[%s314 + $0x62] sm:$0xff]
        %v516 = vld [vmem:[%s314 + $0x6a] sm:$0xff]
        %v517 = vld [vmem:[%s314 + $0x7a] sm:$0xff]
        %v518 = vld [vmem:[%s314 + $0x82] sm:$0xff]
        %v519 = vld [vmem:[%s314 + $0x92] sm:$0xff]
        %v520 = vld [vmem:[%s314 + $0x9a] sm:$0xff]
        %v521 = vld [vmem:[%s314 + $0xaa] sm:$0xff]
        %v522 = vld [vmem:[%s314 + $0xb2] sm:$0xff]
        %v523 = vld [vmem:[%s314 + $0xc2] sm:$0xff]
        %v524 = vld [vmem:[%s314 + $0xca] sm:$0xff]
        %v525 = vld [vmem:[%s314 + $0xda] sm:$0xff]
        %v526 = vld [vmem:[%s314 + $0xe2] sm:$0xff]
        %v527 = vld [vmem:[%s314 + $0xf2] sm:$0xff]
        %v528 = vld [vmem:[%s314 + $0xfa] sm:$0xff]
        %v529 = vld [vmem:[%s314 + $0x10a] sm:$0xff]
        %v530 = vld [vmem:[%s314 + $0x112] sm:$0xff]
        %v531 = vld [vmem:[%s314 + $0x122] sm:$0xff]
        %v532 = vld [vmem:[%s314 + $0x12a] sm:$0xff]
        %v533 = vld [vmem:[%s314 + $0x13a] sm:$0xff]
        %v534 = vld [vmem:[%s314 + $0x142] sm:$0xff]
        %v535 = vld [vmem:[%s314 + $0x152] sm:$0xff]
        %v536 = vld [vmem:[%s314 + $0x15a] sm:$0xff]
        %v537 = vld [vmem:[%s314 + $0x16a] sm:$0xff]
        %v538 = vld [vmem:[%s314 + $0x172] sm:$0xff]
        %s539 = scalar_lea.vmem [#allocation2], 48
        %v540 = vld [vmem:[%s539] sm:$0xff]
        %v541 = vld [vmem:[%s539 + $0x8] sm:$0xff]
        %v542 = vld [vmem:[%s539 + $0x18] sm:$0xff]
        %v543 = vld [vmem:[%s539 + $0x20] sm:$0xff]
        %v544 = vld [vmem:[%s539 + $0x30] sm:$0xff]
        %v545 = vld [vmem:[%s539 + $0x38] sm:$0xff]
        %v546 = vld [vmem:[%s539 + $0x48] sm:$0xff]
        %v547 = vld [vmem:[%s539 + $0x50] sm:$0xff]
        %v548 = vld [vmem:[%s539 + $0x60] sm:$0xff]
        %v549 = vld [vmem:[%s539 + $0x68] sm:$0xff]
        %v550 = vld [vmem:[%s539 + $0x78] sm:$0xff]
        %v551 = vld [vmem:[%s539 + $0x80] sm:$0xff]
        %v552 = vld [vmem:[%s539 + $0x90] sm:$0xff]
        %v553 = vld [vmem:[%s539 + $0x98] sm:$0xff]
        %v554 = vld [vmem:[%s539 + $0xa8] sm:$0xff]
        %v555 = vld [vmem:[%s539 + $0xb0] sm:$0xff]
        %v556 = vld [vmem:[%s539 + $0xc0] sm:$0xff]
        %v557 = vld [vmem:[%s539 + $0xc8] sm:$0xff]
        %v558 = vld [vmem:[%s539 + $0xd8] sm:$0xff]
        %v559 = vld [vmem:[%s539 + $0xe0] sm:$0xff]
        %v560 = vld [vmem:[%s539 + $0xf0] sm:$0xff]
        %v561 = vld [vmem:[%s539 + $0xf8] sm:$0xff]
        %v562 = vld [vmem:[%s539 + $0x108] sm:$0xff]
        %v563 = vld [vmem:[%s539 + $0x110] sm:$0xff]
        %v564 = vld [vmem:[%s539 + $0x120] sm:$0xff]
        %v565 = vld [vmem:[%s539 + $0x128] sm:$0xff]
        %v566 = vld [vmem:[%s539 + $0x138] sm:$0xff]
        %v567 = vld [vmem:[%s539 + $0x140] sm:$0xff]
        %v568 = vld [vmem:[%s539 + $0x150] sm:$0xff]
        %v569 = vld [vmem:[%s539 + $0x158] sm:$0xff]
        %v570 = vld [vmem:[%s539 + $0x168] sm:$0xff]
        %v571 = vld [vmem:[%s539 + $0x170] sm:$0xff]
        %v572 = vld [vmem:[%s539 + $0x1] sm:$0xff]
        %v573 = vld [vmem:[%s539 + $0x9] sm:$0xff]
        %v574 = vld [vmem:[%s539 + $0x19] sm:$0xff]
        %v575 = vld [vmem:[%s539 + $0x21] sm:$0xff]
        %v576 = vld [vmem:[%s539 + $0x31] sm:$0xff]
        %v577 = vld [vmem:[%s539 + $0x39] sm:$0xff]
        %v578 = vld [vmem:[%s539 + $0x49] sm:$0xff]
        %v579 = vld [vmem:[%s539 + $0x51] sm:$0xff]
        %v580 = vld [vmem:[%s539 + $0x61] sm:$0xff]
        %v581 = vld [vmem:[%s539 + $0x69] sm:$0xff]
        %v582 = vld [vmem:[%s539 + $0x79] sm:$0xff]
        %v583 = vld [vmem:[%s539 + $0x81] sm:$0xff]
        %v584 = vld [vmem:[%s539 + $0x91] sm:$0xff]
        %v585 = vld [vmem:[%s539 + $0x99] sm:$0xff]
        %v586 = vld [vmem:[%s539 + $0xa9] sm:$0xff]
        %v587 = vld [vmem:[%s539 + $0xb1] sm:$0xff]
        %v588 = vld [vmem:[%s539 + $0xc1] sm:$0xff]
        %v589 = vld [vmem:[%s539 + $0xc9] sm:$0xff]
        %v590 = vld [vmem:[%s539 + $0xd9] sm:$0xff]
        %v591 = vld [vmem:[%s539 + $0xe1] sm:$0xff]
        %v592 = vld [vmem:[%s539 + $0xf1] sm:$0xff]
        %v593 = vld [vmem:[%s539 + $0xf9] sm:$0xff]
        %v594 = vld [vmem:[%s539 + $0x109] sm:$0xff]
        %v595 = vld [vmem:[%s539 + $0x111] sm:$0xff]
        %v596 = vld [vmem:[%s539 + $0x121] sm:$0xff]
        %v597 = vld [vmem:[%s539 + $0x129] sm:$0xff]
        %v598 = vld [vmem:[%s539 + $0x139] sm:$0xff]
        %v599 = vld [vmem:[%s539 + $0x141] sm:$0xff]
        %v600 = vld [vmem:[%s539 + $0x151] sm:$0xff]
        %v601 = vld [vmem:[%s539 + $0x159] sm:$0xff]
        %v602 = vld [vmem:[%s539 + $0x169] sm:$0xff]
        %v603 = vld [vmem:[%s539 + $0x171] sm:$0xff]
        %v604 = vld [vmem:[%s539 + $0x2] sm:$0xff]
        %v605 = vld [vmem:[%s539 + $0xa] sm:$0xff]
        %v606 = vld [vmem:[%s539 + $0x1a] sm:$0xff]
        %v607 = vld [vmem:[%s539 + $0x22] sm:$0xff]
        %v608 = vld [vmem:[%s539 + $0x32] sm:$0xff]
        %v609 = vld [vmem:[%s539 + $0x3a] sm:$0xff]
        %v610 = vld [vmem:[%s539 + $0x4a] sm:$0xff]
        %v611 = vld [vmem:[%s539 + $0x52] sm:$0xff]
        %v612 = vld [vmem:[%s539 + $0x62] sm:$0xff]
        %v613 = vld [vmem:[%s539 + $0x6a] sm:$0xff]
        %v614 = vld [vmem:[%s539 + $0x7a] sm:$0xff]
        %v615 = vld [vmem:[%s539 + $0x82] sm:$0xff]
        %v616 = vld [vmem:[%s539 + $0x92] sm:$0xff]
        %v617 = vld [vmem:[%s539 + $0x9a] sm:$0xff]
        %v618 = vld [vmem:[%s539 + $0xaa] sm:$0xff]
        %v619 = vld [vmem:[%s539 + $0xb2] sm:$0xff]
        %v620 = vld [vmem:[%s539 + $0xc2] sm:$0xff]
        %v621 = vld [vmem:[%s539 + $0xca] sm:$0xff]
        %v622 = vld [vmem:[%s539 + $0xda] sm:$0xff]
        %v623 = vld [vmem:[%s539 + $0xe2] sm:$0xff]
        %v624 = vld [vmem:[%s539 + $0xf2] sm:$0xff]
        %v625 = vld [vmem:[%s539 + $0xfa] sm:$0xff]
        %v626 = vld [vmem:[%s539 + $0x10a] sm:$0xff]
        %v627 = vld [vmem:[%s539 + $0x112] sm:$0xff]
        %v628 = vld [vmem:[%s539 + $0x122] sm:$0xff]
        %v629 = vld [vmem:[%s539 + $0x12a] sm:$0xff]
        %v630 = vld [vmem:[%s539 + $0x13a] sm:$0xff]
        %v631 = vld [vmem:[%s539 + $0x142] sm:$0xff]
        %v632 = vld [vmem:[%s539 + $0x152] sm:$0xff]
        %v633 = vld [vmem:[%s539 + $0x15a] sm:$0xff]
        %v634 = vld [vmem:[%s539 + $0x16a] sm:$0xff]
        %v635 = vld [vmem:[%s539 + $0x172] sm:$0xff]
        %668 = vrot.lane.b32.xlu0 %v379, 3
        %v669 = vpop.permute.xlu0 %668
        %670 = vrot.lane.b32.xlu0 %v380, 3
        %v671 = vpop.permute.xlu0 %670
        %672 = vrot.lane.b32.xlu0 %v381, 3
        %v673 = vpop.permute.xlu0 %672
        %674 = vrot.lane.b32.xlu0 %v382, 3
        %v675 = vpop.permute.xlu0 %674
        %676 = vrot.lane.b32.xlu0 %v383, 3
        %v677 = vpop.permute.xlu0 %676
        %678 = vrot.lane.b32.xlu0 %v384, 3
        %v679 = vpop.permute.xlu0 %678
        %680 = vrot.lane.b32.xlu0 %v385, 3
        %v681 = vpop.permute.xlu0 %680
        %682 = vrot.lane.b32.xlu0 %v386, 3
        %v683 = vpop.permute.xlu0 %682
        %684 = vrot.lane.b32.xlu0 %v387, 3
        %v685 = vpop.permute.xlu0 %684
        %686 = vrot.lane.b32.xlu0 %v388, 3
        %v687 = vpop.permute.xlu0 %686
        %688 = vrot.lane.b32.xlu0 %v389, 3
        %v689 = vpop.permute.xlu0 %688
        %690 = vrot.lane.b32.xlu0 %v390, 3
        %v691 = vpop.permute.xlu0 %690
        %692 = vrot.lane.b32.xlu0 %v391, 3
        %v693 = vpop.permute.xlu0 %692
        %694 = vrot.lane.b32.xlu0 %v392, 3
        %v695 = vpop.permute.xlu0 %694
        %696 = vrot.lane.b32.xlu0 %v393, 3
        %v697 = vpop.permute.xlu0 %696
        %698 = vrot.lane.b32.xlu0 %v394, 3
        %v699 = vpop.permute.xlu0 %698
        %700 = vrot.lane.b32.xlu0 %v395, 3
        %v701 = vpop.permute.xlu0 %700
        %702 = vrot.lane.b32.xlu0 %v396, 3
        %v703 = vpop.permute.xlu0 %702
        %704 = vrot.lane.b32.xlu0 %v397, 3
        %v705 = vpop.permute.xlu0 %704
        %706 = vrot.lane.b32.xlu0 %v398, 3
        %v707 = vpop.permute.xlu0 %706
        %708 = vrot.lane.b32.xlu0 %v399, 3
        %v709 = vpop.permute.xlu0 %708
        %710 = vrot.lane.b32.xlu0 %v400, 3
        %v711 = vpop.permute.xlu0 %710
        %712 = vrot.lane.b32.xlu0 %v401, 3
        %v713 = vpop.permute.xlu0 %712
        %714 = vrot.lane.b32.xlu0 %v402, 3
        %v715 = vpop.permute.xlu0 %714
        %716 = vrot.lane.b32.xlu0 %v403, 3
        %v717 = vpop.permute.xlu0 %716
        %718 = vrot.lane.b32.xlu0 %v404, 3
        %v719 = vpop.permute.xlu0 %718
        %720 = vrot.lane.b32.xlu0 %v405, 3
        %v721 = vpop.permute.xlu0 %720
        %722 = vrot.lane.b32.xlu0 %v406, 3
        %v723 = vpop.permute.xlu0 %722
        %724 = vrot.lane.b32.xlu0 %v407, 3
        %v725 = vpop.permute.xlu0 %724
        %726 = vrot.lane.b32.xlu0 %v408, 3
        %v727 = vpop.permute.xlu0 %726
        %728 = vrot.lane.b32.xlu0 %v409, 3
        %v729 = vpop.permute.xlu0 %728
        %730 = vrot.lane.b32.xlu0 %v410, 3
        %v731 = vpop.permute.xlu0 %730
        %796 = vrot.lane.b32.xlu0 %v411, 6
        %v797 = vpop.permute.xlu0 %796
        %798 = vrot.lane.b32.xlu0 %v412, 6
        %v799 = vpop.permute.xlu0 %798
        %800 = vrot.lane.b32.xlu0 %v413, 6
        %v801 = vpop.permute.xlu0 %800
        %802 = vrot.lane.b32.xlu0 %v414, 6
        %v803 = vpop.permute.xlu0 %802
        %804 = vrot.lane.b32.xlu0 %v415, 6
        %v805 = vpop.permute.xlu0 %804
        %806 = vrot.lane.b32.xlu0 %v416, 6
        %v807 = vpop.permute.xlu0 %806
        %808 = vrot.lane.b32.xlu0 %v417, 6
        %v809 = vpop.permute.xlu0 %808
        %810 = vrot.lane.b32.xlu0 %v418, 6
        %v811 = vpop.permute.xlu0 %810
        %812 = vrot.lane.b32.xlu0 %v419, 6
        %v813 = vpop.permute.xlu0 %812
        %814 = vrot.lane.b32.xlu0 %v420, 6
        %v815 = vpop.permute.xlu0 %814
        %816 = vrot.lane.b32.xlu0 %v421, 6
        %v817 = vpop.permute.xlu0 %816
        %818 = vrot.lane.b32.xlu0 %v422, 6
        %v819 = vpop.permute.xlu0 %818
        %820 = vrot.lane.b32.xlu0 %v423, 6
        %v821 = vpop.permute.xlu0 %820
        %822 = vrot.lane.b32.xlu0 %v424, 6
        %v823 = vpop.permute.xlu0 %822
        %824 = vrot.lane.b32.xlu0 %v425, 6
        %v825 = vpop.permute.xlu0 %824
        %826 = vrot.lane.b32.xlu0 %v426, 6
        %v827 = vpop.permute.xlu0 %826
        %828 = vrot.lane.b32.xlu0 %v427, 6
        %v829 = vpop.permute.xlu0 %828
        %830 = vrot.lane.b32.xlu0 %v428, 6
        %v831 = vpop.permute.xlu0 %830
        %832 = vrot.lane.b32.xlu0 %v429, 6
        %v833 = vpop.permute.xlu0 %832
        %834 = vrot.lane.b32.xlu0 %v430, 6
        %v835 = vpop.permute.xlu0 %834
        %836 = vrot.lane.b32.xlu0 %v431, 6
        %v837 = vpop.permute.xlu0 %836
        %838 = vrot.lane.b32.xlu0 %v432, 6
        %v839 = vpop.permute.xlu0 %838
        %840 = vrot.lane.b32.xlu0 %v433, 6
        %v841 = vpop.permute.xlu0 %840
        %842 = vrot.lane.b32.xlu0 %v434, 6
        %v843 = vpop.permute.xlu0 %842
        %844 = vrot.lane.b32.xlu0 %v435, 6
        %v845 = vpop.permute.xlu0 %844
        %846 = vrot.lane.b32.xlu0 %v436, 6
        %v847 = vpop.permute.xlu0 %846
        %848 = vrot.lane.b32.xlu0 %v437, 6
        %v849 = vpop.permute.xlu0 %848
        %850 = vrot.lane.b32.xlu0 %v438, 6
        %v851 = vpop.permute.xlu0 %850
        %852 = vrot.lane.b32.xlu0 %v439, 6
        %v853 = vpop.permute.xlu0 %852
        %854 = vrot.lane.b32.xlu0 %v440, 6
        %v855 = vpop.permute.xlu0 %854
        %856 = vrot.lane.b32.xlu0 %v441, 6
        %v857 = vpop.permute.xlu0 %856
        %858 = vrot.lane.b32.xlu0 %v442, 6
        %v859 = vpop.permute.xlu0 %858
        %924 = vrot.lane.b32.xlu0 %v443, 9
        %v925 = vpop.permute.xlu0 %924
        %926 = vrot.lane.b32.xlu0 %v444, 9
        %v927 = vpop.permute.xlu0 %926
        %928 = vrot.lane.b32.xlu0 %v445, 9
        %v929 = vpop.permute.xlu0 %928
        %930 = vrot.lane.b32.xlu0 %v446, 9
        %v931 = vpop.permute.xlu0 %930
        %932 = vrot.lane.b32.xlu0 %v447, 9
        %v933 = vpop.permute.xlu0 %932
        %934 = vrot.lane.b32.xlu0 %v448, 9
        %v935 = vpop.permute.xlu0 %934
        %936 = vrot.lane.b32.xlu0 %v449, 9
        %v937 = vpop.permute.xlu0 %936
        %938 = vrot.lane.b32.xlu0 %v450, 9
        %v939 = vpop.permute.xlu0 %938
        %940 = vrot.lane.b32.xlu0 %v451, 9
        %v941 = vpop.permute.xlu0 %940
        %942 = vrot.lane.b32.xlu0 %v452, 9
        %v943 = vpop.permute.xlu0 %942
        %944 = vrot.lane.b32.xlu0 %v453, 9
        %v945 = vpop.permute.xlu0 %944
        %946 = vrot.lane.b32.xlu0 %v454, 9
        %v947 = vpop.permute.xlu0 %946
        %948 = vrot.lane.b32.xlu0 %v455, 9
        %v949 = vpop.permute.xlu0 %948
        %950 = vrot.lane.b32.xlu0 %v456, 9
        %v951 = vpop.permute.xlu0 %950
        %952 = vrot.lane.b32.xlu0 %v457, 9
        %v953 = vpop.permute.xlu0 %952
        %954 = vrot.lane.b32.xlu0 %v458, 9
        %v955 = vpop.permute.xlu0 %954
        %956 = vrot.lane.b32.xlu0 %v459, 9
        %v957 = vpop.permute.xlu0 %956
        %958 = vrot.lane.b32.xlu0 %v460, 9
        %v959 = vpop.permute.xlu0 %958
        %960 = vrot.lane.b32.xlu0 %v461, 9
        %v961 = vpop.permute.xlu0 %960
        %962 = vrot.lane.b32.xlu0 %v462, 9
        %v963 = vpop.permute.xlu0 %962
        %964 = vrot.lane.b32.xlu0 %v463, 9
        %v965 = vpop.permute.xlu0 %964
        %966 = vrot.lane.b32.xlu0 %v464, 9
        %v967 = vpop.permute.xlu0 %966
        %968 = vrot.lane.b32.xlu0 %v465, 9
        %v969 = vpop.permute.xlu0 %968
        %970 = vrot.lane.b32.xlu0 %v466, 9
        %v971 = vpop.permute.xlu0 %970
        %972 = vrot.lane.b32.xlu0 %v467, 9
        %v973 = vpop.permute.xlu0 %972
        %974 = vrot.lane.b32.xlu0 %v468, 9
        %v975 = vpop.permute.xlu0 %974
        %976 = vrot.lane.b32.xlu0 %v469, 9
        %v977 = vpop.permute.xlu0 %976
        %978 = vrot.lane.b32.xlu0 %v470, 9
        %v979 = vpop.permute.xlu0 %978
        %980 = vrot.lane.b32.xlu0 %v471, 9
        %v981 = vpop.permute.xlu0 %980
        %982 = vrot.lane.b32.xlu0 %v472, 9
        %v983 = vpop.permute.xlu0 %982
        %984 = vrot.lane.b32.xlu0 %v473, 9
        %v985 = vpop.permute.xlu0 %984
        %986 = vrot.lane.b32.xlu0 %v474, 9
        %v987 = vpop.permute.xlu0 %986
        %1052 = vrot.lane.b32.xlu0 %v475, 12
        %v1053 = vpop.permute.xlu0 %1052
        %1054 = vrot.lane.b32.xlu0 %v476, 12
        %v1055 = vpop.permute.xlu0 %1054
        %1056 = vrot.lane.b32.xlu0 %v477, 12
        %v1057 = vpop.permute.xlu0 %1056
        %1058 = vrot.lane.b32.xlu0 %v478, 12
        %v1059 = vpop.permute.xlu0 %1058
        %1060 = vrot.lane.b32.xlu0 %v479, 12
        %v1061 = vpop.permute.xlu0 %1060
        %1062 = vrot.lane.b32.xlu0 %v480, 12
        %v1063 = vpop.permute.xlu0 %1062
        %1064 = vrot.lane.b32.xlu0 %v481, 12
        %v1065 = vpop.permute.xlu0 %1064
        %1066 = vrot.lane.b32.xlu0 %v482, 12
        %v1067 = vpop.permute.xlu0 %1066
        %1068 = vrot.lane.b32.xlu0 %v483, 12
        %v1069 = vpop.permute.xlu0 %1068
        %1070 = vrot.lane.b32.xlu0 %v484, 12
        %v1071 = vpop.permute.xlu0 %1070
        %1072 = vrot.lane.b32.xlu0 %v485, 12
        %v1073 = vpop.permute.xlu0 %1072
        %1074 = vrot.lane.b32.xlu0 %v486, 12
        %v1075 = vpop.permute.xlu0 %1074
        %1076 = vrot.lane.b32.xlu0 %v487, 12
        %v1077 = vpop.permute.xlu0 %1076
        %1078 = vrot.lane.b32.xlu0 %v488, 12
        %v1079 = vpop.permute.xlu0 %1078
        %1080 = vrot.lane.b32.xlu0 %v489, 12
        %v1081 = vpop.permute.xlu0 %1080
        %1082 = vrot.lane.b32.xlu0 %v490, 12
        %v1083 = vpop.permute.xlu0 %1082
        %1084 = vrot.lane.b32.xlu0 %v491, 12
        %v1085 = vpop.permute.xlu0 %1084
        %1086 = vrot.lane.b32.xlu0 %v492, 12
        %v1087 = vpop.permute.xlu0 %1086
        %1088 = vrot.lane.b32.xlu0 %v493, 12
        %v1089 = vpop.permute.xlu0 %1088
        %1090 = vrot.lane.b32.xlu0 %v494, 12
        %v1091 = vpop.permute.xlu0 %1090
        %1092 = vrot.lane.b32.xlu0 %v495, 12
        %v1093 = vpop.permute.xlu0 %1092
        %1094 = vrot.lane.b32.xlu0 %v496, 12
        %v1095 = vpop.permute.xlu0 %1094
        %1096 = vrot.lane.b32.xlu0 %v497, 12
        %v1097 = vpop.permute.xlu0 %1096
        %1098 = vrot.lane.b32.xlu0 %v498, 12
        %v1099 = vpop.permute.xlu0 %1098
        %1100 = vrot.lane.b32.xlu0 %v499, 12
        %v1101 = vpop.permute.xlu0 %1100
        %1102 = vrot.lane.b32.xlu0 %v500, 12
        %v1103 = vpop.permute.xlu0 %1102
        %1104 = vrot.lane.b32.xlu0 %v501, 12
        %v1105 = vpop.permute.xlu0 %1104
        %1106 = vrot.lane.b32.xlu0 %v502, 12
        %v1107 = vpop.permute.xlu0 %1106
        %1108 = vrot.lane.b32.xlu0 %v503, 12
        %v1109 = vpop.permute.xlu0 %1108
        %1110 = vrot.lane.b32.xlu0 %v504, 12
        %v1111 = vpop.permute.xlu0 %1110
        %1112 = vrot.lane.b32.xlu0 %v505, 12
        %v1113 = vpop.permute.xlu0 %1112
        %1114 = vrot.lane.b32.xlu0 %v506, 12
        %v1115 = vpop.permute.xlu0 %1114
        %1180 = vrot.lane.b32.xlu0 %v507, 15
        %v1181 = vpop.permute.xlu0 %1180
        %1182 = vrot.lane.b32.xlu0 %v508, 15
        %v1183 = vpop.permute.xlu0 %1182
        %1184 = vrot.lane.b32.xlu0 %v509, 15
        %v1185 = vpop.permute.xlu0 %1184
        %1186 = vrot.lane.b32.xlu0 %v510, 15
        %v1187 = vpop.permute.xlu0 %1186
        %1188 = vrot.lane.b32.xlu0 %v511, 15
        %v1189 = vpop.permute.xlu0 %1188
        %1190 = vrot.lane.b32.xlu0 %v512, 15
        %v1191 = vpop.permute.xlu0 %1190
        %1192 = vrot.lane.b32.xlu0 %v513, 15
        %v1193 = vpop.permute.xlu0 %1192
        %1194 = vrot.lane.b32.xlu0 %v514, 15
        %v1195 = vpop.permute.xlu0 %1194
        %1196 = vrot.lane.b32.xlu0 %v515, 15
        %v1197 = vpop.permute.xlu0 %1196
        %1198 = vrot.lane.b32.xlu0 %v516, 15
        %v1199 = vpop.permute.xlu0 %1198
        %1200 = vrot.lane.b32.xlu0 %v517, 15
        %v1201 = vpop.permute.xlu0 %1200
        %1202 = vrot.lane.b32.xlu0 %v518, 15
        %v1203 = vpop.permute.xlu0 %1202
        %1204 = vrot.lane.b32.xlu0 %v519, 15
        %v1205 = vpop.permute.xlu0 %1204
        %1206 = vrot.lane.b32.xlu0 %v520, 15
        %v1207 = vpop.permute.xlu0 %1206
        %1208 = vrot.lane.b32.xlu0 %v521, 15
        %v1209 = vpop.permute.xlu0 %1208
        %1210 = vrot.lane.b32.xlu0 %v522, 15
        %v1211 = vpop.permute.xlu0 %1210
        %1212 = vrot.lane.b32.xlu0 %v523, 15
        %v1213 = vpop.permute.xlu0 %1212
        %1214 = vrot.lane.b32.xlu0 %v524, 15
        %v1215 = vpop.permute.xlu0 %1214
        %1216 = vrot.lane.b32.xlu0 %v525, 15
        %v1217 = vpop.permute.xlu0 %1216
        %1218 = vrot.lane.b32.xlu0 %v526, 15
        %v1219 = vpop.permute.xlu0 %1218
        %1220 = vrot.lane.b32.xlu0 %v527, 15
        %v1221 = vpop.permute.xlu0 %1220
        %1222 = vrot.lane.b32.xlu0 %v528, 15
        %v1223 = vpop.permute.xlu0 %1222
        %1224 = vrot.lane.b32.xlu0 %v529, 15
        %v1225 = vpop.permute.xlu0 %1224
        %1226 = vrot.lane.b32.xlu0 %v530, 15
        %v1227 = vpop.permute.xlu0 %1226
        %1228 = vrot.lane.b32.xlu0 %v531, 15
        %v1229 = vpop.permute.xlu0 %1228
        %1230 = vrot.lane.b32.xlu0 %v532, 15
        %v1231 = vpop.permute.xlu0 %1230
        %1232 = vrot.lane.b32.xlu0 %v533, 15
        %v1233 = vpop.permute.xlu0 %1232
        %1234 = vrot.lane.b32.xlu0 %v534, 15
        %v1235 = vpop.permute.xlu0 %1234
        %1236 = vrot.lane.b32.xlu0 %v535, 15
        %v1237 = vpop.permute.xlu0 %1236
        %1238 = vrot.lane.b32.xlu0 %v536, 15
        %v1239 = vpop.permute.xlu0 %1238
        %1240 = vrot.lane.b32.xlu0 %v537, 15
        %v1241 = vpop.permute.xlu0 %1240
        %1242 = vrot.lane.b32.xlu0 %v538, 15
        %v1243 = vpop.permute.xlu0 %1242
        %1308 = vrot.lane.b32.xlu0 %v540, 18
        %v1309 = vpop.permute.xlu0 %1308
        %1310 = vrot.lane.b32.xlu0 %v541, 18
        %v1311 = vpop.permute.xlu0 %1310
        %1312 = vrot.lane.b32.xlu0 %v542, 18
        %v1313 = vpop.permute.xlu0 %1312
        %1314 = vrot.lane.b32.xlu0 %v543, 18
        %v1315 = vpop.permute.xlu0 %1314
        %1316 = vrot.lane.b32.xlu0 %v544, 18
        %v1317 = vpop.permute.xlu0 %1316
        %1318 = vrot.lane.b32.xlu0 %v545, 18
        %v1319 = vpop.permute.xlu0 %1318
        %1320 = vrot.lane.b32.xlu0 %v546, 18
        %v1321 = vpop.permute.xlu0 %1320
        %1322 = vrot.lane.b32.xlu0 %v547, 18
        %v1323 = vpop.permute.xlu0 %1322
        %1324 = vrot.lane.b32.xlu0 %v548, 18
        %v1325 = vpop.permute.xlu0 %1324
        %1326 = vrot.lane.b32.xlu0 %v549, 18
        %v1327 = vpop.permute.xlu0 %1326
        %1328 = vrot.lane.b32.xlu0 %v550, 18
        %v1329 = vpop.permute.xlu0 %1328
        %1330 = vrot.lane.b32.xlu0 %v551, 18
        %v1331 = vpop.permute.xlu0 %1330
        %1332 = vrot.lane.b32.xlu0 %v552, 18
        %v1333 = vpop.permute.xlu0 %1332
        %1334 = vrot.lane.b32.xlu0 %v553, 18
        %v1335 = vpop.permute.xlu0 %1334
        %1336 = vrot.lane.b32.xlu0 %v554, 18
        %v1337 = vpop.permute.xlu0 %1336
        %1338 = vrot.lane.b32.xlu0 %v555, 18
        %v1339 = vpop.permute.xlu0 %1338
        %1340 = vrot.lane.b32.xlu0 %v556, 18
        %v1341 = vpop.permute.xlu0 %1340
        %1342 = vrot.lane.b32.xlu0 %v557, 18
        %v1343 = vpop.permute.xlu0 %1342
        %1344 = vrot.lane.b32.xlu0 %v558, 18
        %v1345 = vpop.permute.xlu0 %1344
        %1346 = vrot.lane.b32.xlu0 %v559, 18
        %v1347 = vpop.permute.xlu0 %1346
        %1348 = vrot.lane.b32.xlu0 %v560, 18
        %v1349 = vpop.permute.xlu0 %1348
        %1350 = vrot.lane.b32.xlu0 %v561, 18
        %v1351 = vpop.permute.xlu0 %1350
        %1352 = vrot.lane.b32.xlu0 %v562, 18
        %v1353 = vpop.permute.xlu0 %1352
        %1354 = vrot.lane.b32.xlu0 %v563, 18
        %v1355 = vpop.permute.xlu0 %1354
        %1356 = vrot.lane.b32.xlu0 %v564, 18
        %v1357 = vpop.permute.xlu0 %1356
        %1358 = vrot.lane.b32.xlu0 %v565, 18
        %v1359 = vpop.permute.xlu0 %1358
        %1360 = vrot.lane.b32.xlu0 %v566, 18
        %v1361 = vpop.permute.xlu0 %1360
        %1362 = vrot.lane.b32.xlu0 %v567, 18
        %v1363 = vpop.permute.xlu0 %1362
        %1364 = vrot.lane.b32.xlu0 %v568, 18
        %v1365 = vpop.permute.xlu0 %1364
        %1366 = vrot.lane.b32.xlu0 %v569, 18
        %v1367 = vpop.permute.xlu0 %1366
        %1368 = vrot.lane.b32.xlu0 %v570, 18
        %v1369 = vpop.permute.xlu0 %1368
        %1370 = vrot.lane.b32.xlu0 %v571, 18
        %v1371 = vpop.permute.xlu0 %1370
        %1436 = vrot.lane.b32.xlu0 %v572, 21
        %v1437 = vpop.permute.xlu0 %1436
        %1438 = vrot.lane.b32.xlu0 %v573, 21
        %v1439 = vpop.permute.xlu0 %1438
        %1440 = vrot.lane.b32.xlu0 %v574, 21
        %v1441 = vpop.permute.xlu0 %1440
        %1442 = vrot.lane.b32.xlu0 %v575, 21
        %v1443 = vpop.permute.xlu0 %1442
        %1444 = vrot.lane.b32.xlu0 %v576, 21
        %v1445 = vpop.permute.xlu0 %1444
        %1446 = vrot.lane.b32.xlu0 %v577, 21
        %v1447 = vpop.permute.xlu0 %1446
        %1448 = vrot.lane.b32.xlu0 %v578, 21
        %v1449 = vpop.permute.xlu0 %1448
        %1450 = vrot.lane.b32.xlu0 %v579, 21
        %v1451 = vpop.permute.xlu0 %1450
        %1452 = vrot.lane.b32.xlu0 %v580, 21
        %v1453 = vpop.permute.xlu0 %1452
        %1454 = vrot.lane.b32.xlu0 %v581, 21
        %v1455 = vpop.permute.xlu0 %1454
        %1456 = vrot.lane.b32.xlu0 %v582, 21
        %v1457 = vpop.permute.xlu0 %1456
        %1458 = vrot.lane.b32.xlu0 %v583, 21
        %v1459 = vpop.permute.xlu0 %1458
        %1460 = vrot.lane.b32.xlu0 %v584, 21
        %v1461 = vpop.permute.xlu0 %1460
        %1462 = vrot.lane.b32.xlu0 %v585, 21
        %v1463 = vpop.permute.xlu0 %1462
        %1464 = vrot.lane.b32.xlu0 %v586, 21
        %v1465 = vpop.permute.xlu0 %1464
        %1466 = vrot.lane.b32.xlu0 %v587, 21
        %v1467 = vpop.permute.xlu0 %1466
        %1468 = vrot.lane.b32.xlu0 %v588, 21
        %v1469 = vpop.permute.xlu0 %1468
        %1470 = vrot.lane.b32.xlu0 %v589, 21
        %v1471 = vpop.permute.xlu0 %1470
        %1472 = vrot.lane.b32.xlu0 %v590, 21
        %v1473 = vpop.permute.xlu0 %1472
        %1474 = vrot.lane.b32.xlu0 %v591, 21
        %v1475 = vpop.permute.xlu0 %1474
        %1476 = vrot.lane.b32.xlu0 %v592, 21
        %v1477 = vpop.permute.xlu0 %1476
        %1478 = vrot.lane.b32.xlu0 %v593, 21
        %v1479 = vpop.permute.xlu0 %1478
        %1480 = vrot.lane.b32.xlu0 %v594, 21
        %v1481 = vpop.permute.xlu0 %1480
        %1482 = vrot.lane.b32.xlu0 %v595, 21
        %v1483 = vpop.permute.xlu0 %1482
        %1484 = vrot.lane.b32.xlu0 %v596, 21
        %v1485 = vpop.permute.xlu0 %1484
        %1486 = vrot.lane.b32.xlu0 %v597, 21
        %v1487 = vpop.permute.xlu0 %1486
        %1488 = vrot.lane.b32.xlu0 %v598, 21
        %v1489 = vpop.permute.xlu0 %1488
        %1490 = vrot.lane.b32.xlu0 %v599, 21
        %v1491 = vpop.permute.xlu0 %1490
        %1492 = vrot.lane.b32.xlu0 %v600, 21
        %v1493 = vpop.permute.xlu0 %1492
        %1494 = vrot.lane.b32.xlu0 %v601, 21
        %v1495 = vpop.permute.xlu0 %1494
        %1496 = vrot.lane.b32.xlu0 %v602, 21
        %v1497 = vpop.permute.xlu0 %1496
        %1498 = vrot.lane.b32.xlu0 %v603, 21
        %v1499 = vpop.permute.xlu0 %1498
        %1564 = vrot.lane.b32.xlu0 %v604, 24
        %v1565 = vpop.permute.xlu0 %1564
        %1566 = vrot.lane.b32.xlu0 %v605, 24
        %v1567 = vpop.permute.xlu0 %1566
        %1568 = vrot.lane.b32.xlu0 %v606, 24
        %v1569 = vpop.permute.xlu0 %1568
        %1570 = vrot.lane.b32.xlu0 %v607, 24
        %v1571 = vpop.permute.xlu0 %1570
        %1572 = vrot.lane.b32.xlu0 %v608, 24
        %v1573 = vpop.permute.xlu0 %1572
        %1574 = vrot.lane.b32.xlu0 %v609, 24
        %v1575 = vpop.permute.xlu0 %1574
        %1576 = vrot.lane.b32.xlu0 %v610, 24
        %v1577 = vpop.permute.xlu0 %1576
        %1578 = vrot.lane.b32.xlu0 %v611, 24
        %v1579 = vpop.permute.xlu0 %1578
        %1580 = vrot.lane.b32.xlu0 %v612, 24
        %v1581 = vpop.permute.xlu0 %1580
        %1582 = vrot.lane.b32.xlu0 %v613, 24
        %v1583 = vpop.permute.xlu0 %1582
        %1584 = vrot.lane.b32.xlu0 %v614, 24
        %v1585 = vpop.permute.xlu0 %1584
        %1586 = vrot.lane.b32.xlu0 %v615, 24
        %v1587 = vpop.permute.xlu0 %1586
        %1588 = vrot.lane.b32.xlu0 %v616, 24
        %v1589 = vpop.permute.xlu0 %1588
        %1590 = vrot.lane.b32.xlu0 %v617, 24
        %v1591 = vpop.permute.xlu0 %1590
        %1592 = vrot.lane.b32.xlu0 %v618, 24
        %v1593 = vpop.permute.xlu0 %1592
        %1594 = vrot.lane.b32.xlu0 %v619, 24
        %v1595 = vpop.permute.xlu0 %1594
        %1596 = vrot.lane.b32.xlu0 %v620, 24
        %v1597 = vpop.permute.xlu0 %1596
        %1598 = vrot.lane.b32.xlu0 %v621, 24
        %v1599 = vpop.permute.xlu0 %1598
        %1600 = vrot.lane.b32.xlu0 %v622, 24
        %v1601 = vpop.permute.xlu0 %1600
        %1602 = vrot.lane.b32.xlu0 %v623, 24
        %v1603 = vpop.permute.xlu0 %1602
        %1604 = vrot.lane.b32.xlu0 %v624, 24
        %v1605 = vpop.permute.xlu0 %1604
        %1606 = vrot.lane.b32.xlu0 %v625, 24
        %v1607 = vpop.permute.xlu0 %1606
        %1608 = vrot.lane.b32.xlu0 %v626, 24
        %v1609 = vpop.permute.xlu0 %1608
        %1610 = vrot.lane.b32.xlu0 %v627, 24
        %v1611 = vpop.permute.xlu0 %1610
        %1612 = vrot.lane.b32.xlu0 %v628, 24
        %v1613 = vpop.permute.xlu0 %1612
        %1614 = vrot.lane.b32.xlu0 %v629, 24
        %v1615 = vpop.permute.xlu0 %1614
        %1616 = vrot.lane.b32.xlu0 %v630, 24
        %v1617 = vpop.permute.xlu0 %1616
        %1618 = vrot.lane.b32.xlu0 %v631, 24
        %v1619 = vpop.permute.xlu0 %1618
        %1620 = vrot.lane.b32.xlu0 %v632, 24
        %v1621 = vpop.permute.xlu0 %1620
        %1622 = vrot.lane.b32.xlu0 %v633, 24
        %v1623 = vpop.permute.xlu0 %1622
        %1624 = vrot.lane.b32.xlu0 %v634, 24
        %v1625 = vpop.permute.xlu0 %1624
        %1626 = vrot.lane.b32.xlu0 %v635, 24
        %v1627 = vpop.permute.xlu0 %1626
        %v1660 = vsel %vm268, %v347, %v669
        %v1661 = vsel %vm268, %v348, %v671
        %v1662 = vsel %vm268, %v349, %v673
        %v1663 = vsel %vm268, %v350, %v675
        %v1664 = vsel %vm268, %v351, %v677
        %v1665 = vsel %vm268, %v352, %v679
        %v1666 = vsel %vm268, %v353, %v681
        %v1667 = vsel %vm268, %v354, %v683
        %v1668 = vsel %vm268, %v355, %v685
        %v1669 = vsel %vm268, %v356, %v687
        %v1670 = vsel %vm268, %v357, %v689
        %v1671 = vsel %vm268, %v358, %v691
        %v1672 = vsel %vm268, %v359, %v693
        %v1673 = vsel %vm268, %v360, %v695
        %v1674 = vsel %vm268, %v361, %v697
        %v1675 = vsel %vm268, %v362, %v699
        %v1676 = vsel %vm268, %v363, %v701
        %v1677 = vsel %vm268, %v364, %v703
        %v1678 = vsel %vm268, %v365, %v705
        %v1679 = vsel %vm268, %v366, %v707
        %v1680 = vsel %vm268, %v367, %v709
        %v1681 = vsel %vm268, %v368, %v711
        %v1682 = vsel %vm268, %v369, %v713
        %v1683 = vsel %vm268, %v370, %v715
        %v1684 = vsel %vm268, %v371, %v717
        %v1685 = vsel %vm268, %v372, %v719
        %v1686 = vsel %vm268, %v373, %v721
        %v1687 = vsel %vm268, %v374, %v723
        %v1688 = vsel %vm268, %v375, %v725
        %v1689 = vsel %vm268, %v376, %v727
        %v1690 = vsel %vm268, %v377, %v729
        %v1691 = vsel %vm268, %v378, %v731
        %vm1692 = vcmask 48128
        %v1693 = vsel %vm1692, %v1660, %v797
        %v1694 = vsel %vm1692, %v1661, %v799
        %v1695 = vsel %vm1692, %v1662, %v801
        %v1696 = vsel %vm1692, %v1663, %v803
        %v1697 = vsel %vm1692, %v1664, %v805
        %v1698 = vsel %vm1692, %v1665, %v807
        %v1699 = vsel %vm1692, %v1666, %v809
        %v1700 = vsel %vm1692, %v1667, %v811
        %v1701 = vsel %vm1692, %v1668, %v813
        %v1702 = vsel %vm1692, %v1669, %v815
        %v1703 = vsel %vm1692, %v1670, %v817
        %v1704 = vsel %vm1692, %v1671, %v819
        %v1705 = vsel %vm1692, %v1672, %v821
        %v1706 = vsel %vm1692, %v1673, %v823
        %v1707 = vsel %vm1692, %v1674, %v825
        %v1708 = vsel %vm1692, %v1675, %v827
        %v1709 = vsel %vm1692, %v1676, %v829
        %v1710 = vsel %vm1692, %v1677, %v831
        %v1711 = vsel %vm1692, %v1678, %v833
        %v1712 = vsel %vm1692, %v1679, %v835
        %v1713 = vsel %vm1692, %v1680, %v837
        %v1714 = vsel %vm1692, %v1681, %v839
        %v1715 = vsel %vm1692, %v1682, %v841
        %v1716 = vsel %vm1692, %v1683, %v843
        %v1717 = vsel %vm1692, %v1684, %v845
        %v1718 = vsel %vm1692, %v1685, %v847
        %v1719 = vsel %vm1692, %v1686, %v849
        %v1720 = vsel %vm1692, %v1687, %v851
        %v1721 = vsel %vm1692, %v1688, %v853
        %v1722 = vsel %vm1692, %v1689, %v855
        %v1723 = vsel %vm1692, %v1690, %v857
        %v1724 = vsel %vm1692, %v1691, %v859
        %vm1725 = vcmask 72704
        %v1726 = vsel %vm1725, %v1693, %v925
        %v1727 = vsel %vm1725, %v1694, %v927
        %v1728 = vsel %vm1725, %v1695, %v929
        %v1729 = vsel %vm1725, %v1696, %v931
        %v1730 = vsel %vm1725, %v1697, %v933
        %v1731 = vsel %vm1725, %v1698, %v935
        %v1732 = vsel %vm1725, %v1699, %v937
        %v1733 = vsel %vm1725, %v1700, %v939
        %v1734 = vsel %vm1725, %v1701, %v941
        %v1735 = vsel %vm1725, %v1702, %v943
        %v1736 = vsel %vm1725, %v1703, %v945
        %v1737 = vsel %vm1725, %v1704, %v947
        %v1738 = vsel %vm1725, %v1705, %v949
        %v1739 = vsel %vm1725, %v1706, %v951
        %v1740 = vsel %vm1725, %v1707, %v953
        %v1741 = vsel %vm1725, %v1708, %v955
        %v1742 = vsel %vm1725, %v1709, %v957
        %v1743 = vsel %vm1725, %v1710, %v959
        %v1744 = vsel %vm1725, %v1711, %v961
        %v1745 = vsel %vm1725, %v1712, %v963
        %v1746 = vsel %vm1725, %v1713, %v965
        %v1747 = vsel %vm1725, %v1714, %v967
        %v1748 = vsel %vm1725, %v1715, %v969
        %v1749 = vsel %vm1725, %v1716, %v971
        %v1750 = vsel %vm1725, %v1717, %v973
        %v1751 = vsel %vm1725, %v1718, %v975
        %v1752 = vsel %vm1725, %v1719, %v977
        %v1753 = vsel %vm1725, %v1720, %v979
        %v1754 = vsel %vm1725, %v1721, %v981
        %v1755 = vsel %vm1725, %v1722, %v983
        %v1756 = vsel %vm1725, %v1723, %v985
        %v1757 = vsel %vm1725, %v1724, %v987
        %vm1758 = vcmask 97280
        %v1759 = vsel %vm1758, %v1726, %v1053
        %v1760 = vsel %vm1758, %v1727, %v1055
        %v1761 = vsel %vm1758, %v1728, %v1057
        %v1762 = vsel %vm1758, %v1729, %v1059
        %v1763 = vsel %vm1758, %v1730, %v1061
        %v1764 = vsel %vm1758, %v1731, %v1063
        %v1765 = vsel %vm1758, %v1732, %v1065
        %v1766 = vsel %vm1758, %v1733, %v1067
        %v1767 = vsel %vm1758, %v1734, %v1069
        %v1768 = vsel %vm1758, %v1735, %v1071
        %v1769 = vsel %vm1758, %v1736, %v1073
        %v1770 = vsel %vm1758, %v1737, %v1075
        %v1771 = vsel %vm1758, %v1738, %v1077
        %v1772 = vsel %vm1758, %v1739, %v1079
        %v1773 = vsel %vm1758, %v1740, %v1081
        %v1774 = vsel %vm1758, %v1741, %v1083
        %v1775 = vsel %vm1758, %v1742, %v1085
        %v1776 = vsel %vm1758, %v1743, %v1087
        %v1777 = vsel %vm1758, %v1744, %v1089
        %v1778 = vsel %vm1758, %v1745, %v1091
        %v1779 = vsel %vm1758, %v1746, %v1093
        %v1780 = vsel %vm1758, %v1747, %v1095
        %v1781 = vsel %vm1758, %v1748, %v1097
        %v1782 = vsel %vm1758, %v1749, %v1099
        %v1783 = vsel %vm1758, %v1750, %v1101
        %v1784 = vsel %vm1758, %v1751, %v1103
        %v1785 = vsel %vm1758, %v1752, %v1105
        %v1786 = vsel %vm1758, %v1753, %v1107
        %v1787 = vsel %vm1758, %v1754, %v1109
        %v1788 = vsel %vm1758, %v1755, %v1111
        %v1789 = vsel %vm1758, %v1756, %v1113
        %v1790 = vsel %vm1758, %v1757, %v1115
        %vm1791 = vcmask 121856
        %v1792 = vsel %vm1791, %v1759, %v1181
        %v1793 = vsel %vm1791, %v1760, %v1183
        %v1794 = vsel %vm1791, %v1761, %v1185
        %v1795 = vsel %vm1791, %v1762, %v1187
        %v1796 = vsel %vm1791, %v1763, %v1189
        %v1797 = vsel %vm1791, %v1764, %v1191
        %v1798 = vsel %vm1791, %v1765, %v1193
        %v1799 = vsel %vm1791, %v1766, %v1195
        %v1800 = vsel %vm1791, %v1767, %v1197
        %v1801 = vsel %vm1791, %v1768, %v1199
        %v1802 = vsel %vm1791, %v1769, %v1201
        %v1803 = vsel %vm1791, %v1770, %v1203
        %v1804 = vsel %vm1791, %v1771, %v1205
        %v1805 = vsel %vm1791, %v1772, %v1207
        %v1806 = vsel %vm1791, %v1773, %v1209
        %v1807 = vsel %vm1791, %v1774, %v1211
        %v1808 = vsel %vm1791, %v1775, %v1213
        %v1809 = vsel %vm1791, %v1776, %v1215
        %v1810 = vsel %vm1791, %v1777, %v1217
        %v1811 = vsel %vm1791, %v1778, %v1219
        %v1812 = vsel %vm1791, %v1779, %v1221
        %v1813 = vsel %vm1791, %v1780, %v1223
        %v1814 = vsel %vm1791, %v1781, %v1225
        %v1815 = vsel %vm1791, %v1782, %v1227
        %v1816 = vsel %vm1791, %v1783, %v1229
        %v1817 = vsel %vm1791, %v1784, %v1231
        %v1818 = vsel %vm1791, %v1785, %v1233
        %v1819 = vsel %vm1791, %v1786, %v1235
        %v1820 = vsel %vm1791, %v1787, %v1237
        %v1821 = vsel %vm1791, %v1788, %v1239
        %v1822 = vsel %vm1791, %v1789, %v1241
        %v1823 = vsel %vm1791, %v1790, %v1243
        %vm1824 = vcmask 146432
        %v1825 = vsel %vm1824, %v1792, %v1309
        %v1826 = vsel %vm1824, %v1793, %v1311
        %v1827 = vsel %vm1824, %v1794, %v1313
        %v1828 = vsel %vm1824, %v1795, %v1315
        %v1829 = vsel %vm1824, %v1796, %v1317
        %v1830 = vsel %vm1824, %v1797, %v1319
        %v1831 = vsel %vm1824, %v1798, %v1321
        %v1832 = vsel %vm1824, %v1799, %v1323
        %v1833 = vsel %vm1824, %v1800, %v1325
        %v1834 = vsel %vm1824, %v1801, %v1327
        %v1835 = vsel %vm1824, %v1802, %v1329
        %v1836 = vsel %vm1824, %v1803, %v1331
        %v1837 = vsel %vm1824, %v1804, %v1333
        %v1838 = vsel %vm1824, %v1805, %v1335
        %v1839 = vsel %vm1824, %v1806, %v1337
        %v1840 = vsel %vm1824, %v1807, %v1339
        %v1841 = vsel %vm1824, %v1808, %v1341
        %v1842 = vsel %vm1824, %v1809, %v1343
        %v1843 = vsel %vm1824, %v1810, %v1345
        %v1844 = vsel %vm1824, %v1811, %v1347
        %v1845 = vsel %vm1824, %v1812, %v1349
        %v1846 = vsel %vm1824, %v1813, %v1351
        %v1847 = vsel %vm1824, %v1814, %v1353
        %v1848 = vsel %vm1824, %v1815, %v1355
        %v1849 = vsel %vm1824, %v1816, %v1357
        %v1850 = vsel %vm1824, %v1817, %v1359
        %v1851 = vsel %vm1824, %v1818, %v1361
        %v1852 = vsel %vm1824, %v1819, %v1363
        %v1853 = vsel %vm1824, %v1820, %v1365
        %v1854 = vsel %vm1824, %v1821, %v1367
        %v1855 = vsel %vm1824, %v1822, %v1369
        %v1856 = vsel %vm1824, %v1823, %v1371
        %vm1857 = vcmask 171008
        %v1858 = vsel %vm1857, %v1825, %v1437
        %v1859 = vsel %vm1857, %v1826, %v1439
        %v1860 = vsel %vm1857, %v1827, %v1441
        %v1861 = vsel %vm1857, %v1828, %v1443
        %v1862 = vsel %vm1857, %v1829, %v1445
        %v1863 = vsel %vm1857, %v1830, %v1447
        %v1864 = vsel %vm1857, %v1831, %v1449
        %v1865 = vsel %vm1857, %v1832, %v1451
        %v1866 = vsel %vm1857, %v1833, %v1453
        %v1867 = vsel %vm1857, %v1834, %v1455
        %v1868 = vsel %vm1857, %v1835, %v1457
        %v1869 = vsel %vm1857, %v1836, %v1459
        %v1870 = vsel %vm1857, %v1837, %v1461
        %v1871 = vsel %vm1857, %v1838, %v1463
        %v1872 = vsel %vm1857, %v1839, %v1465
        %v1873 = vsel %vm1857, %v1840, %v1467
        %v1874 = vsel %vm1857, %v1841, %v1469
        %v1875 = vsel %vm1857, %v1842, %v1471
        %v1876 = vsel %vm1857, %v1843, %v1473
        %v1877 = vsel %vm1857, %v1844, %v1475
        %v1878 = vsel %vm1857, %v1845, %v1477
        %v1879 = vsel %vm1857, %v1846, %v1479
        %v1880 = vsel %vm1857, %v1847, %v1481
        %v1881 = vsel %vm1857, %v1848, %v1483
        %v1882 = vsel %vm1857, %v1849, %v1485
        %v1883 = vsel %vm1857, %v1850, %v1487
        %v1884 = vsel %vm1857, %v1851, %v1489
        %v1885 = vsel %vm1857, %v1852, %v1491
        %v1886 = vsel %vm1857, %v1853, %v1493
        %v1887 = vsel %vm1857, %v1854, %v1495
        %v1888 = vsel %vm1857, %v1855, %v1497
        %v1889 = vsel %vm1857, %v1856, %v1499
        %vm1890 = vcmask 195584
        %v1891 = vsel %vm1890, %v1858, %v1565
        %v1892 = vsel %vm1890, %v1859, %v1567
        %v1893 = vsel %vm1890, %v1860, %v1569
        %v1894 = vsel %vm1890, %v1861, %v1571
        %v1895 = vsel %vm1890, %v1862, %v1573
        %v1896 = vsel %vm1890, %v1863, %v1575
        %v1897 = vsel %vm1890, %v1864, %v1577
        %v1898 = vsel %vm1890, %v1865, %v1579
        %v1899 = vsel %vm1890, %v1866, %v1581
        %v1900 = vsel %vm1890, %v1867, %v1583
        %v1901 = vsel %vm1890, %v1868, %v1585
        %v1902 = vsel %vm1890, %v1869, %v1587
        %v1903 = vsel %vm1890, %v1870, %v1589
        %v1904 = vsel %vm1890, %v1871, %v1591
        %v1905 = vsel %vm1890, %v1872, %v1593
        %v1906 = vsel %vm1890, %v1873, %v1595
        %v1907 = vsel %vm1890, %v1874, %v1597
        %v1908 = vsel %vm1890, %v1875, %v1599
        %v1909 = vsel %vm1890, %v1876, %v1601
        %v1910 = vsel %vm1890, %v1877, %v1603
        %v1911 = vsel %vm1890, %v1878, %v1605
        %v1912 = vsel %vm1890, %v1879, %v1607
        %v1913 = vsel %vm1890, %v1880, %v1609
        %v1914 = vsel %vm1890, %v1881, %v1611
        %v1915 = vsel %vm1890, %v1882, %v1613
        %v1916 = vsel %vm1890, %v1883, %v1615
        %v1917 = vsel %vm1890, %v1884, %v1617
        %v1918 = vsel %vm1890, %v1885, %v1619
        %v1919 = vsel %vm1890, %v1886, %v1621
        %v1920 = vsel %vm1890, %v1887, %v1623
        %v1921 = vsel %vm1890, %v1888, %v1625
        %v1922 = vsel %vm1890, %v1889, %v1627
        %v1923 = vld [vmem:[%s1] sm:$0xff]
        %v1924 = vld [vmem:[%s1 + $0x8] sm:$0xff]
        %v1925 = vld [vmem:[%s1 + $0x10] sm:$0xff]
        %v1926 = vld [vmem:[%s1 + $0x18] sm:$0x7]
        %vm1927 = vcmask 220160
        %v1929 = vsel %vm1927, %v1891, 0
        %v1932 = vsel %vm1927, %v1892, 0
        %v1935 = vsel %vm1927, %v1893, 0
        %v1938 = vsel %vm1927, %v1894, 0
        %v1941 = vsel %vm1927, %v1895, 0
        %v1944 = vsel %vm1927, %v1896, 0
        %v1947 = vsel %vm1927, %v1897, 0
        %v1950 = vsel %vm1927, %v1898, 0
        %v1953 = vsel %vm1927, %v1899, 0
        %v1956 = vsel %vm1927, %v1900, 0
        %v1959 = vsel %vm1927, %v1901, 0
        %v1962 = vsel %vm1927, %v1902, 0
        %v1965 = vsel %vm1927, %v1903, 0
        %v1968 = vsel %vm1927, %v1904, 0
        %v1971 = vsel %vm1927, %v1905, 0
        %v1974 = vsel %vm1927, %v1906, 0
        %v1977 = vsel %vm1927, %v1907, 0
        %v1980 = vsel %vm1927, %v1908, 0
        %v1983 = vsel %vm1927, %v1909, 0
        %v1986 = vsel %vm1927, %v1910, 0
        %v1989 = vsel %vm1927, %v1911, 0
        %v1992 = vsel %vm1927, %v1912, 0
        %v1995 = vsel %vm1927, %v1913, 0
        %v1998 = vsel %vm1927, %v1914, 0
        %v2001 = vsel %vm1927, %v1915, 0
        %v2004 = vsel %vm1927, %v1916, 0
        %v2007 = vsel %vm1927, %v1917, 0
        %v2010 = vsel %vm1927, %v1918, 0
        %v2013 = vsel %vm1927, %v1919, 0
        %v2016 = vsel %vm1927, %v1920, 0
        %v2019 = vsel %vm1927, %v1921, 0
        %v2022 = vsel %vm1927, %v1922, 0
        %vm2024 = vcmask 1042432
        %v2026 = vsel %vm2024, %v1926, 0
        %2028 = vmatpush.msra.mxu0 0.0
        %2029 = vmatpush.msra.mxu0 0.0
        %2030 = vmatpush.msra.mxu0 0.0
        %2031 = vmatpush.msra.mxu0 0.0
        %2032 = vmatpush.msra.mxu0 0.0
        %2033 = vmatpush.msra.mxu0 0.0
        %2034 = vmatpush.msra.mxu0 0.0
        %2035 = vmatpush.msra.mxu0 0.0
        %2036 = vmatpush.msra.mxu0 0.0
        %2037 = vmatpush.msra.mxu0 0.0
        %2038 = vmatpush.msra.mxu0 0.0
        %2039 = vmatpush.msra.mxu0 0.0
        %2040 = vmatpush.msra.mxu0 %v2026
        %2041 = vmatpush.msra.mxu0 %v1925
        %2042 = vmatpush.msra.mxu0 %v1924
        %2043 = vmatpush.msra.mxu0 %v1923
        %2044 = vmatmul.f32.gmra.mxu0 %v1929
        %v2045 = vpop.f32.mrf.mxu0
        %v2046 = vadd.f32 0.0, %v2045
        %2047 = vmatmul.f32.gmra.mxu0 %v1932
        %v2048 = vpop.f32.mrf.mxu0
        %v2049 = vadd.f32 0.0, %v2048
        %2050 = vmatmul.f32.gmra.mxu0 %v1935
        %v2051 = vpop.f32.mrf.mxu0
        %v2052 = vadd.f32 0.0, %v2051
        %2053 = vmatmul.f32.gmra.mxu0 %v1938
        %v2054 = vpop.f32.mrf.mxu0
        %v2055 = vadd.f32 0.0, %v2054
        %2056 = vmatmul.f32.gmra.mxu0 %v1941
        %v2057 = vpop.f32.mrf.mxu0
        %v2058 = vadd.f32 0.0, %v2057
        %2059 = vmatmul.f32.gmra.mxu0 %v1944
        %v2060 = vpop.f32.mrf.mxu0
        %v2061 = vadd.f32 0.0, %v2060
        %2062 = vmatmul.f32.gmra.mxu0 %v1947
        %v2063 = vpop.f32.mrf.mxu0
        %v2064 = vadd.f32 0.0, %v2063
        %2065 = vmatmul.f32.gmra.mxu0 %v1950
        %v2066 = vpop.f32.mrf.mxu0
        %v2067 = vadd.f32 0.0, %v2066
        %2068 = vmatmul.f32.gmra.mxu0 %v1953
        %v2069 = vpop.f32.mrf.mxu0
        %v2070 = vadd.f32 0.0, %v2069
        %2071 = vmatmul.f32.gmra.mxu0 %v1956
        %v2072 = vpop.f32.mrf.mxu0
        %v2073 = vadd.f32 0.0, %v2072
        %2074 = vmatmul.f32.gmra.mxu0 %v1959
        %v2075 = vpop.f32.mrf.mxu0
        %v2076 = vadd.f32 0.0, %v2075
        %2077 = vmatmul.f32.gmra.mxu0 %v1962
        %v2078 = vpop.f32.mrf.mxu0
        %v2079 = vadd.f32 0.0, %v2078
        %2080 = vmatmul.f32.gmra.mxu0 %v1965
        %v2081 = vpop.f32.mrf.mxu0
        %v2082 = vadd.f32 0.0, %v2081
        %2083 = vmatmul.f32.gmra.mxu0 %v1968
        %v2084 = vpop.f32.mrf.mxu0
        %v2085 = vadd.f32 0.0, %v2084
        %2086 = vmatmul.f32.gmra.mxu0 %v1971
        %v2087 = vpop.f32.mrf.mxu0
        %v2088 = vadd.f32 0.0, %v2087
        %2089 = vmatmul.f32.gmra.mxu0 %v1974
        %v2090 = vpop.f32.mrf.mxu0
        %v2091 = vadd.f32 0.0, %v2090
        %2092 = vmatmul.f32.gmra.mxu0 %v1977
        %v2093 = vpop.f32.mrf.mxu0
        %v2094 = vadd.f32 0.0, %v2093
        %2095 = vmatmul.f32.gmra.mxu0 %v1980
        %v2096 = vpop.f32.mrf.mxu0
        %v2097 = vadd.f32 0.0, %v2096
        %2098 = vmatmul.f32.gmra.mxu0 %v1983
        %v2099 = vpop.f32.mrf.mxu0
        %v2100 = vadd.f32 0.0, %v2099
        %2101 = vmatmul.f32.gmra.mxu0 %v1986
        %v2102 = vpop.f32.mrf.mxu0
        %v2103 = vadd.f32 0.0, %v2102
        %2104 = vmatmul.f32.gmra.mxu0 %v1989
        %v2105 = vpop.f32.mrf.mxu0
        %v2106 = vadd.f32 0.0, %v2105
        %2107 = vmatmul.f32.gmra.mxu0 %v1992
        %v2108 = vpop.f32.mrf.mxu0
        %v2109 = vadd.f32 0.0, %v2108
        %2110 = vmatmul.f32.gmra.mxu0 %v1995
        %v2111 = vpop.f32.mrf.mxu0
        %v2112 = vadd.f32 0.0, %v2111
        %2113 = vmatmul.f32.gmra.mxu0 %v1998
        %v2114 = vpop.f32.mrf.mxu0
        %v2115 = vadd.f32 0.0, %v2114
        %2116 = vmatmul.f32.gmra.mxu0 %v2001
        %v2117 = vpop.f32.mrf.mxu0
        %v2118 = vadd.f32 0.0, %v2117
        %2119 = vmatmul.f32.gmra.mxu0 %v2004
        %v2120 = vpop.f32.mrf.mxu0
        %v2121 = vadd.f32 0.0, %v2120
        %2122 = vmatmul.f32.gmra.mxu0 %v2007
        %v2123 = vpop.f32.mrf.mxu0
        %v2124 = vadd.f32 0.0, %v2123
        %2125 = vmatmul.f32.gmra.mxu0 %v2010
        %v2126 = vpop.f32.mrf.mxu0
        %v2127 = vadd.f32 0.0, %v2126
        %2128 = vmatmul.f32.gmra.mxu0 %v2013
        %v2129 = vpop.f32.mrf.mxu0
        %v2130 = vadd.f32 0.0, %v2129
        %2131 = vmatmul.f32.gmra.mxu0 %v2016
        %v2132 = vpop.f32.mrf.mxu0
        %v2133 = vadd.f32 0.0, %v2132
        %2134 = vmatmul.f32.gmra.mxu0 %v2019
        %v2135 = vpop.f32.mrf.mxu0
        %v2136 = vadd.f32 0.0, %v2135
        %2137 = vmatmul.f32.gmra.mxu0 %v2022
        %v2138 = vpop.f32.mrf.mxu0
        %v2139 = vadd.f32 0.0, %v2138
        %2140 = vdwg.mxu0
        %vm2141 = vcmask 261120
        %v2142 = vsel %vm2141, %v2046, 0.0
        %v2143 = vsel %vm2141, %v2049, 0.0
        %v2144 = vadd.f32 %v2142, %v2143
        %v2145 = vsel %vm2141, %v2052, 0.0
        %v2146 = vadd.f32 %v2144, %v2145
        %v2147 = vsel %vm2141, %v2055, 0.0
        %v2148 = vadd.f32 %v2146, %v2147
        %v2149 = vsel %vm2141, %v2058, 0.0
        %v2150 = vadd.f32 %v2148, %v2149
        %v2151 = vsel %vm2141, %v2061, 0.0
        %v2152 = vadd.f32 %v2150, %v2151
        %v2153 = vsel %vm2141, %v2064, 0.0
        %v2154 = vadd.f32 %v2152, %v2153
        %v2155 = vsel %vm2141, %v2067, 0.0
        %v2156 = vadd.f32 %v2154, %v2155
        %v2157 = vsel %vm2141, %v2070, 0.0
        %v2158 = vadd.f32 %v2156, %v2157
        %v2159 = vsel %vm2141, %v2073, 0.0
        %v2160 = vadd.f32 %v2158, %v2159
        %v2161 = vsel %vm2141, %v2076, 0.0
        %v2162 = vadd.f32 %v2160, %v2161
        %v2163 = vsel %vm2141, %v2079, 0.0
        %v2164 = vadd.f32 %v2162, %v2163
        %v2165 = vsel %vm2141, %v2082, 0.0
        %v2166 = vadd.f32 %v2164, %v2165
        %v2167 = vsel %vm2141, %v2085, 0.0
        %v2168 = vadd.f32 %v2166, %v2167
        %v2169 = vsel %vm2141, %v2088, 0.0
        %v2170 = vadd.f32 %v2168, %v2169
        %v2171 = vsel %vm2141, %v2091, 0.0
        %v2172 = vadd.f32 %v2170, %v2171
        %v2173 = vsel %vm2141, %v2094, 0.0
        %v2174 = vadd.f32 %v2172, %v2173
        %v2175 = vsel %vm2141, %v2097, 0.0
        %v2176 = vadd.f32 %v2174, %v2175
        %v2177 = vsel %vm2141, %v2100, 0.0
        %v2178 = vadd.f32 %v2176, %v2177
        %v2179 = vsel %vm2141, %v2103, 0.0
        %v2180 = vadd.f32 %v2178, %v2179
        %v2181 = vsel %vm2141, %v2106, 0.0
        %v2182 = vadd.f32 %v2180, %v2181
        %v2183 = vsel %vm2141, %v2109, 0.0
        %v2184 = vadd.f32 %v2182, %v2183
        %v2185 = vsel %vm2141, %v2112, 0.0
        %v2186 = vadd.f32 %v2184, %v2185
        %v2187 = vsel %vm2141, %v2115, 0.0
        %v2188 = vadd.f32 %v2186, %v2187
        %v2189 = vsel %vm2141, %v2118, 0.0
        %v2190 = vadd.f32 %v2188, %v2189
        %v2191 = vsel %vm2141, %v2121, 0.0
        %v2192 = vadd.f32 %v2190, %v2191
        %v2193 = vsel %vm2141, %v2124, 0.0
        %v2194 = vadd.f32 %v2192, %v2193
        %v2195 = vsel %vm2141, %v2127, 0.0
        %v2196 = vadd.f32 %v2194, %v2195
        %v2197 = vsel %vm2141, %v2130, 0.0
        %v2198 = vadd.f32 %v2196, %v2197
        %v2199 = vsel %vm2141, %v2133, 0.0
        %v2200 = vadd.f32 %v2198, %v2199
        %v2201 = vsel %vm2141, %v2136, 0.0
        %v2202 = vadd.f32 %v2200, %v2201
        %v2203 = vsel %vm2141, %v2139, 0.0
        %v2204 = vadd.f32 %v2202, %v2203
        %v2205 = vrot.slane %v2204, 4
        %v2206 = vadd.f32 %v2204, %v2205
        %v2207 = vrot.slane %v2206, 2
        %v2208 = vadd.f32 %v2206, %v2207
        %v2209 = vrot.slane %v2208, 1
        %v2210 = vadd.f32 %v2208, %v2209
        %v2211 = vrcp.pop 256.0
        %v2212 = vmul.f32 256.0, %v2211
        %v2213 = vsub.f32 1.0, %v2212
        %v2214 = vmul.f32 %v2211, %v2213
        %v2215 = vadd.f32 %v2211, %v2214
        %vm2216 = vweird.f32 %v2211
        %v2217 = vsel %vm2216, %v2211, %v2215
        %v2218 = vmul.f32 %v2210, %v2217
        %v2219 = vsub.f32 %v2046, %v2218
        %v2220 = vsub.f32 %v2049, %v2218
        %v2221 = vsub.f32 %v2052, %v2218
        %v2222 = vsub.f32 %v2055, %v2218
        %v2223 = vsub.f32 %v2058, %v2218
        %v2224 = vsub.f32 %v2061, %v2218
        %v2225 = vsub.f32 %v2064, %v2218
        %v2226 = vsub.f32 %v2067, %v2218
        %v2227 = vsub.f32 %v2070, %v2218
        %v2228 = vsub.f32 %v2073, %v2218
        %v2229 = vsub.f32 %v2076, %v2218
        %v2230 = vsub.f32 %v2079, %v2218
        %v2231 = vsub.f32 %v2082, %v2218
        %v2232 = vsub.f32 %v2085, %v2218
        %v2233 = vsub.f32 %v2088, %v2218
        %v2234 = vsub.f32 %v2091, %v2218
        %v2235 = vsub.f32 %v2094, %v2218
        %v2236 = vsub.f32 %v2097, %v2218
        %v2237 = vsub.f32 %v2100, %v2218
        %v2238 = vsub.f32 %v2103, %v2218
        %v2239 = vsub.f32 %v2106, %v2218
        %v2240 = vsub.f32 %v2109, %v2218
        %v2241 = vsub.f32 %v2112, %v2218
        %v2242 = vsub.f32 %v2115, %v2218
        %v2243 = vsub.f32 %v2118, %v2218
        %v2244 = vsub.f32 %v2121, %v2218
        %v2245 = vsub.f32 %v2124, %v2218
        %v2246 = vsub.f32 %v2127, %v2218
        %v2247 = vsub.f32 %v2130, %v2218
        %v2248 = vsub.f32 %v2133, %v2218
        %v2249 = vsub.f32 %v2136, %v2218
        %v2250 = vsub.f32 %v2139, %v2218
        %v2251 = vmul.f32 %v2219, %v2219
        %v2252 = vmul.f32 %v2220, %v2220
        %v2253 = vmul.f32 %v2221, %v2221
        %v2254 = vmul.f32 %v2222, %v2222
        %v2255 = vmul.f32 %v2223, %v2223
        %v2256 = vmul.f32 %v2224, %v2224
        %v2257 = vmul.f32 %v2225, %v2225
        %v2258 = vmul.f32 %v2226, %v2226
        %v2259 = vmul.f32 %v2227, %v2227
        %v2260 = vmul.f32 %v2228, %v2228
        %v2261 = vmul.f32 %v2229, %v2229
        %v2262 = vmul.f32 %v2230, %v2230
        %v2263 = vmul.f32 %v2231, %v2231
        %v2264 = vmul.f32 %v2232, %v2232
        %v2265 = vmul.f32 %v2233, %v2233
        %v2266 = vmul.f32 %v2234, %v2234
        %v2267 = vmul.f32 %v2235, %v2235
        %v2268 = vmul.f32 %v2236, %v2236
        %v2269 = vmul.f32 %v2237, %v2237
        %v2270 = vmul.f32 %v2238, %v2238
        %v2271 = vmul.f32 %v2239, %v2239
        %v2272 = vmul.f32 %v2240, %v2240
        %v2273 = vmul.f32 %v2241, %v2241
        %v2274 = vmul.f32 %v2242, %v2242
        %v2275 = vmul.f32 %v2243, %v2243
        %v2276 = vmul.f32 %v2244, %v2244
        %v2277 = vmul.f32 %v2245, %v2245
        %v2278 = vmul.f32 %v2246, %v2246
        %v2279 = vmul.f32 %v2247, %v2247
        %v2280 = vmul.f32 %v2248, %v2248
        %v2281 = vmul.f32 %v2249, %v2249
        %v2282 = vmul.f32 %v2250, %v2250
        %v2283 = vsel %vm2141, %v2251, 0.0
        %v2284 = vsel %vm2141, %v2252, 0.0
        %v2285 = vadd.f32 %v2283, %v2284
        %v2286 = vsel %vm2141, %v2253, 0.0
        %v2287 = vadd.f32 %v2285, %v2286
        %v2288 = vsel %vm2141, %v2254, 0.0
        %v2289 = vadd.f32 %v2287, %v2288
        %v2290 = vsel %vm2141, %v2255, 0.0
        %v2291 = vadd.f32 %v2289, %v2290
        %v2292 = vsel %vm2141, %v2256, 0.0
        %v2293 = vadd.f32 %v2291, %v2292
        %v2294 = vsel %vm2141, %v2257, 0.0
        %v2295 = vadd.f32 %v2293, %v2294
        %v2296 = vsel %vm2141, %v2258, 0.0
        %v2297 = vadd.f32 %v2295, %v2296
        %v2298 = vsel %vm2141, %v2259, 0.0
        %v2299 = vadd.f32 %v2297, %v2298
        %v2300 = vsel %vm2141, %v2260, 0.0
        %v2301 = vadd.f32 %v2299, %v2300
        %v2302 = vsel %vm2141, %v2261, 0.0
        %v2303 = vadd.f32 %v2301, %v2302
        %v2304 = vsel %vm2141, %v2262, 0.0
        %v2305 = vadd.f32 %v2303, %v2304
        %v2306 = vsel %vm2141, %v2263, 0.0
        %v2307 = vadd.f32 %v2305, %v2306
        %v2308 = vsel %vm2141, %v2264, 0.0
        %v2309 = vadd.f32 %v2307, %v2308
        %v2310 = vsel %vm2141, %v2265, 0.0
        %v2311 = vadd.f32 %v2309, %v2310
        %v2312 = vsel %vm2141, %v2266, 0.0
        %v2313 = vadd.f32 %v2311, %v2312
        %v2314 = vsel %vm2141, %v2267, 0.0
        %v2315 = vadd.f32 %v2313, %v2314
        %v2316 = vsel %vm2141, %v2268, 0.0
        %v2317 = vadd.f32 %v2315, %v2316
        %v2318 = vsel %vm2141, %v2269, 0.0
        %v2319 = vadd.f32 %v2317, %v2318
        %v2320 = vsel %vm2141, %v2270, 0.0
        %v2321 = vadd.f32 %v2319, %v2320
        %v2322 = vsel %vm2141, %v2271, 0.0
        %v2323 = vadd.f32 %v2321, %v2322
        %v2324 = vsel %vm2141, %v2272, 0.0
        %v2325 = vadd.f32 %v2323, %v2324
        %v2326 = vsel %vm2141, %v2273, 0.0
        %v2327 = vadd.f32 %v2325, %v2326
        %v2328 = vsel %vm2141, %v2274, 0.0
        %v2329 = vadd.f32 %v2327, %v2328
        %v2330 = vsel %vm2141, %v2275, 0.0
        %v2331 = vadd.f32 %v2329, %v2330
        %v2332 = vsel %vm2141, %v2276, 0.0
        %v2333 = vadd.f32 %v2331, %v2332
        %v2334 = vsel %vm2141, %v2277, 0.0
        %v2335 = vadd.f32 %v2333, %v2334
        %v2336 = vsel %vm2141, %v2278, 0.0
        %v2337 = vadd.f32 %v2335, %v2336
        %v2338 = vsel %vm2141, %v2279, 0.0
        %v2339 = vadd.f32 %v2337, %v2338
        %v2340 = vsel %vm2141, %v2280, 0.0
        %v2341 = vadd.f32 %v2339, %v2340
        %v2342 = vsel %vm2141, %v2281, 0.0
        %v2343 = vadd.f32 %v2341, %v2342
        %v2344 = vsel %vm2141, %v2282, 0.0
        %v2345 = vadd.f32 %v2343, %v2344
        %v2346 = vrot.slane %v2345, 4
        %v2347 = vadd.f32 %v2345, %v2346
        %v2348 = vrot.slane %v2347, 2
        %v2349 = vadd.f32 %v2347, %v2348
        %v2350 = vrot.slane %v2349, 1
        %v2351 = vadd.f32 %v2349, %v2350
        %v2352 = vmul.f32 %v2351, %v2217
        %v2353 = vadd.f32 %v2352, 1e-05
        %v2354 = vrsqrt.pop %v2353
        %v2355 = vmul.f32 %v2354, %v2353
        %v2356 = vmul.f32 %v2355, %v2354
        %v2357 = vmul.f32 0.5, %v2356
        %v2358 = vsub.f32 1.5, %v2357
        %v2359 = vmul.f32 %v2354, %v2358
        %vm2360 = vweird.f32 %v2353
        %vm2361 = vweird.f32 %v2354
        %vm2362 = vmor %vm2360, %vm2361
        %v2363 = vsel %vm2362, %v2354, %v2359
        %v2364 = vmul.f32 %v2219, %v2363
        %v2365 = vmul.f32 %v2220, %v2363
        %v2366 = vmul.f32 %v2221, %v2363
        %v2367 = vmul.f32 %v2222, %v2363
        %v2368 = vmul.f32 %v2223, %v2363
        %v2369 = vmul.f32 %v2224, %v2363
        %v2370 = vmul.f32 %v2225, %v2363
        %v2371 = vmul.f32 %v2226, %v2363
        %v2372 = vmul.f32 %v2227, %v2363
        %v2373 = vmul.f32 %v2228, %v2363
        %v2374 = vmul.f32 %v2229, %v2363
        %v2375 = vmul.f32 %v2230, %v2363
        %v2376 = vmul.f32 %v2231, %v2363
        %v2377 = vmul.f32 %v2232, %v2363
        %v2378 = vmul.f32 %v2233, %v2363
        %v2379 = vmul.f32 %v2234, %v2363
        %v2380 = vmul.f32 %v2235, %v2363
        %v2381 = vmul.f32 %v2236, %v2363
        %v2382 = vmul.f32 %v2237, %v2363
        %v2383 = vmul.f32 %v2238, %v2363
        %v2384 = vmul.f32 %v2239, %v2363
        %v2385 = vmul.f32 %v2240, %v2363
        %v2386 = vmul.f32 %v2241, %v2363
        %v2387 = vmul.f32 %v2242, %v2363
        %v2388 = vmul.f32 %v2243, %v2363
        %v2389 = vmul.f32 %v2244, %v2363
        %v2390 = vmul.f32 %v2245, %v2363
        %v2391 = vmul.f32 %v2246, %v2363
        %v2392 = vmul.f32 %v2247, %v2363
        %v2393 = vmul.f32 %v2248, %v2363
        %v2394 = vmul.f32 %v2249, %v2363
        %v2395 = vmul.f32 %v2250, %v2363
        %v2396 = vmax.f32 %v2364, 0.0
        %v2397 = vmax.f32 %v2365, 0.0
        %v2398 = vmax.f32 %v2366, 0.0
        %v2399 = vmax.f32 %v2367, 0.0
        %v2400 = vmax.f32 %v2368, 0.0
        %v2401 = vmax.f32 %v2369, 0.0
        %v2402 = vmax.f32 %v2370, 0.0
        %v2403 = vmax.f32 %v2371, 0.0
        %v2404 = vmax.f32 %v2372, 0.0
        %v2405 = vmax.f32 %v2373, 0.0
        %v2406 = vmax.f32 %v2374, 0.0
        %v2407 = vmax.f32 %v2375, 0.0
        %v2408 = vmax.f32 %v2376, 0.0
        %v2409 = vmax.f32 %v2377, 0.0
        %v2410 = vmax.f32 %v2378, 0.0
        %v2411 = vmax.f32 %v2379, 0.0
        %v2412 = vmax.f32 %v2380, 0.0
        %v2413 = vmax.f32 %v2381, 0.0
        %v2414 = vmax.f32 %v2382, 0.0
        %v2415 = vmax.f32 %v2383, 0.0
        %v2416 = vmax.f32 %v2384, 0.0
        %v2417 = vmax.f32 %v2385, 0.0
        %v2418 = vmax.f32 %v2386, 0.0
        %v2419 = vmax.f32 %v2387, 0.0
        %v2420 = vmax.f32 %v2388, 0.0
        %v2421 = vmax.f32 %v2389, 0.0
        %v2422 = vmax.f32 %v2390, 0.0
        %v2423 = vmax.f32 %v2391, 0.0
        %v2424 = vmax.f32 %v2392, 0.0
        %v2425 = vmax.f32 %v2393, 0.0
        %v2426 = vmax.f32 %v2394, 0.0
        %v2427 = vmax.f32 %v2395, 0.0
        %v2428 = vld [vmem:[%s3] sm:$0x1]
        %v2430 = vperm.slane %v2428, 0
        %2431 = vrot.lane.b32.xlu0 %v2430, 32
        %v2432 = vpop.permute.xlu0 %2431
        %v2434 = vadd.f32 %v2046, %v2432
        %v2435 = vadd.f32 %v2049, %v2432
        %v2436 = vadd.f32 %v2052, %v2432
        %v2437 = vadd.f32 %v2055, %v2432
        %v2438 = vadd.f32 %v2058, %v2432
        %v2439 = vadd.f32 %v2061, %v2432
        %v2440 = vadd.f32 %v2064, %v2432
        %v2441 = vadd.f32 %v2067, %v2432
        %v2442 = vadd.f32 %v2070, %v2432
        %v2443 = vadd.f32 %v2073, %v2432
        %v2444 = vadd.f32 %v2076, %v2432
        %v2445 = vadd.f32 %v2079, %v2432
        %v2446 = vadd.f32 %v2082, %v2432
        %v2447 = vadd.f32 %v2085, %v2432
        %v2448 = vadd.f32 %v2088, %v2432
        %v2449 = vadd.f32 %v2091, %v2432
        %v2450 = vadd.f32 %v2094, %v2432
        %v2451 = vadd.f32 %v2097, %v2432
        %v2452 = vadd.f32 %v2100, %v2432
        %v2453 = vadd.f32 %v2103, %v2432
        %v2454 = vadd.f32 %v2106, %v2432
        %v2455 = vadd.f32 %v2109, %v2432
        %v2456 = vadd.f32 %v2112, %v2432
        %v2457 = vadd.f32 %v2115, %v2432
        %v2458 = vadd.f32 %v2118, %v2432
        %v2459 = vadd.f32 %v2121, %v2432
        %v2460 = vadd.f32 %v2124, %v2432
        %v2461 = vadd.f32 %v2127, %v2432
        %v2462 = vadd.f32 %v2130, %v2432
        %v2463 = vadd.f32 %v2133, %v2432
        %v2464 = vadd.f32 %v2136, %v2432
        %v2465 = vadd.f32 %v2139, %v2432
        %vm2466 = vcmask 257024
        %2467 = vst.msk [vmem:[#allocation3] sm:$0xf] %vm2466, 0
        %2468 = vst.msk [vmem:[#allocation3 + $0x4] sm:$0xf] %vm2466, 0
        %vm2469 = vcmask 253952
        %2470 = vst.msk [vmem:[#allocation3 + $0x8] sm:$0x1] %vm2469, 0
        %s2471 = scalar_lea.vmem [#allocation3], 204
        %2472 = vst.msk [vmem:[%s2471] sm:$0xf] %vm2466, 0
        %2473 = vst.msk [vmem:[%s2471 + $0x4] sm:$0xf] %vm2466, 0
        %2474 = vst.msk [vmem:[%s2471 + $0x8] sm:$0x1] %vm2469, 0
        %vm2475 = vcmask 253952
        %vm2476 = vsmask.f32 256
        %vm2477 = vmand %vm2475, %vm2476
        %v2478 = vld [vmem:[#allocation3] sm:$0x1]
        %v2479 = vsel %vm2477, 0, %v2478
        %2480 = vst [vmem:[#allocation3] sm:$0x1] %v2479
        %v2481 = vld [vmem:[#allocation3 + $0xc] sm:$0x1]
        %v2482 = vsel %vm2477, 0, %v2481
        %2483 = vst [vmem:[#allocation3 + $0xc] sm:$0x1] %v2482
        %v2484 = vld [vmem:[#allocation3 + $0x18] sm:$0x1]
        %v2485 = vsel %vm2477, 0, %v2484
        %2486 = vst [vmem:[#allocation3 + $0x18] sm:$0x1] %v2485
        %v2487 = vld [vmem:[#allocation3 + $0x24] sm:$0x1]
        %v2488 = vsel %vm2477, 0, %v2487
        %2489 = vst [vmem:[#allocation3 + $0x24] sm:$0x1] %v2488
        %v2490 = vld [vmem:[#allocation3 + $0x30] sm:$0x1]
        %v2491 = vsel %vm2477, 0, %v2490
        %2492 = vst [vmem:[#allocation3 + $0x30] sm:$0x1] %v2491
        %v2493 = vld [vmem:[#allocation3 + $0x3c] sm:$0x1]
        %v2494 = vsel %vm2477, 0, %v2493
        %2495 = vst [vmem:[#allocation3 + $0x3c] sm:$0x1] %v2494
        %v2496 = vld [vmem:[#allocation3 + $0x48] sm:$0x1]
        %v2497 = vsel %vm2477, 0, %v2496
        %2498 = vst [vmem:[#allocation3 + $0x48] sm:$0x1] %v2497
        %v2499 = vld [vmem:[#allocation3 + $0x54] sm:$0x1]
        %v2500 = vsel %vm2477, 0, %v2499
        %2501 = vst [vmem:[#allocation3 + $0x54] sm:$0x1] %v2500
        %v2502 = vld [vmem:[#allocation3 + $0x60] sm:$0x1]
        %v2503 = vsel %vm2477, 0, %v2502
        %2504 = vst [vmem:[#allocation3 + $0x60] sm:$0x1] %v2503
        %v2505 = vld [vmem:[#allocation3 + $0x6c] sm:$0x1]
        %v2506 = vsel %vm2477, 0, %v2505
        %2507 = vst [vmem:[#allocation3 + $0x6c] sm:$0x1] %v2506
        %v2508 = vld [vmem:[#allocation3 + $0x78] sm:$0x1]
        %v2509 = vsel %vm2477, 0, %v2508
        %2510 = vst [vmem:[#allocation3 + $0x78] sm:$0x1] %v2509
        %v2511 = vld [vmem:[#allocation3 + $0x84] sm:$0x1]
        %v2512 = vsel %vm2477, 0, %v2511
        %2513 = vst [vmem:[#allocation3 + $0x84] sm:$0x1] %v2512
        %v2514 = vld [vmem:[#allocation3 + $0x90] sm:$0x1]
        %v2515 = vsel %vm2477, 0, %v2514
        %2516 = vst [vmem:[#allocation3 + $0x90] sm:$0x1] %v2515
        %v2517 = vld [vmem:[#allocation3 + $0x9c] sm:$0x1]
        %v2518 = vsel %vm2477, 0, %v2517
        %2519 = vst [vmem:[#allocation3 + $0x9c] sm:$0x1] %v2518
        %v2520 = vld [vmem:[#allocation3 + $0xa8] sm:$0x1]
        %v2521 = vsel %vm2477, 0, %v2520
        %2522 = vst [vmem:[#allocation3 + $0xa8] sm:$0x1] %v2521
        %v2523 = vld [vmem:[#allocation3 + $0xb4] sm:$0x1]
        %v2524 = vsel %vm2477, 0, %v2523
        %2525 = vst [vmem:[#allocation3 + $0xb4] sm:$0x1] %v2524
        %v2526 = vld [vmem:[#allocation3 + $0xc0] sm:$0x1]
        %v2527 = vsel %vm2477, 0, %v2526
        %2528 = vst [vmem:[#allocation3 + $0xc0] sm:$0x1] %v2527
        %v2529 = vld [vmem:[#allocation3 + $0xcc] sm:$0x1]
        %v2530 = vsel %vm2477, 0, %v2529
        %2531 = vst [vmem:[#allocation3 + $0xcc] sm:$0x1] %v2530
        %vm2532 = vsmask.f32 7938
        %vm2533 = vmand %vm2475, %vm2532
        %v2534 = vld [vmem:[#allocation3 + $0x8] sm:$0x1]
        %v2535 = vsel %vm2533, 0, %v2534
        %2536 = vst [vmem:[#allocation3 + $0x8] sm:$0x1] %v2535
        %v2537 = vld [vmem:[#allocation3 + $0x14] sm:$0x1]
        %v2538 = vsel %vm2533, 0, %v2537
        %2539 = vst [vmem:[#allocation3 + $0x14] sm:$0x1] %v2538
        %v2540 = vld [vmem:[#allocation3 + $0x20] sm:$0x1]
        %v2541 = vsel %vm2533, 0, %v2540
        %2542 = vst [vmem:[#allocation3 + $0x20] sm:$0x1] %v2541
        %v2543 = vld [vmem:[#allocation3 + $0x2c] sm:$0x1]
        %v2544 = vsel %vm2533, 0, %v2543
        %2545 = vst [vmem:[#allocation3 + $0x2c] sm:$0x1] %v2544
        %v2546 = vld [vmem:[#allocation3 + $0x38] sm:$0x1]
        %v2547 = vsel %vm2533, 0, %v2546
        %2548 = vst [vmem:[#allocation3 + $0x38] sm:$0x1] %v2547
        %v2549 = vld [vmem:[#allocation3 + $0x44] sm:$0x1]
        %v2550 = vsel %vm2533, 0, %v2549
        %2551 = vst [vmem:[#allocation3 + $0x44] sm:$0x1] %v2550
        %v2552 = vld [vmem:[#allocation3 + $0x50] sm:$0x1]
        %v2553 = vsel %vm2533, 0, %v2552
        %2554 = vst [vmem:[#allocation3 + $0x50] sm:$0x1] %v2553
        %v2555 = vld [vmem:[#allocation3 + $0x5c] sm:$0x1]
        %v2556 = vsel %vm2533, 0, %v2555
        %2557 = vst [vmem:[#allocation3 + $0x5c] sm:$0x1] %v2556
        %v2558 = vld [vmem:[#allocation3 + $0x68] sm:$0x1]
        %v2559 = vsel %vm2533, 0, %v2558
        %2560 = vst [vmem:[#allocation3 + $0x68] sm:$0x1] %v2559
        %v2561 = vld [vmem:[#allocation3 + $0x74] sm:$0x1]
        %v2562 = vsel %vm2533, 0, %v2561
        %2563 = vst [vmem:[#allocation3 + $0x74] sm:$0x1] %v2562
        %v2564 = vld [vmem:[#allocation3 + $0x80] sm:$0x1]
        %v2565 = vsel %vm2533, 0, %v2564
        %2566 = vst [vmem:[#allocation3 + $0x80] sm:$0x1] %v2565
        %v2567 = vld [vmem:[#allocation3 + $0x8c] sm:$0x1]
        %v2568 = vsel %vm2533, 0, %v2567
        %2569 = vst [vmem:[#allocation3 + $0x8c] sm:$0x1] %v2568
        %v2570 = vld [vmem:[#allocation3 + $0x98] sm:$0x1]
        %v2571 = vsel %vm2533, 0, %v2570
        %2572 = vst [vmem:[#allocation3 + $0x98] sm:$0x1] %v2571
        %v2573 = vld [vmem:[#allocation3 + $0xa4] sm:$0x1]
        %v2574 = vsel %vm2533, 0, %v2573
        %2575 = vst [vmem:[#allocation3 + $0xa4] sm:$0x1] %v2574
        %v2576 = vld [vmem:[#allocation3 + $0xb0] sm:$0x1]
        %v2577 = vsel %vm2533, 0, %v2576
        %2578 = vst [vmem:[#allocation3 + $0xb0] sm:$0x1] %v2577
        %v2579 = vld [vmem:[#allocation3 + $0xbc] sm:$0x1]
        %v2580 = vsel %vm2533, 0, %v2579
        %2581 = vst [vmem:[#allocation3 + $0xbc] sm:$0x1] %v2580
        %v2582 = vld [vmem:[#allocation3 + $0xc8] sm:$0x1]
        %v2583 = vsel %vm2533, 0, %v2582
        %2584 = vst [vmem:[#allocation3 + $0xc8] sm:$0x1] %v2583
        %v2585 = vld [vmem:[#allocation3 + $0xd4] sm:$0x1]
        %v2586 = vsel %vm2533, 0, %v2585
        %2587 = vst [vmem:[#allocation3 + $0xd4] sm:$0x1] %v2586
        %v2588 = vpack.c.bf16 %v2396, %v2396
        %v2589 = vpack.c.bf16 %v2397, %v2397
        %v2590 = vpack.c.bf16 %v2398, %v2398
        %v2591 = vpack.c.bf16 %v2399, %v2399
        %v2592 = vpack.c.bf16 %v2400, %v2400
        %v2593 = vpack.c.bf16 %v2401, %v2401
        %v2594 = vpack.c.bf16 %v2402, %v2402
        %v2595 = vpack.c.bf16 %v2403, %v2403
        %v2596 = vpack.c.bf16 %v2404, %v2404
        %v2597 = vpack.c.bf16 %v2405, %v2405
        %v2598 = vpack.c.bf16 %v2406, %v2406
        %v2599 = vpack.c.bf16 %v2407, %v2407
        %v2600 = vpack.c.bf16 %v2408, %v2408
        %v2601 = vpack.c.bf16 %v2409, %v2409
        %v2602 = vpack.c.bf16 %v2410, %v2410
        %v2603 = vpack.c.bf16 %v2411, %v2411
        %v2604 = vpack.c.bf16 %v2412, %v2412
        %v2605 = vpack.c.bf16 %v2413, %v2413
        %v2606 = vpack.c.bf16 %v2414, %v2414
        %v2607 = vpack.c.bf16 %v2415, %v2415
        %v2608 = vpack.c.bf16 %v2416, %v2416
        %v2609 = vpack.c.bf16 %v2417, %v2417
        %v2610 = vpack.c.bf16 %v2418, %v2418
        %v2611 = vpack.c.bf16 %v2419, %v2419
        %v2612 = vpack.c.bf16 %v2420, %v2420
        %v2613 = vpack.c.bf16 %v2421, %v2421
        %v2614 = vpack.c.bf16 %v2422, %v2422
        %v2615 = vpack.c.bf16 %v2423, %v2423
        %v2616 = vpack.c.bf16 %v2424, %v2424
        %v2617 = vpack.c.bf16 %v2425, %v2425
        %v2618 = vpack.c.bf16 %v2426, %v2426
        %v2619 = vpack.c.bf16 %v2427, %v2427
        %vm2620 = vsmask.f32 4368
        %vm2621 = vmor %vm2476, %vm2620
        %v2623 = vshrl.u32 %v2588, 16
        %v2625 = vrot.slane %v2623, 7
        %v2626 = vshll.u32 %v2588, 16
        %v2628 = vor.u32 %v2625, %v2626
        %v2629 = vrot.slane %v2625, 4
        %v2631 = vshrl.u32 %v2589, 16
        %v2633 = vrot.slane %v2631, 7
        %v2634 = vshll.u32 %v2589, 16
        %v2636 = vor.u32 %v2633, %v2634
        %v2637 = vsel %vm2621, %v2629, %v2636
        %v2638 = vrot.slane %v2633, 4
        %v2640 = vshrl.u32 %v2590, 16
        %v2642 = vrot.slane %v2640, 7
        %v2643 = vshll.u32 %v2590, 16
        %v2645 = vor.u32 %v2642, %v2643
        %v2646 = vrot.slane %v2642, 4
        %v2648 = vshrl.u32 %v2591, 16
        %v2650 = vrot.slane %v2648, 7
        %v2651 = vshll.u32 %v2591, 16
        %v2653 = vor.u32 %v2650, %v2651
        %v2654 = vsel %vm2621, %v2646, %v2653
        %v2655 = vrot.slane %v2650, 4
        %v2657 = vshrl.u32 %v2592, 16
        %v2659 = vrot.slane %v2657, 7
        %v2660 = vshll.u32 %v2592, 16
        %v2662 = vor.u32 %v2659, %v2660
        %v2663 = vrot.slane %v2659, 4
        %v2665 = vshrl.u32 %v2593, 16
        %v2667 = vrot.slane %v2665, 7
        %v2668 = vshll.u32 %v2593, 16
        %v2670 = vor.u32 %v2667, %v2668
        %v2671 = vsel %vm2621, %v2663, %v2670
        %v2672 = vrot.slane %v2667, 4
        %v2674 = vshrl.u32 %v2594, 16
        %v2676 = vrot.slane %v2674, 7
        %v2677 = vshll.u32 %v2594, 16
        %v2679 = vor.u32 %v2676, %v2677
        %v2680 = vrot.slane %v2676, 4
        %v2682 = vshrl.u32 %v2595, 16
        %v2684 = vrot.slane %v2682, 7
        %v2685 = vshll.u32 %v2595, 16
        %v2687 = vor.u32 %v2684, %v2685
        %v2688 = vsel %vm2621, %v2680, %v2687
        %v2689 = vrot.slane %v2684, 4
        %v2691 = vshrl.u32 %v2596, 16
        %v2693 = vrot.slane %v2691, 7
        %v2694 = vshll.u32 %v2596, 16
        %v2696 = vor.u32 %v2693, %v2694
        %v2697 = vrot.slane %v2693, 4
        %v2699 = vshrl.u32 %v2597, 16
        %v2701 = vrot.slane %v2699, 7
        %v2702 = vshll.u32 %v2597, 16
        %v2704 = vor.u32 %v2701, %v2702
        %v2705 = vsel %vm2621, %v2697, %v2704
        %v2706 = vrot.slane %v2701, 4
        %v2708 = vshrl.u32 %v2598, 16
        %v2710 = vrot.slane %v2708, 7
        %v2711 = vshll.u32 %v2598, 16
        %v2713 = vor.u32 %v2710, %v2711
        %v2714 = vrot.slane %v2710, 4
        %v2716 = vshrl.u32 %v2599, 16
        %v2718 = vrot.slane %v2716, 7
        %v2719 = vshll.u32 %v2599, 16
        %v2721 = vor.u32 %v2718, %v2719
        %v2722 = vsel %vm2621, %v2714, %v2721
        %v2723 = vrot.slane %v2718, 4
        %v2725 = vshrl.u32 %v2600, 16
        %v2727 = vrot.slane %v2725, 7
        %v2728 = vshll.u32 %v2600, 16
        %v2730 = vor.u32 %v2727, %v2728
        %v2731 = vrot.slane %v2727, 4
        %v2733 = vshrl.u32 %v2601, 16
        %v2735 = vrot.slane %v2733, 7
        %v2736 = vshll.u32 %v2601, 16
        %v2738 = vor.u32 %v2735, %v2736
        %v2739 = vsel %vm2621, %v2731, %v2738
        %v2740 = vrot.slane %v2735, 4
        %v2742 = vshrl.u32 %v2602, 16
        %v2744 = vrot.slane %v2742, 7
        %v2745 = vshll.u32 %v2602, 16
        %v2747 = vor.u32 %v2744, %v2745
        %v2748 = vrot.slane %v2744, 4
        %v2750 = vshrl.u32 %v2603, 16
        %v2752 = vrot.slane %v2750, 7
        %v2753 = vshll.u32 %v2603, 16
        %v2755 = vor.u32 %v2752, %v2753
        %v2756 = vsel %vm2621, %v2748, %v2755
        %v2757 = vrot.slane %v2752, 4
        %v2759 = vshrl.u32 %v2604, 16
        %v2761 = vrot.slane %v2759, 7
        %v2762 = vshll.u32 %v2604, 16
        %v2764 = vor.u32 %v2761, %v2762
        %v2765 = vrot.slane %v2761, 4
        %v2767 = vshrl.u32 %v2605, 16
        %v2769 = vrot.slane %v2767, 7
        %v2770 = vshll.u32 %v2605, 16
        %v2772 = vor.u32 %v2769, %v2770
        %v2773 = vsel %vm2621, %v2765, %v2772
        %v2774 = vrot.slane %v2769, 4
        %v2776 = vshrl.u32 %v2606, 16
        %v2778 = vrot.slane %v2776, 7
        %v2779 = vshll.u32 %v2606, 16
        %v2781 = vor.u32 %v2778, %v2779
        %v2782 = vrot.slane %v2778, 4
        %v2784 = vshrl.u32 %v2607, 16
        %v2786 = vrot.slane %v2784, 7
        %v2787 = vshll.u32 %v2607, 16
        %v2789 = vor.u32 %v2786, %v2787
        %v2790 = vsel %vm2621, %v2782, %v2789
        %v2791 = vrot.slane %v2786, 4
        %v2793 = vshrl.u32 %v2608, 16
        %v2795 = vrot.slane %v2793, 7
        %v2796 = vshll.u32 %v2608, 16
        %v2798 = vor.u32 %v2795, %v2796
        %v2799 = vrot.slane %v2795, 4
        %v2801 = vshrl.u32 %v2609, 16
        %v2803 = vrot.slane %v2801, 7
        %v2804 = vshll.u32 %v2609, 16
        %v2806 = vor.u32 %v2803, %v2804
        %v2807 = vsel %vm2621, %v2799, %v2806
        %v2808 = vrot.slane %v2803, 4
        %v2810 = vshrl.u32 %v2610, 16
        %v2812 = vrot.slane %v2810, 7
        %v2813 = vshll.u32 %v2610, 16
        %v2815 = vor.u32 %v2812, %v2813
        %v2816 = vrot.slane %v2812, 4
        %v2818 = vshrl.u32 %v2611, 16
        %v2820 = vrot.slane %v2818, 7
        %v2821 = vshll.u32 %v2611, 16
        %v2823 = vor.u32 %v2820, %v2821
        %v2824 = vsel %vm2621, %v2816, %v2823
        %v2825 = vrot.slane %v2820, 4
        %v2827 = vshrl.u32 %v2612, 16
        %v2829 = vrot.slane %v2827, 7
        %v2830 = vshll.u32 %v2612, 16
        %v2832 = vor.u32 %v2829, %v2830
        %v2833 = vrot.slane %v2829, 4
        %v2835 = vshrl.u32 %v2613, 16
        %v2837 = vrot.slane %v2835, 7
        %v2838 = vshll.u32 %v2613, 16
        %v2840 = vor.u32 %v2837, %v2838
        %v2841 = vsel %vm2621, %v2833, %v2840
        %v2842 = vrot.slane %v2837, 4
        %v2844 = vshrl.u32 %v2614, 16
        %v2846 = vrot.slane %v2844, 7
        %v2847 = vshll.u32 %v2614, 16
        %v2849 = vor.u32 %v2846, %v2847
        %v2850 = vrot.slane %v2846, 4
        %v2852 = vshrl.u32 %v2615, 16
        %v2854 = vrot.slane %v2852, 7
        %v2855 = vshll.u32 %v2615, 16
        %v2857 = vor.u32 %v2854, %v2855
        %v2858 = vsel %vm2621, %v2850, %v2857
        %v2859 = vrot.slane %v2854, 4
        %v2861 = vshrl.u32 %v2616, 16
        %v2863 = vrot.slane %v2861, 7
        %v2864 = vshll.u32 %v2616, 16
        %v2866 = vor.u32 %v2863, %v2864
        %v2867 = vrot.slane %v2863, 4
        %v2869 = vshrl.u32 %v2617, 16
        %v2871 = vrot.slane %v2869, 7
        %v2872 = vshll.u32 %v2617, 16
        %v2874 = vor.u32 %v2871, %v2872
        %v2875 = vsel %vm2621, %v2867, %v2874
        %v2876 = vrot.slane %v2871, 4
        %v2878 = vshrl.u32 %v2618, 16
        %v2880 = vrot.slane %v2878, 7
        %v2881 = vshll.u32 %v2618, 16
        %v2883 = vor.u32 %v2880, %v2881
        %v2884 = vrot.slane %v2880, 4
        %v2886 = vshrl.u32 %v2619, 16
        %v2888 = vrot.slane %v2886, 7
        %v2889 = vshll.u32 %v2619, 16
        %v2891 = vor.u32 %v2888, %v2889
        %v2892 = vsel %vm2621, %v2884, %v2891
        %v2893 = vrot.slane %v2888, 4
        %s2942 = scalar_lea.vmem [#allocation3], 12
        %vm2943 = vcmask 257024
        %vm2944 = vmand %vm2943, %vm2532
        %v2945 = vld [vmem:[%s2942] sm:$0xf]
        %v2946 = vsel %vm2944, %v2628, %v2945
        %2947 = vst [vmem:[%s2942] sm:$0xf] %v2946
        %2948 = vst.msk [vmem:[%s2942 + $0x4] sm:$0xf] %vm2466, %v2637
        %v2949 = vld [vmem:[%s2942 + $0x8] sm:$0x1]
        %v2950 = vsel %vm2477, %v2638, %v2949
        %2951 = vst [vmem:[%s2942 + $0x8] sm:$0x1] %v2950
        %v2952 = vld [vmem:[%s2942 + $0xc] sm:$0xf]
        %v2953 = vsel %vm2944, %v2645, %v2952
        %2954 = vst [vmem:[%s2942 + $0xc] sm:$0xf] %v2953
        %2955 = vst.msk [vmem:[%s2942 + $0x10] sm:$0xf] %vm2466, %v2654
        %v2956 = vld [vmem:[%s2942 + $0x14] sm:$0x1]
        %v2957 = vsel %vm2477, %v2655, %v2956
        %2958 = vst [vmem:[%s2942 + $0x14] sm:$0x1] %v2957
        %v2959 = vld [vmem:[%s2942 + $0x18] sm:$0xf]
        %v2960 = vsel %vm2944, %v2662, %v2959
        %2961 = vst [vmem:[%s2942 + $0x18] sm:$0xf] %v2960
        %2962 = vst.msk [vmem:[%s2942 + $0x1c] sm:$0xf] %vm2466, %v2671
        %v2963 = vld [vmem:[%s2942 + $0x20] sm:$0x1]
        %v2964 = vsel %vm2477, %v2672, %v2963
        %2965 = vst [vmem:[%s2942 + $0x20] sm:$0x1] %v2964
        %v2966 = vld [vmem:[%s2942 + $0x24] sm:$0xf]
        %v2967 = vsel %vm2944, %v2679, %v2966
        %2968 = vst [vmem:[%s2942 + $0x24] sm:$0xf] %v2967
        %2969 = vst.msk [vmem:[%s2942 + $0x28] sm:$0xf] %vm2466, %v2688
        %v2970 = vld [vmem:[%s2942 + $0x2c] sm:$0x1]
        %v2971 = vsel %vm2477, %v2689, %v2970
        %2972 = vst [vmem:[%s2942 + $0x2c] sm:$0x1] %v2971
        %v2973 = vld [vmem:[%s2942 + $0x30] sm:$0xf]
        %v2974 = vsel %vm2944, %v2696, %v2973
        %2975 = vst [vmem:[%s2942 + $0x30] sm:$0xf] %v2974
        %2976 = vst.msk [vmem:[%s2942 + $0x34] sm:$0xf] %vm2466, %v2705
        %v2977 = vld [vmem:[%s2942 + $0x38] sm:$0x1]
        %v2978 = vsel %vm2477, %v2706, %v2977
        %2979 = vst [vmem:[%s2942 + $0x38] sm:$0x1] %v2978
        %v2980 = vld [vmem:[%s2942 + $0x3c] sm:$0xf]
        %v2981 = vsel %vm2944, %v2713, %v2980
        %2982 = vst [vmem:[%s2942 + $0x3c] sm:$0xf] %v2981
        %2983 = vst.msk [vmem:[%s2942 + $0x40] sm:$0xf] %vm2466, %v2722
        %v2984 = vld [vmem:[%s2942 + $0x44] sm:$0x1]
        %v2985 = vsel %vm2477, %v2723, %v2984
        %2986 = vst [vmem:[%s2942 + $0x44] sm:$0x1] %v2985
        %v2987 = vld [vmem:[%s2942 + $0x48] sm:$0xf]
        %v2988 = vsel %vm2944, %v2730, %v2987
        %2989 = vst [vmem:[%s2942 + $0x48] sm:$0xf] %v2988
        %2990 = vst.msk [vmem:[%s2942 + $0x4c] sm:$0xf] %vm2466, %v2739
        %v2991 = vld [vmem:[%s2942 + $0x50] sm:$0x1]
        %v2992 = vsel %vm2477, %v2740, %v2991
        %2993 = vst [vmem:[%s2942 + $0x50] sm:$0x1] %v2992
        %v2994 = vld [vmem:[%s2942 + $0x54] sm:$0xf]
        %v2995 = vsel %vm2944, %v2747, %v2994
        %2996 = vst [vmem:[%s2942 + $0x54] sm:$0xf] %v2995
        %2997 = vst.msk [vmem:[%s2942 + $0x58] sm:$0xf] %vm2466, %v2756
        %v2998 = vld [vmem:[%s2942 + $0x5c] sm:$0x1]
        %v2999 = vsel %vm2477, %v2757, %v2998
        %3000 = vst [vmem:[%s2942 + $0x5c] sm:$0x1] %v2999
        %v3001 = vld [vmem:[%s2942 + $0x60] sm:$0xf]
        %v3002 = vsel %vm2944, %v2764, %v3001
        %3003 = vst [vmem:[%s2942 + $0x60] sm:$0xf] %v3002
        %3004 = vst.msk [vmem:[%s2942 + $0x64] sm:$0xf] %vm2466, %v2773
        %v3005 = vld [vmem:[%s2942 + $0x68] sm:$0x1]
        %v3006 = vsel %vm2477, %v2774, %v3005
        %3007 = vst [vmem:[%s2942 + $0x68] sm:$0x1] %v3006
        %v3008 = vld [vmem:[%s2942 + $0x6c] sm:$0xf]
        %v3009 = vsel %vm2944, %v2781, %v3008
        %3010 = vst [vmem:[%s2942 + $0x6c] sm:$0xf] %v3009
        %3011 = vst.msk [vmem:[%s2942 + $0x70] sm:$0xf] %vm2466, %v2790
        %v3012 = vld [vmem:[%s2942 + $0x74] sm:$0x1]
        %v3013 = vsel %vm2477, %v2791, %v3012
        %3014 = vst [vmem:[%s2942 + $0x74] sm:$0x1] %v3013
        %v3015 = vld [vmem:[%s2942 + $0x78] sm:$0xf]
        %v3016 = vsel %vm2944, %v2798, %v3015
        %3017 = vst [vmem:[%s2942 + $0x78] sm:$0xf] %v3016
        %3018 = vst.msk [vmem:[%s2942 + $0x7c] sm:$0xf] %vm2466, %v2807
        %v3019 = vld [vmem:[%s2942 + $0x80] sm:$0x1]
        %v3020 = vsel %vm2477, %v2808, %v3019
        %3021 = vst [vmem:[%s2942 + $0x80] sm:$0x1] %v3020
        %v3022 = vld [vmem:[%s2942 + $0x84] sm:$0xf]
        %v3023 = vsel %vm2944, %v2815, %v3022
        %3024 = vst [vmem:[%s2942 + $0x84] sm:$0xf] %v3023
        %3025 = vst.msk [vmem:[%s2942 + $0x88] sm:$0xf] %vm2466, %v2824
        %v3026 = vld [vmem:[%s2942 + $0x8c] sm:$0x1]
        %v3027 = vsel %vm2477, %v2825, %v3026
        %3028 = vst [vmem:[%s2942 + $0x8c] sm:$0x1] %v3027
        %v3029 = vld [vmem:[%s2942 + $0x90] sm:$0xf]
        %v3030 = vsel %vm2944, %v2832, %v3029
        %3031 = vst [vmem:[%s2942 + $0x90] sm:$0xf] %v3030
        %3032 = vst.msk [vmem:[%s2942 + $0x94] sm:$0xf] %vm2466, %v2841
        %v3033 = vld [vmem:[%s2942 + $0x98] sm:$0x1]
        %v3034 = vsel %vm2477, %v2842, %v3033
        %3035 = vst [vmem:[%s2942 + $0x98] sm:$0x1] %v3034
        %v3036 = vld [vmem:[%s2942 + $0x9c] sm:$0xf]
        %v3037 = vsel %vm2944, %v2849, %v3036
        %3038 = vst [vmem:[%s2942 + $0x9c] sm:$0xf] %v3037
        %3039 = vst.msk [vmem:[%s2942 + $0xa0] sm:$0xf] %vm2466, %v2858
        %v3040 = vld [vmem:[%s2942 + $0xa4] sm:$0x1]
        %v3041 = vsel %vm2477, %v2859, %v3040
        %3042 = vst [vmem:[%s2942 + $0xa4] sm:$0x1] %v3041
        %v3043 = vld [vmem:[%s2942 + $0xa8] sm:$0xf]
        %v3044 = vsel %vm2944, %v2866, %v3043
        %3045 = vst [vmem:[%s2942 + $0xa8] sm:$0xf] %v3044
        %3046 = vst.msk [vmem:[%s2942 + $0xac] sm:$0xf] %vm2466, %v2875
        %v3047 = vld [vmem:[%s2942 + $0xb0] sm:$0x1]
        %v3048 = vsel %vm2477, %v2876, %v3047
        %3049 = vst [vmem:[%s2942 + $0xb0] sm:$0x1] %v3048
        %v3050 = vld [vmem:[%s2942 + $0xb4] sm:$0xf]
        %v3051 = vsel %vm2944, %v2883, %v3050
        %3052 = vst [vmem:[%s2942 + $0xb4] sm:$0xf] %v3051
        %3053 = vst.msk [vmem:[%s2942 + $0xb8] sm:$0xf] %vm2466, %v2892
        %v3054 = vld [vmem:[%s2942 + $0xbc] sm:$0x1]
        %v3055 = vsel %vm2477, %v2893, %v3054
        %3056 = vst [vmem:[%s2942 + $0xbc] sm:$0x1] %v3055
        %v3057 = vld [vmem:[#allocation3] sm:$0xf]
        %v3058 = vld [vmem:[#allocation3 + $0x4] sm:$0xf]
        %v3059 = vld [vmem:[#allocation3 + $0xc] sm:$0xf]
        %v3060 = vld [vmem:[#allocation3 + $0x10] sm:$0xf]
        %v3061 = vld [vmem:[#allocation3 + $0x18] sm:$0xf]
        %v3062 = vld [vmem:[#allocation3 + $0x1c] sm:$0xf]
        %v3063 = vld [vmem:[#allocation3 + $0x24] sm:$0xf]
        %v3064 = vld [vmem:[#allocation3 + $0x28] sm:$0xf]
        %v3065 = vld [vmem:[#allocation3 + $0x30] sm:$0xf]
        %v3066 = vld [vmem:[#allocation3 + $0x34] sm:$0xf]
        %v3067 = vld [vmem:[#allocation3 + $0x3c] sm:$0xf]
        %v3068 = vld [vmem:[#allocation3 + $0x40] sm:$0xf]
        %v3069 = vld [vmem:[#allocation3 + $0x48] sm:$0xf]
        %v3070 = vld [vmem:[#allocation3 + $0x4c] sm:$0xf]
        %v3071 = vld [vmem:[#allocation3 + $0x54] sm:$0xf]
        %v3072 = vld [vmem:[#allocation3 + $0x58] sm:$0xf]
        %v3073 = vld [vmem:[#allocation3 + $0x60] sm:$0xf]
        %v3074 = vld [vmem:[#allocation3 + $0x64] sm:$0xf]
        %v3075 = vld [vmem:[#allocation3 + $0x6c] sm:$0xf]
        %v3076 = vld [vmem:[#allocation3 + $0x70] sm:$0xf]
        %v3077 = vld [vmem:[#allocation3 + $0x78] sm:$0xf]
        %v3078 = vld [vmem:[#allocation3 + $0x7c] sm:$0xf]
        %v3079 = vld [vmem:[#allocation3 + $0x84] sm:$0xf]
        %v3080 = vld [vmem:[#allocation3 + $0x88] sm:$0xf]
        %v3081 = vld [vmem:[#allocation3 + $0x90] sm:$0xf]
        %v3082 = vld [vmem:[#allocation3 + $0x94] sm:$0xf]
        %v3083 = vld [vmem:[#allocation3 + $0x9c] sm:$0xf]
        %v3084 = vld [vmem:[#allocation3 + $0xa0] sm:$0xf]
        %v3085 = vld [vmem:[#allocation3 + $0xa8] sm:$0xf]
        %v3086 = vld [vmem:[#allocation3 + $0xac] sm:$0xf]
        %v3087 = vld [vmem:[#allocation3 + $0xb4] sm:$0xf]
        %v3088 = vld [vmem:[#allocation3 + $0xb8] sm:$0xf]
        %v3089 = vld [vmem:[#allocation3 + $0x8] sm:$0x1]
        %v3090 = vld [vmem:[#allocation3 + $0x14] sm:$0x1]
        %v3091 = vld [vmem:[#allocation3 + $0x20] sm:$0x1]
        %v3092 = vld [vmem:[#allocation3 + $0x2c] sm:$0x1]
        %v3093 = vld [vmem:[#allocation3 + $0x38] sm:$0x1]
        %v3094 = vld [vmem:[#allocation3 + $0x44] sm:$0x1]
        %v3095 = vld [vmem:[#allocation3 + $0x50] sm:$0x1]
        %v3096 = vld [vmem:[#allocation3 + $0x5c] sm:$0x1]
        %v3097 = vld [vmem:[#allocation3 + $0x68] sm:$0x1]
        %v3098 = vld [vmem:[#allocation3 + $0x74] sm:$0x1]
        %v3099 = vld [vmem:[#allocation3 + $0x80] sm:$0x1]
        %v3100 = vld [vmem:[#allocation3 + $0x8c] sm:$0x1]
        %v3101 = vld [vmem:[#allocation3 + $0x98] sm:$0x1]
        %v3102 = vld [vmem:[#allocation3 + $0xa4] sm:$0x1]
        %v3103 = vld [vmem:[#allocation3 + $0xb0] sm:$0x1]
        %v3104 = vld [vmem:[#allocation3 + $0xbc] sm:$0x1]
        %vm3105 = vsmask.f32 3328
        %vm3106 = vsmask.f32 7440
        %vm3107 = vmor %vm3105, %vm3106
        %v3109 = vshrl.u32 %v3057, 16
        %v3111 = vrot.slane %v3109, 4
        %v3112 = vshll.u32 %v3057, 16
        %v3114 = vrot.slane %v3112, 5
        %v3115 = vor.u32 %v3111, %v3114
        %v3116 = vrot.slane %v3115, 4
        %v3118 = vshll.u32 %v3058, 16
        %v3120 = vrot.slane %v3118, 5
        %v3121 = vsel %vm3107, %v3116, %v3120
        %v3122 = vshrl.u32 %v3058, 16
        %v3124 = vrot.slane %v3122, 4
        %v3125 = vor.u32 %v3124, %v3120
        %v3126 = vrot.slane %v3125, 4
        %v3128 = vshll.u32 %v3089, 16
        %v3130 = vrot.slane %v3128, 5
        %v3131 = vsel %vm3107, %v3126, %v3130
        %v3133 = vshrl.u32 %v3059, 16
        %v3135 = vrot.slane %v3133, 4
        %v3136 = vshll.u32 %v3059, 16
        %v3138 = vrot.slane %v3136, 5
        %v3139 = vor.u32 %v3135, %v3138
        %v3140 = vrot.slane %v3139, 4
        %v3142 = vshll.u32 %v3060, 16
        %v3144 = vrot.slane %v3142, 5
        %v3145 = vsel %vm3107, %v3140, %v3144
        %v3146 = vshrl.u32 %v3060, 16
        %v3148 = vrot.slane %v3146, 4
        %v3149 = vor.u32 %v3148, %v3144
        %v3150 = vrot.slane %v3149, 4
        %v3152 = vshll.u32 %v3090, 16
        %v3154 = vrot.slane %v3152, 5
        %v3155 = vsel %vm3107, %v3150, %v3154
        %v3157 = vshrl.u32 %v3061, 16
        %v3159 = vrot.slane %v3157, 4
        %v3160 = vshll.u32 %v3061, 16
        %v3162 = vrot.slane %v3160, 5
        %v3163 = vor.u32 %v3159, %v3162
        %v3164 = vrot.slane %v3163, 4
        %v3166 = vshll.u32 %v3062, 16
        %v3168 = vrot.slane %v3166, 5
        %v3169 = vsel %vm3107, %v3164, %v3168
        %v3170 = vshrl.u32 %v3062, 16
        %v3172 = vrot.slane %v3170, 4
        %v3173 = vor.u32 %v3172, %v3168
        %v3174 = vrot.slane %v3173, 4
        %v3176 = vshll.u32 %v3091, 16
        %v3178 = vrot.slane %v3176, 5
        %v3179 = vsel %vm3107, %v3174, %v3178
        %v3181 = vshrl.u32 %v3063, 16
        %v3183 = vrot.slane %v3181, 4
        %v3184 = vshll.u32 %v3063, 16
        %v3186 = vrot.slane %v3184, 5
        %v3187 = vor.u32 %v3183, %v3186
        %v3188 = vrot.slane %v3187, 4
        %v3190 = vshll.u32 %v3064, 16
        %v3192 = vrot.slane %v3190, 5
        %v3193 = vsel %vm3107, %v3188, %v3192
        %v3194 = vshrl.u32 %v3064, 16
        %v3196 = vrot.slane %v3194, 4
        %v3197 = vor.u32 %v3196, %v3192
        %v3198 = vrot.slane %v3197, 4
        %v3200 = vshll.u32 %v3092, 16
        %v3202 = vrot.slane %v3200, 5
        %v3203 = vsel %vm3107, %v3198, %v3202
        %v3205 = vshrl.u32 %v3065, 16
        %v3207 = vrot.slane %v3205, 4
        %v3208 = vshll.u32 %v3065, 16
        %v3210 = vrot.slane %v3208, 5
        %v3211 = vor.u32 %v3207, %v3210
        %v3212 = vrot.slane %v3211, 4
        %v3214 = vshll.u32 %v3066, 16
        %v3216 = vrot.slane %v3214, 5
        %v3217 = vsel %vm3107, %v3212, %v3216
        %v3218 = vshrl.u32 %v3066, 16
        %v3220 = vrot.slane %v3218, 4
        %v3221 = vor.u32 %v3220, %v3216
        %v3222 = vrot.slane %v3221, 4
        %v3224 = vshll.u32 %v3093, 16
        %v3226 = vrot.slane %v3224, 5
        %v3227 = vsel %vm3107, %v3222, %v3226
        %v3229 = vshrl.u32 %v3067, 16
        %v3231 = vrot.slane %v3229, 4
        %v3232 = vshll.u32 %v3067, 16
        %v3234 = vrot.slane %v3232, 5
        %v3235 = vor.u32 %v3231, %v3234
        %v3236 = vrot.slane %v3235, 4
        %v3238 = vshll.u32 %v3068, 16
        %v3240 = vrot.slane %v3238, 5
        %v3241 = vsel %vm3107, %v3236, %v3240
        %v3242 = vshrl.u32 %v3068, 16
        %v3244 = vrot.slane %v3242, 4
        %v3245 = vor.u32 %v3244, %v3240
        %v3246 = vrot.slane %v3245, 4
        %v3248 = vshll.u32 %v3094, 16
        %v3250 = vrot.slane %v3248, 5
        %v3251 = vsel %vm3107, %v3246, %v3250
        %v3253 = vshrl.u32 %v3069, 16
        %v3255 = vrot.slane %v3253, 4
        %v3256 = vshll.u32 %v3069, 16
        %v3258 = vrot.slane %v3256, 5
        %v3259 = vor.u32 %v3255, %v3258
        %v3260 = vrot.slane %v3259, 4
        %v3262 = vshll.u32 %v3070, 16
        %v3264 = vrot.slane %v3262, 5
        %v3265 = vsel %vm3107, %v3260, %v3264
        %v3266 = vshrl.u32 %v3070, 16
        %v3268 = vrot.slane %v3266, 4
        %v3269 = vor.u32 %v3268, %v3264
        %v3270 = vrot.slane %v3269, 4
        %v3272 = vshll.u32 %v3095, 16
        %v3274 = vrot.slane %v3272, 5
        %v3275 = vsel %vm3107, %v3270, %v3274
        %v3277 = vshrl.u32 %v3071, 16
        %v3279 = vrot.slane %v3277, 4
        %v3280 = vshll.u32 %v3071, 16
        %v3282 = vrot.slane %v3280, 5
        %v3283 = vor.u32 %v3279, %v3282
        %v3284 = vrot.slane %v3283, 4
        %v3286 = vshll.u32 %v3072, 16
        %v3288 = vrot.slane %v3286, 5
        %v3289 = vsel %vm3107, %v3284, %v3288
        %v3290 = vshrl.u32 %v3072, 16
        %v3292 = vrot.slane %v3290, 4
        %v3293 = vor.u32 %v3292, %v3288
        %v3294 = vrot.slane %v3293, 4
        %v3296 = vshll.u32 %v3096, 16
        %v3298 = vrot.slane %v3296, 5
        %v3299 = vsel %vm3107, %v3294, %v3298
        %v3301 = vshrl.u32 %v3073, 16
        %v3303 = vrot.slane %v3301, 4
        %v3304 = vshll.u32 %v3073, 16
        %v3306 = vrot.slane %v3304, 5
        %v3307 = vor.u32 %v3303, %v3306
        %v3308 = vrot.slane %v3307, 4
        %v3310 = vshll.u32 %v3074, 16
        %v3312 = vrot.slane %v3310, 5
        %v3313 = vsel %vm3107, %v3308, %v3312
        %v3314 = vshrl.u32 %v3074, 16
        %v3316 = vrot.slane %v3314, 4
        %v3317 = vor.u32 %v3316, %v3312
        %v3318 = vrot.slane %v3317, 4
        %v3320 = vshll.u32 %v3097, 16
        %v3322 = vrot.slane %v3320, 5
        %v3323 = vsel %vm3107, %v3318, %v3322
        %v3325 = vshrl.u32 %v3075, 16
        %v3327 = vrot.slane %v3325, 4
        %v3328 = vshll.u32 %v3075, 16
        %v3330 = vrot.slane %v3328, 5
        %v3331 = vor.u32 %v3327, %v3330
        %v3332 = vrot.slane %v3331, 4
        %v3334 = vshll.u32 %v3076, 16
        %v3336 = vrot.slane %v3334, 5
        %v3337 = vsel %vm3107, %v3332, %v3336
        %v3338 = vshrl.u32 %v3076, 16
        %v3340 = vrot.slane %v3338, 4
        %v3341 = vor.u32 %v3340, %v3336
        %v3342 = vrot.slane %v3341, 4
        %v3344 = vshll.u32 %v3098, 16
        %v3346 = vrot.slane %v3344, 5
        %v3347 = vsel %vm3107, %v3342, %v3346
        %v3349 = vshrl.u32 %v3077, 16
        %v3351 = vrot.slane %v3349, 4
        %v3352 = vshll.u32 %v3077, 16
        %v3354 = vrot.slane %v3352, 5
        %v3355 = vor.u32 %v3351, %v3354
        %v3356 = vrot.slane %v3355, 4
        %v3358 = vshll.u32 %v3078, 16
        %v3360 = vrot.slane %v3358, 5
        %v3361 = vsel %vm3107, %v3356, %v3360
        %v3362 = vshrl.u32 %v3078, 16
        %v3364 = vrot.slane %v3362, 4
        %v3365 = vor.u32 %v3364, %v3360
        %v3366 = vrot.slane %v3365, 4
        %v3368 = vshll.u32 %v3099, 16
        %v3370 = vrot.slane %v3368, 5
        %v3371 = vsel %vm3107, %v3366, %v3370
        %v3373 = vshrl.u32 %v3079, 16
        %v3375 = vrot.slane %v3373, 4
        %v3376 = vshll.u32 %v3079, 16
        %v3378 = vrot.slane %v3376, 5
        %v3379 = vor.u32 %v3375, %v3378
        %v3380 = vrot.slane %v3379, 4
        %v3382 = vshll.u32 %v3080, 16
        %v3384 = vrot.slane %v3382, 5
        %v3385 = vsel %vm3107, %v3380, %v3384
        %v3386 = vshrl.u32 %v3080, 16
        %v3388 = vrot.slane %v3386, 4
        %v3389 = vor.u32 %v3388, %v3384
        %v3390 = vrot.slane %v3389, 4
        %v3392 = vshll.u32 %v3100, 16
        %v3394 = vrot.slane %v3392, 5
        %v3395 = vsel %vm3107, %v3390, %v3394
        %v3397 = vshrl.u32 %v3081, 16
        %v3399 = vrot.slane %v3397, 4
        %v3400 = vshll.u32 %v3081, 16
        %v3402 = vrot.slane %v3400, 5
        %v3403 = vor.u32 %v3399, %v3402
        %v3404 = vrot.slane %v3403, 4
        %v3406 = vshll.u32 %v3082, 16
        %v3408 = vrot.slane %v3406, 5
        %v3409 = vsel %vm3107, %v3404, %v3408
        %v3410 = vshrl.u32 %v3082, 16
        %v3412 = vrot.slane %v3410, 4
        %v3413 = vor.u32 %v3412, %v3408
        %v3414 = vrot.slane %v3413, 4
        %v3416 = vshll.u32 %v3101, 16
        %v3418 = vrot.slane %v3416, 5
        %v3419 = vsel %vm3107, %v3414, %v3418
        %v3421 = vshrl.u32 %v3083, 16
        %v3423 = vrot.slane %v3421, 4
        %v3424 = vshll.u32 %v3083, 16
        %v3426 = vrot.slane %v3424, 5
        %v3427 = vor.u32 %v3423, %v3426
        %v3428 = vrot.slane %v3427, 4
        %v3430 = vshll.u32 %v3084, 16
        %v3432 = vrot.slane %v3430, 5
        %v3433 = vsel %vm3107, %v3428, %v3432
        %v3434 = vshrl.u32 %v3084, 16
        %v3436 = vrot.slane %v3434, 4
        %v3437 = vor.u32 %v3436, %v3432
        %v3438 = vrot.slane %v3437, 4
        %v3440 = vshll.u32 %v3102, 16
        %v3442 = vrot.slane %v3440, 5
        %v3443 = vsel %vm3107, %v3438, %v3442
        %v3445 = vshrl.u32 %v3085, 16
        %v3447 = vrot.slane %v3445, 4
        %v3448 = vshll.u32 %v3085, 16
        %v3450 = vrot.slane %v3448, 5
        %v3451 = vor.u32 %v3447, %v3450
        %v3452 = vrot.slane %v3451, 4
        %v3454 = vshll.u32 %v3086, 16
        %v3456 = vrot.slane %v3454, 5
        %v3457 = vsel %vm3107, %v3452, %v3456
        %v3458 = vshrl.u32 %v3086, 16
        %v3460 = vrot.slane %v3458, 4
        %v3461 = vor.u32 %v3460, %v3456
        %v3462 = vrot.slane %v3461, 4
        %v3464 = vshll.u32 %v3103, 16
        %v3466 = vrot.slane %v3464, 5
        %v3467 = vsel %vm3107, %v3462, %v3466
        %v3469 = vshrl.u32 %v3087, 16
        %v3471 = vrot.slane %v3469, 4
        %v3472 = vshll.u32 %v3087, 16
        %v3474 = vrot.slane %v3472, 5
        %v3475 = vor.u32 %v3471, %v3474
        %v3476 = vrot.slane %v3475, 4
        %v3478 = vshll.u32 %v3088, 16
        %v3480 = vrot.slane %v3478, 5
        %v3481 = vsel %vm3107, %v3476, %v3480
        %v3482 = vshrl.u32 %v3088, 16
        %v3484 = vrot.slane %v3482, 4
        %v3485 = vor.u32 %v3484, %v3480
        %v3486 = vrot.slane %v3485, 4
        %v3488 = vshll.u32 %v3104, 16
        %v3490 = vrot.slane %v3488, 5
        %v3491 = vsel %vm3107, %v3486, %v3490
        %v3492 = vld [vmem:[#allocation3] sm:$0xe]
        %v3493 = vld [vmem:[#allocation3 + $0xc] sm:$0xe]
        %v3494 = vld [vmem:[#allocation3 + $0x18] sm:$0xe]
        %v3495 = vld [vmem:[#allocation3 + $0x24] sm:$0xe]
        %v3496 = vld [vmem:[#allocation3 + $0x30] sm:$0xe]
        %v3497 = vld [vmem:[#allocation3 + $0x3c] sm:$0xe]
        %v3498 = vld [vmem:[#allocation3 + $0x48] sm:$0xe]
        %v3499 = vld [vmem:[#allocation3 + $0x54] sm:$0xe]
        %v3500 = vld [vmem:[#allocation3 + $0x60] sm:$0xe]
        %v3501 = vld [vmem:[#allocation3 + $0x6c] sm:$0xe]
        %v3502 = vld [vmem:[#allocation3 + $0x78] sm:$0xe]
        %v3503 = vld [vmem:[#allocation3 + $0x84] sm:$0xe]
        %v3504 = vld [vmem:[#allocation3 + $0x90] sm:$0xe]
        %v3505 = vld [vmem:[#allocation3 + $0x9c] sm:$0xe]
        %v3506 = vld [vmem:[#allocation3 + $0xa8] sm:$0xe]
        %v3507 = vld [vmem:[#allocation3 + $0xb4] sm:$0xe]
        %vm3556 = vcmask 1042432
        %vm3557 = vcmask 1046532
        %vm3558 = vmor %vm3556, %vm3557
        %v3559 = vrot.slane %v3492, 5
        %v3560 = vrot.slane %v3559, 4
        %v3561 = vrot.slane %v3058, 5
        %v3562 = vsel %vm3558, %v3560, %v3561
        %v3563 = vrot.slane %v3561, 4
        %v3564 = vrot.slane %v3089, 5
        %v3565 = vsel %vm3558, %v3563, %v3564
        %v3566 = vrot.slane %v3493, 5
        %v3567 = vrot.slane %v3566, 4
        %v3568 = vrot.slane %v3060, 5
        %v3569 = vsel %vm3558, %v3567, %v3568
        %v3570 = vrot.slane %v3568, 4
        %v3571 = vrot.slane %v3090, 5
        %v3572 = vsel %vm3558, %v3570, %v3571
        %v3573 = vrot.slane %v3494, 5
        %v3574 = vrot.slane %v3573, 4
        %v3575 = vrot.slane %v3062, 5
        %v3576 = vsel %vm3558, %v3574, %v3575
        %v3577 = vrot.slane %v3575, 4
        %v3578 = vrot.slane %v3091, 5
        %v3579 = vsel %vm3558, %v3577, %v3578
        %v3580 = vrot.slane %v3495, 5
        %v3581 = vrot.slane %v3580, 4
        %v3582 = vrot.slane %v3064, 5
        %v3583 = vsel %vm3558, %v3581, %v3582
        %v3584 = vrot.slane %v3582, 4
        %v3585 = vrot.slane %v3092, 5
        %v3586 = vsel %vm3558, %v3584, %v3585
        %v3587 = vrot.slane %v3496, 5
        %v3588 = vrot.slane %v3587, 4
        %v3589 = vrot.slane %v3066, 5
        %v3590 = vsel %vm3558, %v3588, %v3589
        %v3591 = vrot.slane %v3589, 4
        %v3592 = vrot.slane %v3093, 5
        %v3593 = vsel %vm3558, %v3591, %v3592
        %v3594 = vrot.slane %v3497, 5
        %v3595 = vrot.slane %v3594, 4
        %v3596 = vrot.slane %v3068, 5
        %v3597 = vsel %vm3558, %v3595, %v3596
        %v3598 = vrot.slane %v3596, 4
        %v3599 = vrot.slane %v3094, 5
        %v3600 = vsel %vm3558, %v3598, %v3599
        %v3601 = vrot.slane %v3498, 5
        %v3602 = vrot.slane %v3601, 4
        %v3603 = vrot.slane %v3070, 5
        %v3604 = vsel %vm3558, %v3602, %v3603
        %v3605 = vrot.slane %v3603, 4
        %v3606 = vrot.slane %v3095, 5
        %v3607 = vsel %vm3558, %v3605, %v3606
        %v3608 = vrot.slane %v3499, 5
        %v3609 = vrot.slane %v3608, 4
        %v3610 = vrot.slane %v3072, 5
        %v3611 = vsel %vm3558, %v3609, %v3610
        %v3612 = vrot.slane %v3610, 4
        %v3613 = vrot.slane %v3096, 5
        %v3614 = vsel %vm3558, %v3612, %v3613
        %v3615 = vrot.slane %v3500, 5
        %v3616 = vrot.slane %v3615, 4
        %v3617 = vrot.slane %v3074, 5
        %v3618 = vsel %vm3558, %v3616, %v3617
        %v3619 = vrot.slane %v3617, 4
        %v3620 = vrot.slane %v3097, 5
        %v3621 = vsel %vm3558, %v3619, %v3620
        %v3622 = vrot.slane %v3501, 5
        %v3623 = vrot.slane %v3622, 4
        %v3624 = vrot.slane %v3076, 5
        %v3625 = vsel %vm3558, %v3623, %v3624
        %v3626 = vrot.slane %v3624, 4
        %v3627 = vrot.slane %v3098, 5
        %v3628 = vsel %vm3558, %v3626, %v3627
        %v3629 = vrot.slane %v3502, 5
        %v3630 = vrot.slane %v3629, 4
        %v3631 = vrot.slane %v3078, 5
        %v3632 = vsel %vm3558, %v3630, %v3631
        %v3633 = vrot.slane %v3631, 4
        %v3634 = vrot.slane %v3099, 5
        %v3635 = vsel %vm3558, %v3633, %v3634
        %v3636 = vrot.slane %v3503, 5
        %v3637 = vrot.slane %v3636, 4
        %v3638 = vrot.slane %v3080, 5
        %v3639 = vsel %vm3558, %v3637, %v3638
        %v3640 = vrot.slane %v3638, 4
        %v3641 = vrot.slane %v3100, 5
        %v3642 = vsel %vm3558, %v3640, %v3641
        %v3643 = vrot.slane %v3504, 5
        %v3644 = vrot.slane %v3643, 4
        %v3645 = vrot.slane %v3082, 5
        %v3646 = vsel %vm3558, %v3644, %v3645
        %v3647 = vrot.slane %v3645, 4
        %v3648 = vrot.slane %v3101, 5
        %v3649 = vsel %vm3558, %v3647, %v3648
        %v3650 = vrot.slane %v3505, 5
        %v3651 = vrot.slane %v3650, 4
        %v3652 = vrot.slane %v3084, 5
        %v3653 = vsel %vm3558, %v3651, %v3652
        %v3654 = vrot.slane %v3652, 4
        %v3655 = vrot.slane %v3102, 5
        %v3656 = vsel %vm3558, %v3654, %v3655
        %v3657 = vrot.slane %v3506, 5
        %v3658 = vrot.slane %v3657, 4
        %v3659 = vrot.slane %v3086, 5
        %v3660 = vsel %vm3558, %v3658, %v3659
        %v3661 = vrot.slane %v3659, 4
        %v3662 = vrot.slane %v3103, 5
        %v3663 = vsel %vm3558, %v3661, %v3662
        %v3664 = vrot.slane %v3507, 5
        %v3665 = vrot.slane %v3664, 4
        %v3666 = vrot.slane %v3088, 5
        %v3667 = vsel %vm3558, %v3665, %v3666
        %v3668 = vrot.slane %v3666, 4
        %v3669 = vrot.slane %v3104, 5
        %v3670 = vsel %vm3558, %v3668, %v3669
        %v3687 = vunpack.c.l.b16 %v3057
        %v3688 = vunpack.c.l.b16 %v3058
        %v3689 = vunpack.c.l.b16 %v3059
        %v3690 = vunpack.c.l.b16 %v3060
        %v3691 = vunpack.c.l.b16 %v3061
        %v3692 = vunpack.c.l.b16 %v3062
        %v3693 = vunpack.c.l.b16 %v3063
        %v3694 = vunpack.c.l.b16 %v3064
        %v3695 = vunpack.c.l.b16 %v3065
        %v3696 = vunpack.c.l.b16 %v3066
        %v3697 = vunpack.c.l.b16 %v3067
        %v3698 = vunpack.c.l.b16 %v3068
        %v3699 = vunpack.c.l.b16 %v3069
        %v3700 = vunpack.c.l.b16 %v3070
        %v3701 = vunpack.c.l.b16 %v3071
        %v3702 = vunpack.c.l.b16 %v3072
        %v3703 = vunpack.c.l.b16 %v3073
        %v3704 = vunpack.c.l.b16 %v3074
        %v3705 = vunpack.c.l.b16 %v3075
        %v3706 = vunpack.c.l.b16 %v3076
        %v3707 = vunpack.c.l.b16 %v3077
        %v3708 = vunpack.c.l.b16 %v3078
        %v3709 = vunpack.c.l.b16 %v3079
        %v3710 = vunpack.c.l.b16 %v3080
        %v3711 = vunpack.c.l.b16 %v3081
        %v3712 = vunpack.c.l.b16 %v3082
        %v3713 = vunpack.c.l.b16 %v3083
        %v3714 = vunpack.c.l.b16 %v3084
        %v3715 = vunpack.c.l.b16 %v3085
        %v3716 = vunpack.c.l.b16 %v3086
        %v3717 = vunpack.c.l.b16 %v3087
        %v3718 = vunpack.c.l.b16 %v3088
        %v3719 = vpack.c.b16 %v3688, %v3687
        %v3720 = vpack.c.b16 %v3690, %v3689
        %v3721 = vpack.c.b16 %v3692, %v3691
        %v3722 = vpack.c.b16 %v3694, %v3693
        %v3723 = vpack.c.b16 %v3696, %v3695
        %v3724 = vpack.c.b16 %v3698, %v3697
        %v3725 = vpack.c.b16 %v3700, %v3699
        %v3726 = vpack.c.b16 %v3702, %v3701
        %v3727 = vpack.c.b16 %v3704, %v3703
        %v3728 = vpack.c.b16 %v3706, %v3705
        %v3729 = vpack.c.b16 %v3708, %v3707
        %v3730 = vpack.c.b16 %v3710, %v3709
        %v3731 = vpack.c.b16 %v3712, %v3711
        %v3732 = vpack.c.b16 %v3714, %v3713
        %v3733 = vpack.c.b16 %v3716, %v3715
        %v3734 = vpack.c.b16 %v3718, %v3717
        %v3735 = vunpack.c.l.b16 %v3121
        %v3736 = vunpack.c.l.b16 %v3131
        %v3737 = vunpack.c.l.b16 %v3145
        %v3738 = vunpack.c.l.b16 %v3155
        %v3739 = vunpack.c.l.b16 %v3169
        %v3740 = vunpack.c.l.b16 %v3179
        %v3741 = vunpack.c.l.b16 %v3193
        %v3742 = vunpack.c.l.b16 %v3203
        %v3743 = vunpack.c.l.b16 %v3217
        %v3744 = vunpack.c.l.b16 %v3227
        %v3745 = vunpack.c.l.b16 %v3241
        %v3746 = vunpack.c.l.b16 %v3251
        %v3747 = vunpack.c.l.b16 %v3265
        %v3748 = vunpack.c.l.b16 %v3275
        %v3749 = vunpack.c.l.b16 %v3289
        %v3750 = vunpack.c.l.b16 %v3299
        %v3751 = vunpack.c.l.b16 %v3313
        %v3752 = vunpack.c.l.b16 %v3323
        %v3753 = vunpack.c.l.b16 %v3337
        %v3754 = vunpack.c.l.b16 %v3347
        %v3755 = vunpack.c.l.b16 %v3361
        %v3756 = vunpack.c.l.b16 %v3371
        %v3757 = vunpack.c.l.b16 %v3385
        %v3758 = vunpack.c.l.b16 %v3395
        %v3759 = vunpack.c.l.b16 %v3409
        %v3760 = vunpack.c.l.b16 %v3419
        %v3761 = vunpack.c.l.b16 %v3433
        %v3762 = vunpack.c.l.b16 %v3443
        %v3763 = vunpack.c.l.b16 %v3457
        %v3764 = vunpack.c.l.b16 %v3467
        %v3765 = vunpack.c.l.b16 %v3481
        %v3766 = vunpack.c.l.b16 %v3491
        %v3767 = vpack.c.b16 %v3736, %v3735
        %v3768 = vpack.c.b16 %v3738, %v3737
        %v3769 = vpack.c.b16 %v3740, %v3739
        %v3770 = vpack.c.b16 %v3742, %v3741
        %v3771 = vpack.c.b16 %v3744, %v3743
        %v3772 = vpack.c.b16 %v3746, %v3745
        %v3773 = vpack.c.b16 %v3748, %v3747
        %v3774 = vpack.c.b16 %v3750, %v3749
        %v3775 = vpack.c.b16 %v3752, %v3751
        %v3776 = vpack.c.b16 %v3754, %v3753
        %v3777 = vpack.c.b16 %v3756, %v3755
        %v3778 = vpack.c.b16 %v3758, %v3757
        %v3779 = vpack.c.b16 %v3760, %v3759
        %v3780 = vpack.c.b16 %v3762, %v3761
        %v3781 = vpack.c.b16 %v3764, %v3763
        %v3782 = vpack.c.b16 %v3766, %v3765
        %3783 = vrot.lane.b32.xlu0 %v3767, 32
        %v3784 = vpop.permute.xlu0 %3783
        %3785 = vrot.lane.b32.xlu0 %v3768, 32
        %v3786 = vpop.permute.xlu0 %3785
        %3787 = vrot.lane.b32.xlu0 %v3769, 32
        %v3788 = vpop.permute.xlu0 %3787
        %3789 = vrot.lane.b32.xlu0 %v3770, 32
        %v3790 = vpop.permute.xlu0 %3789
        %3791 = vrot.lane.b32.xlu0 %v3771, 32
        %v3792 = vpop.permute.xlu0 %3791
        %3793 = vrot.lane.b32.xlu0 %v3772, 32
        %v3794 = vpop.permute.xlu0 %3793
        %3795 = vrot.lane.b32.xlu0 %v3773, 32
        %v3796 = vpop.permute.xlu0 %3795
        %3797 = vrot.lane.b32.xlu0 %v3774, 32
        %v3798 = vpop.permute.xlu0 %3797
        %3799 = vrot.lane.b32.xlu0 %v3775, 32
        %v3800 = vpop.permute.xlu0 %3799
        %3801 = vrot.lane.b32.xlu0 %v3776, 32
        %v3802 = vpop.permute.xlu0 %3801
        %3803 = vrot.lane.b32.xlu0 %v3777, 32
        %v3804 = vpop.permute.xlu0 %3803
        %3805 = vrot.lane.b32.xlu0 %v3778, 32
        %v3806 = vpop.permute.xlu0 %3805
        %3807 = vrot.lane.b32.xlu0 %v3779, 32
        %v3808 = vpop.permute.xlu0 %3807
        %3809 = vrot.lane.b32.xlu0 %v3780, 32
        %v3810 = vpop.permute.xlu0 %3809
        %3811 = vrot.lane.b32.xlu0 %v3781, 32
        %v3812 = vpop.permute.xlu0 %3811
        %3813 = vrot.lane.b32.xlu0 %v3782, 32
        %v3814 = vpop.permute.xlu0 %3813
        %v3815 = vunpack.c.l.b16 %v3562
        %v3816 = vunpack.c.l.b16 %v3565
        %v3817 = vunpack.c.l.b16 %v3569
        %v3818 = vunpack.c.l.b16 %v3572
        %v3819 = vunpack.c.l.b16 %v3576
        %v3820 = vunpack.c.l.b16 %v3579
        %v3821 = vunpack.c.l.b16 %v3583
        %v3822 = vunpack.c.l.b16 %v3586
        %v3823 = vunpack.c.l.b16 %v3590
        %v3824 = vunpack.c.l.b16 %v3593
        %v3825 = vunpack.c.l.b16 %v3597
        %v3826 = vunpack.c.l.b16 %v3600
        %v3827 = vunpack.c.l.b16 %v3604
        %v3828 = vunpack.c.l.b16 %v3607
        %v3829 = vunpack.c.l.b16 %v3611
        %v3830 = vunpack.c.l.b16 %v3614
        %v3831 = vunpack.c.l.b16 %v3618
        %v3832 = vunpack.c.l.b16 %v3621
        %v3833 = vunpack.c.l.b16 %v3625
        %v3834 = vunpack.c.l.b16 %v3628
        %v3835 = vunpack.c.l.b16 %v3632
        %v3836 = vunpack.c.l.b16 %v3635
        %v3837 = vunpack.c.l.b16 %v3639
        %v3838 = vunpack.c.l.b16 %v3642
        %v3839 = vunpack.c.l.b16 %v3646
        %v3840 = vunpack.c.l.b16 %v3649
        %v3841 = vunpack.c.l.b16 %v3653
        %v3842 = vunpack.c.l.b16 %v3656
        %v3843 = vunpack.c.l.b16 %v3660
        %v3844 = vunpack.c.l.b16 %v3663
        %v3845 = vunpack.c.l.b16 %v3667
        %v3846 = vunpack.c.l.b16 %v3670
        %v3847 = vpack.c.b16 %v3816, %v3815
        %v3848 = vpack.c.b16 %v3818, %v3817
        %v3849 = vpack.c.b16 %v3820, %v3819
        %v3850 = vpack.c.b16 %v3822, %v3821
        %v3851 = vpack.c.b16 %v3824, %v3823
        %v3852 = vpack.c.b16 %v3826, %v3825
        %v3853 = vpack.c.b16 %v3828, %v3827
        %v3854 = vpack.c.b16 %v3830, %v3829
        %v3855 = vpack.c.b16 %v3832, %v3831
        %v3856 = vpack.c.b16 %v3834, %v3833
        %v3857 = vpack.c.b16 %v3836, %v3835
        %v3858 = vpack.c.b16 %v3838, %v3837
        %v3859 = vpack.c.b16 %v3840, %v3839
        %v3860 = vpack.c.b16 %v3842, %v3841
        %v3861 = vpack.c.b16 %v3844, %v3843
        %v3862 = vpack.c.b16 %v3846, %v3845
        %3863 = vrot.lane.b32.xlu0 %v3847, 64
        %v3864 = vpop.permute.xlu0 %3863
        %3865 = vrot.lane.b32.xlu0 %v3848, 64
        %v3866 = vpop.permute.xlu0 %3865
        %3867 = vrot.lane.b32.xlu0 %v3849, 64
        %v3868 = vpop.permute.xlu0 %3867
        %3869 = vrot.lane.b32.xlu0 %v3850, 64
        %v3870 = vpop.permute.xlu0 %3869
        %3871 = vrot.lane.b32.xlu0 %v3851, 64
        %v3872 = vpop.permute.xlu0 %3871
        %3873 = vrot.lane.b32.xlu0 %v3852, 64
        %v3874 = vpop.permute.xlu0 %3873
        %3875 = vrot.lane.b32.xlu0 %v3853, 64
        %v3876 = vpop.permute.xlu0 %3875
        %3877 = vrot.lane.b32.xlu0 %v3854, 64
        %v3878 = vpop.permute.xlu0 %3877
        %3879 = vrot.lane.b32.xlu0 %v3855, 64
        %v3880 = vpop.permute.xlu0 %3879
        %3881 = vrot.lane.b32.xlu0 %v3856, 64
        %v3882 = vpop.permute.xlu0 %3881
        %3883 = vrot.lane.b32.xlu0 %v3857, 64
        %v3884 = vpop.permute.xlu0 %3883
        %3885 = vrot.lane.b32.xlu0 %v3858, 64
        %v3886 = vpop.permute.xlu0 %3885
        %3887 = vrot.lane.b32.xlu0 %v3859, 64
        %v3888 = vpop.permute.xlu0 %3887
        %3889 = vrot.lane.b32.xlu0 %v3860, 64
        %v3890 = vpop.permute.xlu0 %3889
        %3891 = vrot.lane.b32.xlu0 %v3861, 64
        %v3892 = vpop.permute.xlu0 %3891
        %3893 = vrot.lane.b32.xlu0 %v3862, 64
        %v3894 = vpop.permute.xlu0 %3893
        %v3897 = vsel %vm2141, %v3719, %v3784
        %v3900 = vsel %vm2141, %v3720, %v3786
        %v3903 = vsel %vm2141, %v3721, %v3788
        %v3906 = vsel %vm2141, %v3722, %v3790
        %v3909 = vsel %vm2141, %v3723, %v3792
        %v3912 = vsel %vm2141, %v3724, %v3794
        %v3915 = vsel %vm2141, %v3725, %v3796
        %v3918 = vsel %vm2141, %v3726, %v3798
        %v3921 = vsel %vm2141, %v3727, %v3800
        %v3924 = vsel %vm2141, %v3728, %v3802
        %v3927 = vsel %vm2141, %v3729, %v3804
        %v3930 = vsel %vm2141, %v3730, %v3806
        %v3933 = vsel %vm2141, %v3731, %v3808
        %v3936 = vsel %vm2141, %v3732, %v3810
        %v3939 = vsel %vm2141, %v3733, %v3812
        %v3942 = vsel %vm2141, %v3734, %v3814
        %vm3943 = vcmask 523264
        %v3945 = vsel %vm3943, %v3897, %v3864
        %v3947 = vsel %vm3943, %v3900, %v3866
        %v3949 = vsel %vm3943, %v3903, %v3868
        %v3951 = vsel %vm3943, %v3906, %v3870
        %v3953 = vsel %vm3943, %v3909, %v3872
        %v3955 = vsel %vm3943, %v3912, %v3874
        %v3957 = vsel %vm3943, %v3915, %v3876
        %v3959 = vsel %vm3943, %v3918, %v3878
        %v3961 = vsel %vm3943, %v3921, %v3880
        %v3963 = vsel %vm3943, %v3924, %v3882
        %v3965 = vsel %vm3943, %v3927, %v3884
        %v3967 = vsel %vm3943, %v3930, %v3886
        %v3969 = vsel %vm3943, %v3933, %v3888
        %v3971 = vsel %vm3943, %v3936, %v3890
        %v3973 = vsel %vm3943, %v3939, %v3892
        %v3975 = vsel %vm3943, %v3942, %v3894
        %v3976 = vld [vmem:[%s2] sm:$0xf]
        %v3977 = vld [vmem:[%s2 + $0x4] sm:$0xf]
        %v3978 = vld [vmem:[%s2 + $0x8] sm:$0xf]
        %v3979 = vld [vmem:[%s2 + $0xc] sm:$0xf]
        %v3980 = vld [vmem:[%s2 + $0x10] sm:$0xf]
        %v3981 = vld [vmem:[%s2 + $0x14] sm:$0xf]
        %v3982 = vld [vmem:[%s2 + $0x18] sm:$0xf]
        %v3983 = vld [vmem:[%s2 + $0x1c] sm:$0xf]
        %v3984 = vld [vmem:[%s2 + $0x20] sm:$0xf]
        %v3985 = vld [vmem:[%s2 + $0x24] sm:$0xf]
        %v3986 = vld [vmem:[%s2 + $0x28] sm:$0xf]
        %v3987 = vld [vmem:[%s2 + $0x2c] sm:$0xf]
        %v3988 = vld [vmem:[%s2942] sm:$0xf]
        %v3989 = vld [vmem:[%s2942 + $0x4] sm:$0xf]
        %v3990 = vld [vmem:[%s2942 + $0xc] sm:$0xf]
        %v3991 = vld [vmem:[%s2942 + $0x10] sm:$0xf]
        %v3992 = vld [vmem:[%s2942 + $0x18] sm:$0xf]
        %v3993 = vld [vmem:[%s2942 + $0x1c] sm:$0xf]
        %v3994 = vld [vmem:[%s2942 + $0x24] sm:$0xf]
        %v3995 = vld [vmem:[%s2942 + $0x28] sm:$0xf]
        %v3996 = vld [vmem:[%s2942 + $0x30] sm:$0xf]
        %v3997 = vld [vmem:[%s2942 + $0x34] sm:$0xf]
        %v3998 = vld [vmem:[%s2942 + $0x3c] sm:$0xf]
        %v3999 = vld [vmem:[%s2942 + $0x40] sm:$0xf]
        %v4000 = vld [vmem:[%s2942 + $0x48] sm:$0xf]
        %v4001 = vld [vmem:[%s2942 + $0x4c] sm:$0xf]
        %v4002 = vld [vmem:[%s2942 + $0x54] sm:$0xf]
        %v4003 = vld [vmem:[%s2942 + $0x58] sm:$0xf]
        %v4004 = vld [vmem:[%s2942 + $0x60] sm:$0xf]
        %v4005 = vld [vmem:[%s2942 + $0x64] sm:$0xf]
        %v4006 = vld [vmem:[%s2942 + $0x6c] sm:$0xf]
        %v4007 = vld [vmem:[%s2942 + $0x70] sm:$0xf]
        %v4008 = vld [vmem:[%s2942 + $0x78] sm:$0xf]
        %v4009 = vld [vmem:[%s2942 + $0x7c] sm:$0xf]
        %v4010 = vld [vmem:[%s2942 + $0x84] sm:$0xf]
        %v4011 = vld [vmem:[%s2942 + $0x88] sm:$0xf]
        %v4012 = vld [vmem:[%s2942 + $0x90] sm:$0xf]
        %v4013 = vld [vmem:[%s2942 + $0x94] sm:$0xf]
        %v4014 = vld [vmem:[%s2942 + $0x9c] sm:$0xf]
        %v4015 = vld [vmem:[%s2942 + $0xa0] sm:$0xf]
        %v4016 = vld [vmem:[%s2942 + $0xa8] sm:$0xf]
        %v4017 = vld [vmem:[%s2942 + $0xac] sm:$0xf]
        %v4018 = vld [vmem:[%s2942 + $0xb4] sm:$0xf]
        %v4019 = vld [vmem:[%s2942 + $0xb8] sm:$0xf]
        %v4020 = vld [vmem:[%s2942 + $0x8] sm:$0x1]
        %v4021 = vld [vmem:[%s2942 + $0x14] sm:$0x1]
        %v4022 = vld [vmem:[%s2942 + $0x20] sm:$0x1]
        %v4023 = vld [vmem:[%s2942 + $0x2c] sm:$0x1]
        %v4024 = vld [vmem:[%s2942 + $0x38] sm:$0x1]
        %v4025 = vld [vmem:[%s2942 + $0x44] sm:$0x1]
        %v4026 = vld [vmem:[%s2942 + $0x50] sm:$0x1]
        %v4027 = vld [vmem:[%s2942 + $0x5c] sm:$0x1]
        %v4028 = vld [vmem:[%s2942 + $0x68] sm:$0x1]
        %v4029 = vld [vmem:[%s2942 + $0x74] sm:$0x1]
        %v4030 = vld [vmem:[%s2942 + $0x80] sm:$0x1]
        %v4031 = vld [vmem:[%s2942 + $0x8c] sm:$0x1]
        %v4032 = vld [vmem:[%s2942 + $0x98] sm:$0x1]
        %v4033 = vld [vmem:[%s2942 + $0xa4] sm:$0x1]
        %v4034 = vld [vmem:[%s2942 + $0xb0] sm:$0x1]
        %v4035 = vld [vmem:[%s2942 + $0xbc] sm:$0x1]
        %v4037 = vshrl.u32 %v3988, 16
        %v4039 = vrot.slane %v4037, 4
        %v4040 = vshll.u32 %v3988, 16
        %v4042 = vrot.slane %v4040, 5
        %v4043 = vor.u32 %v4039, %v4042
        %v4044 = vrot.slane %v4043, 4
        %v4046 = vshll.u32 %v3989, 16
        %v4048 = vrot.slane %v4046, 5
        %v4049 = vsel %vm3107, %v4044, %v4048
        %v4050 = vshrl.u32 %v3989, 16
        %v4052 = vrot.slane %v4050, 4
        %v4053 = vor.u32 %v4052, %v4048
        %v4054 = vrot.slane %v4053, 4
        %v4056 = vshll.u32 %v4020, 16
        %v4058 = vrot.slane %v4056, 5
        %v4059 = vsel %vm3107, %v4054, %v4058
        %v4061 = vshrl.u32 %v3990, 16
        %v4063 = vrot.slane %v4061, 4
        %v4064 = vshll.u32 %v3990, 16
        %v4066 = vrot.slane %v4064, 5
        %v4067 = vor.u32 %v4063, %v4066
        %v4068 = vrot.slane %v4067, 4
        %v4070 = vshll.u32 %v3991, 16
        %v4072 = vrot.slane %v4070, 5
        %v4073 = vsel %vm3107, %v4068, %v4072
        %v4074 = vshrl.u32 %v3991, 16
        %v4076 = vrot.slane %v4074, 4
        %v4077 = vor.u32 %v4076, %v4072
        %v4078 = vrot.slane %v4077, 4
        %v4080 = vshll.u32 %v4021, 16
        %v4082 = vrot.slane %v4080, 5
        %v4083 = vsel %vm3107, %v4078, %v4082
        %v4085 = vshrl.u32 %v3992, 16
        %v4087 = vrot.slane %v4085, 4
        %v4088 = vshll.u32 %v3992, 16
        %v4090 = vrot.slane %v4088, 5
        %v4091 = vor.u32 %v4087, %v4090
        %v4092 = vrot.slane %v4091, 4
        %v4094 = vshll.u32 %v3993, 16
        %v4096 = vrot.slane %v4094, 5
        %v4097 = vsel %vm3107, %v4092, %v4096
        %v4098 = vshrl.u32 %v3993, 16
        %v4100 = vrot.slane %v4098, 4
        %v4101 = vor.u32 %v4100, %v4096
        %v4102 = vrot.slane %v4101, 4
        %v4104 = vshll.u32 %v4022, 16
        %v4106 = vrot.slane %v4104, 5
        %v4107 = vsel %vm3107, %v4102, %v4106
        %v4109 = vshrl.u32 %v3994, 16
        %v4111 = vrot.slane %v4109, 4
        %v4112 = vshll.u32 %v3994, 16
        %v4114 = vrot.slane %v4112, 5
        %v4115 = vor.u32 %v4111, %v4114
        %v4116 = vrot.slane %v4115, 4
        %v4118 = vshll.u32 %v3995, 16
        %v4120 = vrot.slane %v4118, 5
        %v4121 = vsel %vm3107, %v4116, %v4120
        %v4122 = vshrl.u32 %v3995, 16
        %v4124 = vrot.slane %v4122, 4
        %v4125 = vor.u32 %v4124, %v4120
        %v4126 = vrot.slane %v4125, 4
        %v4128 = vshll.u32 %v4023, 16
        %v4130 = vrot.slane %v4128, 5
        %v4131 = vsel %vm3107, %v4126, %v4130
        %v4133 = vshrl.u32 %v3996, 16
        %v4135 = vrot.slane %v4133, 4
        %v4136 = vshll.u32 %v3996, 16
        %v4138 = vrot.slane %v4136, 5
        %v4139 = vor.u32 %v4135, %v4138
        %v4140 = vrot.slane %v4139, 4
        %v4142 = vshll.u32 %v3997, 16
        %v4144 = vrot.slane %v4142, 5
        %v4145 = vsel %vm3107, %v4140, %v4144
        %v4146 = vshrl.u32 %v3997, 16
        %v4148 = vrot.slane %v4146, 4
        %v4149 = vor.u32 %v4148, %v4144
        %v4150 = vrot.slane %v4149, 4
        %v4152 = vshll.u32 %v4024, 16
        %v4154 = vrot.slane %v4152, 5
        %v4155 = vsel %vm3107, %v4150, %v4154
        %v4157 = vshrl.u32 %v3998, 16
        %v4159 = vrot.slane %v4157, 4
        %v4160 = vshll.u32 %v3998, 16
        %v4162 = vrot.slane %v4160, 5
        %v4163 = vor.u32 %v4159, %v4162
        %v4164 = vrot.slane %v4163, 4
        %v4166 = vshll.u32 %v3999, 16
        %v4168 = vrot.slane %v4166, 5
        %v4169 = vsel %vm3107, %v4164, %v4168
        %v4170 = vshrl.u32 %v3999, 16
        %v4172 = vrot.slane %v4170, 4
        %v4173 = vor.u32 %v4172, %v4168
        %v4174 = vrot.slane %v4173, 4
        %v4176 = vshll.u32 %v4025, 16
        %v4178 = vrot.slane %v4176, 5
        %v4179 = vsel %vm3107, %v4174, %v4178
        %v4181 = vshrl.u32 %v4000, 16
        %v4183 = vrot.slane %v4181, 4
        %v4184 = vshll.u32 %v4000, 16
        %v4186 = vrot.slane %v4184, 5
        %v4187 = vor.u32 %v4183, %v4186
        %v4188 = vrot.slane %v4187, 4
        %v4190 = vshll.u32 %v4001, 16
        %v4192 = vrot.slane %v4190, 5
        %v4193 = vsel %vm3107, %v4188, %v4192
        %v4194 = vshrl.u32 %v4001, 16
        %v4196 = vrot.slane %v4194, 4
        %v4197 = vor.u32 %v4196, %v4192
        %v4198 = vrot.slane %v4197, 4
        %v4200 = vshll.u32 %v4026, 16
        %v4202 = vrot.slane %v4200, 5
        %v4203 = vsel %vm3107, %v4198, %v4202
        %v4205 = vshrl.u32 %v4002, 16
        %v4207 = vrot.slane %v4205, 4
        %v4208 = vshll.u32 %v4002, 16
        %v4210 = vrot.slane %v4208, 5
        %v4211 = vor.u32 %v4207, %v4210
        %v4212 = vrot.slane %v4211, 4
        %v4214 = vshll.u32 %v4003, 16
        %v4216 = vrot.slane %v4214, 5
        %v4217 = vsel %vm3107, %v4212, %v4216
        %v4218 = vshrl.u32 %v4003, 16
        %v4220 = vrot.slane %v4218, 4
        %v4221 = vor.u32 %v4220, %v4216
        %v4222 = vrot.slane %v4221, 4
        %v4224 = vshll.u32 %v4027, 16
        %v4226 = vrot.slane %v4224, 5
        %v4227 = vsel %vm3107, %v4222, %v4226
        %v4229 = vshrl.u32 %v4004, 16
        %v4231 = vrot.slane %v4229, 4
        %v4232 = vshll.u32 %v4004, 16
        %v4234 = vrot.slane %v4232, 5
        %v4235 = vor.u32 %v4231, %v4234
        %v4236 = vrot.slane %v4235, 4
        %v4238 = vshll.u32 %v4005, 16
        %v4240 = vrot.slane %v4238, 5
        %v4241 = vsel %vm3107, %v4236, %v4240
        %v4242 = vshrl.u32 %v4005, 16
        %v4244 = vrot.slane %v4242, 4
        %v4245 = vor.u32 %v4244, %v4240
        %v4246 = vrot.slane %v4245, 4
        %v4248 = vshll.u32 %v4028, 16
        %v4250 = vrot.slane %v4248, 5
        %v4251 = vsel %vm3107, %v4246, %v4250
        %v4253 = vshrl.u32 %v4006, 16
        %v4255 = vrot.slane %v4253, 4
        %v4256 = vshll.u32 %v4006, 16
        %v4258 = vrot.slane %v4256, 5
        %v4259 = vor.u32 %v4255, %v4258
        %v4260 = vrot.slane %v4259, 4
        %v4262 = vshll.u32 %v4007, 16
        %v4264 = vrot.slane %v4262, 5
        %v4265 = vsel %vm3107, %v4260, %v4264
        %v4266 = vshrl.u32 %v4007, 16
        %v4268 = vrot.slane %v4266, 4
        %v4269 = vor.u32 %v4268, %v4264
        %v4270 = vrot.slane %v4269, 4
        %v4272 = vshll.u32 %v4029, 16
        %v4274 = vrot.slane %v4272, 5
        %v4275 = vsel %vm3107, %v4270, %v4274
        %v4277 = vshrl.u32 %v4008, 16
        %v4279 = vrot.slane %v4277, 4
        %v4280 = vshll.u32 %v4008, 16
        %v4282 = vrot.slane %v4280, 5
        %v4283 = vor.u32 %v4279, %v4282
        %v4284 = vrot.slane %v4283, 4
        %v4286 = vshll.u32 %v4009, 16
        %v4288 = vrot.slane %v4286, 5
        %v4289 = vsel %vm3107, %v4284, %v4288
        %v4290 = vshrl.u32 %v4009, 16
        %v4292 = vrot.slane %v4290, 4
        %v4293 = vor.u32 %v4292, %v4288
        %v4294 = vrot.slane %v4293, 4
        %v4296 = vshll.u32 %v4030, 16
        %v4298 = vrot.slane %v4296, 5
        %v4299 = vsel %vm3107, %v4294, %v4298
        %v4301 = vshrl.u32 %v4010, 16
        %v4303 = vrot.slane %v4301, 4
        %v4304 = vshll.u32 %v4010, 16
        %v4306 = vrot.slane %v4304, 5
        %v4307 = vor.u32 %v4303, %v4306
        %v4308 = vrot.slane %v4307, 4
        %v4310 = vshll.u32 %v4011, 16
        %v4312 = vrot.slane %v4310, 5
        %v4313 = vsel %vm3107, %v4308, %v4312
        %v4314 = vshrl.u32 %v4011, 16
        %v4316 = vrot.slane %v4314, 4
        %v4317 = vor.u32 %v4316, %v4312
        %v4318 = vrot.slane %v4317, 4
        %v4320 = vshll.u32 %v4031, 16
        %v4322 = vrot.slane %v4320, 5
        %v4323 = vsel %vm3107, %v4318, %v4322
        %v4325 = vshrl.u32 %v4012, 16
        %v4327 = vrot.slane %v4325, 4
        %v4328 = vshll.u32 %v4012, 16
        %v4330 = vrot.slane %v4328, 5
        %v4331 = vor.u32 %v4327, %v4330
        %v4332 = vrot.slane %v4331, 4
        %v4334 = vshll.u32 %v4013, 16
        %v4336 = vrot.slane %v4334, 5
        %v4337 = vsel %vm3107, %v4332, %v4336
        %v4338 = vshrl.u32 %v4013, 16
        %v4340 = vrot.slane %v4338, 4
        %v4341 = vor.u32 %v4340, %v4336
        %v4342 = vrot.slane %v4341, 4
        %v4344 = vshll.u32 %v4032, 16
        %v4346 = vrot.slane %v4344, 5
        %v4347 = vsel %vm3107, %v4342, %v4346
        %v4349 = vshrl.u32 %v4014, 16
        %v4351 = vrot.slane %v4349, 4
        %v4352 = vshll.u32 %v4014, 16
        %v4354 = vrot.slane %v4352, 5
        %v4355 = vor.u32 %v4351, %v4354
        %v4356 = vrot.slane %v4355, 4
        %v4358 = vshll.u32 %v4015, 16
        %v4360 = vrot.slane %v4358, 5
        %v4361 = vsel %vm3107, %v4356, %v4360
        %v4362 = vshrl.u32 %v4015, 16
        %v4364 = vrot.slane %v4362, 4
        %v4365 = vor.u32 %v4364, %v4360
        %v4366 = vrot.slane %v4365, 4
        %v4368 = vshll.u32 %v4033, 16
        %v4370 = vrot.slane %v4368, 5
        %v4371 = vsel %vm3107, %v4366, %v4370
        %v4373 = vshrl.u32 %v4016, 16
        %v4375 = vrot.slane %v4373, 4
        %v4376 = vshll.u32 %v4016, 16
        %v4378 = vrot.slane %v4376, 5
        %v4379 = vor.u32 %v4375, %v4378
        %v4380 = vrot.slane %v4379, 4
        %v4382 = vshll.u32 %v4017, 16
        %v4384 = vrot.slane %v4382, 5
        %v4385 = vsel %vm3107, %v4380, %v4384
        %v4386 = vshrl.u32 %v4017, 16
        %v4388 = vrot.slane %v4386, 4
        %v4389 = vor.u32 %v4388, %v4384
        %v4390 = vrot.slane %v4389, 4
        %v4392 = vshll.u32 %v4034, 16
        %v4394 = vrot.slane %v4392, 5
        %v4395 = vsel %vm3107, %v4390, %v4394
        %v4397 = vshrl.u32 %v4018, 16
        %v4399 = vrot.slane %v4397, 4
        %v4400 = vshll.u32 %v4018, 16
        %v4402 = vrot.slane %v4400, 5
        %v4403 = vor.u32 %v4399, %v4402
        %v4404 = vrot.slane %v4403, 4
        %v4406 = vshll.u32 %v4019, 16
        %v4408 = vrot.slane %v4406, 5
        %v4409 = vsel %vm3107, %v4404, %v4408
        %v4410 = vshrl.u32 %v4019, 16
        %v4412 = vrot.slane %v4410, 4
        %v4413 = vor.u32 %v4412, %v4408
        %v4414 = vrot.slane %v4413, 4
        %v4416 = vshll.u32 %v4035, 16
        %v4418 = vrot.slane %v4416, 5
        %v4419 = vsel %vm3107, %v4414, %v4418
        %v4420 = vld [vmem:[%s2942] sm:$0xe]
        %v4421 = vld [vmem:[%s2942 + $0xc] sm:$0xe]
        %v4422 = vld [vmem:[%s2942 + $0x18] sm:$0xe]
        %v4423 = vld [vmem:[%s2942 + $0x24] sm:$0xe]
        %v4424 = vld [vmem:[%s2942 + $0x30] sm:$0xe]
        %v4425 = vld [vmem:[%s2942 + $0x3c] sm:$0xe]
        %v4426 = vld [vmem:[%s2942 + $0x48] sm:$0xe]
        %v4427 = vld [vmem:[%s2942 + $0x54] sm:$0xe]
        %v4428 = vld [vmem:[%s2942 + $0x60] sm:$0xe]
        %v4429 = vld [vmem:[%s2942 + $0x6c] sm:$0xe]
        %v4430 = vld [vmem:[%s2942 + $0x78] sm:$0xe]
        %v4431 = vld [vmem:[%s2942 + $0x84] sm:$0xe]
        %v4432 = vld [vmem:[%s2942 + $0x90] sm:$0xe]
        %v4433 = vld [vmem:[%s2942 + $0x9c] sm:$0xe]
        %v4434 = vld [vmem:[%s2942 + $0xa8] sm:$0xe]
        %v4435 = vld [vmem:[%s2942 + $0xb4] sm:$0xe]
        %v4484 = vrot.slane %v4420, 5
        %v4485 = vrot.slane %v4484, 4
        %v4486 = vrot.slane %v3989, 5
        %v4487 = vsel %vm3558, %v4485, %v4486
        %v4488 = vrot.slane %v4486, 4
        %v4489 = vrot.slane %v4020, 5
        %v4490 = vsel %vm3558, %v4488, %v4489
        %v4491 = vrot.slane %v4421, 5
        %v4492 = vrot.slane %v4491, 4
        %v4493 = vrot.slane %v3991, 5
        %v4494 = vsel %vm3558, %v4492, %v4493
        %v4495 = vrot.slane %v4493, 4
        %v4496 = vrot.slane %v4021, 5
        %v4497 = vsel %vm3558, %v4495, %v4496
        %v4498 = vrot.slane %v4422, 5
        %v4499 = vrot.slane %v4498, 4
        %v4500 = vrot.slane %v3993, 5
        %v4501 = vsel %vm3558, %v4499, %v4500
        %v4502 = vrot.slane %v4500, 4
        %v4503 = vrot.slane %v4022, 5
        %v4504 = vsel %vm3558, %v4502, %v4503
        %v4505 = vrot.slane %v4423, 5
        %v4506 = vrot.slane %v4505, 4
        %v4507 = vrot.slane %v3995, 5
        %v4508 = vsel %vm3558, %v4506, %v4507
        %v4509 = vrot.slane %v4507, 4
        %v4510 = vrot.slane %v4023, 5
        %v4511 = vsel %vm3558, %v4509, %v4510
        %v4512 = vrot.slane %v4424, 5
        %v4513 = vrot.slane %v4512, 4
        %v4514 = vrot.slane %v3997, 5
        %v4515 = vsel %vm3558, %v4513, %v4514
        %v4516 = vrot.slane %v4514, 4
        %v4517 = vrot.slane %v4024, 5
        %v4518 = vsel %vm3558, %v4516, %v4517
        %v4519 = vrot.slane %v4425, 5
        %v4520 = vrot.slane %v4519, 4
        %v4521 = vrot.slane %v3999, 5
        %v4522 = vsel %vm3558, %v4520, %v4521
        %v4523 = vrot.slane %v4521, 4
        %v4524 = vrot.slane %v4025, 5
        %v4525 = vsel %vm3558, %v4523, %v4524
        %v4526 = vrot.slane %v4426, 5
        %v4527 = vrot.slane %v4526, 4
        %v4528 = vrot.slane %v4001, 5
        %v4529 = vsel %vm3558, %v4527, %v4528
        %v4530 = vrot.slane %v4528, 4
        %v4531 = vrot.slane %v4026, 5
        %v4532 = vsel %vm3558, %v4530, %v4531
        %v4533 = vrot.slane %v4427, 5
        %v4534 = vrot.slane %v4533, 4
        %v4535 = vrot.slane %v4003, 5
        %v4536 = vsel %vm3558, %v4534, %v4535
        %v4537 = vrot.slane %v4535, 4
        %v4538 = vrot.slane %v4027, 5
        %v4539 = vsel %vm3558, %v4537, %v4538
        %v4540 = vrot.slane %v4428, 5
        %v4541 = vrot.slane %v4540, 4
        %v4542 = vrot.slane %v4005, 5
        %v4543 = vsel %vm3558, %v4541, %v4542
        %v4544 = vrot.slane %v4542, 4
        %v4545 = vrot.slane %v4028, 5
        %v4546 = vsel %vm3558, %v4544, %v4545
        %v4547 = vrot.slane %v4429, 5
        %v4548 = vrot.slane %v4547, 4
        %v4549 = vrot.slane %v4007, 5
        %v4550 = vsel %vm3558, %v4548, %v4549
        %v4551 = vrot.slane %v4549, 4
        %v4552 = vrot.slane %v4029, 5
        %v4553 = vsel %vm3558, %v4551, %v4552
        %v4554 = vrot.slane %v4430, 5
        %v4555 = vrot.slane %v4554, 4
        %v4556 = vrot.slane %v4009, 5
        %v4557 = vsel %vm3558, %v4555, %v4556
        %v4558 = vrot.slane %v4556, 4
        %v4559 = vrot.slane %v4030, 5
        %v4560 = vsel %vm3558, %v4558, %v4559
        %v4561 = vrot.slane %v4431, 5
        %v4562 = vrot.slane %v4561, 4
        %v4563 = vrot.slane %v4011, 5
        %v4564 = vsel %vm3558, %v4562, %v4563
        %v4565 = vrot.slane %v4563, 4
        %v4566 = vrot.slane %v4031, 5
        %v4567 = vsel %vm3558, %v4565, %v4566
        %v4568 = vrot.slane %v4432, 5
        %v4569 = vrot.slane %v4568, 4
        %v4570 = vrot.slane %v4013, 5
        %v4571 = vsel %vm3558, %v4569, %v4570
        %v4572 = vrot.slane %v4570, 4
        %v4573 = vrot.slane %v4032, 5
        %v4574 = vsel %vm3558, %v4572, %v4573
        %v4575 = vrot.slane %v4433, 5
        %v4576 = vrot.slane %v4575, 4
        %v4577 = vrot.slane %v4015, 5
        %v4578 = vsel %vm3558, %v4576, %v4577
        %v4579 = vrot.slane %v4577, 4
        %v4580 = vrot.slane %v4033, 5
        %v4581 = vsel %vm3558, %v4579, %v4580
        %v4582 = vrot.slane %v4434, 5
        %v4583 = vrot.slane %v4582, 4
        %v4584 = vrot.slane %v4017, 5
        %v4585 = vsel %vm3558, %v4583, %v4584
        %v4586 = vrot.slane %v4584, 4
        %v4587 = vrot.slane %v4034, 5
        %v4588 = vsel %vm3558, %v4586, %v4587
        %v4589 = vrot.slane %v4435, 5
        %v4590 = vrot.slane %v4589, 4
        %v4591 = vrot.slane %v4019, 5
        %v4592 = vsel %vm3558, %v4590, %v4591
        %v4593 = vrot.slane %v4591, 4
        %v4594 = vrot.slane %v4035, 5
        %v4595 = vsel %vm3558, %v4593, %v4594
        %v4612 = vunpack.c.l.b16 %v3988
        %v4613 = vunpack.c.l.b16 %v3989
        %v4614 = vunpack.c.l.b16 %v3990
        %v4615 = vunpack.c.l.b16 %v3991
        %v4616 = vunpack.c.l.b16 %v3992
        %v4617 = vunpack.c.l.b16 %v3993
        %v4618 = vunpack.c.l.b16 %v3994
        %v4619 = vunpack.c.l.b16 %v3995
        %v4620 = vunpack.c.l.b16 %v3996
        %v4621 = vunpack.c.l.b16 %v3997
        %v4622 = vunpack.c.l.b16 %v3998
        %v4623 = vunpack.c.l.b16 %v3999
        %v4624 = vunpack.c.l.b16 %v4000
        %v4625 = vunpack.c.l.b16 %v4001
        %v4626 = vunpack.c.l.b16 %v4002
        %v4627 = vunpack.c.l.b16 %v4003
        %v4628 = vunpack.c.l.b16 %v4004
        %v4629 = vunpack.c.l.b16 %v4005
        %v4630 = vunpack.c.l.b16 %v4006
        %v4631 = vunpack.c.l.b16 %v4007
        %v4632 = vunpack.c.l.b16 %v4008
        %v4633 = vunpack.c.l.b16 %v4009
        %v4634 = vunpack.c.l.b16 %v4010
        %v4635 = vunpack.c.l.b16 %v4011
        %v4636 = vunpack.c.l.b16 %v4012
        %v4637 = vunpack.c.l.b16 %v4013
        %v4638 = vunpack.c.l.b16 %v4014
        %v4639 = vunpack.c.l.b16 %v4015
        %v4640 = vunpack.c.l.b16 %v4016
        %v4641 = vunpack.c.l.b16 %v4017
        %v4642 = vunpack.c.l.b16 %v4018
        %v4643 = vunpack.c.l.b16 %v4019
        %v4644 = vpack.c.b16 %v4613, %v4612
        %v4645 = vpack.c.b16 %v4615, %v4614
        %v4646 = vpack.c.b16 %v4617, %v4616
        %v4647 = vpack.c.b16 %v4619, %v4618
        %v4648 = vpack.c.b16 %v4621, %v4620
        %v4649 = vpack.c.b16 %v4623, %v4622
        %v4650 = vpack.c.b16 %v4625, %v4624
        %v4651 = vpack.c.b16 %v4627, %v4626
        %v4652 = vpack.c.b16 %v4629, %v4628
        %v4653 = vpack.c.b16 %v4631, %v4630
        %v4654 = vpack.c.b16 %v4633, %v4632
        %v4655 = vpack.c.b16 %v4635, %v4634
        %v4656 = vpack.c.b16 %v4637, %v4636
        %v4657 = vpack.c.b16 %v4639, %v4638
        %v4658 = vpack.c.b16 %v4641, %v4640
        %v4659 = vpack.c.b16 %v4643, %v4642
        %v4660 = vunpack.c.l.b16 %v4049
        %v4661 = vunpack.c.l.b16 %v4059
        %v4662 = vunpack.c.l.b16 %v4073
        %v4663 = vunpack.c.l.b16 %v4083
        %v4664 = vunpack.c.l.b16 %v4097
        %v4665 = vunpack.c.l.b16 %v4107
        %v4666 = vunpack.c.l.b16 %v4121
        %v4667 = vunpack.c.l.b16 %v4131
        %v4668 = vunpack.c.l.b16 %v4145
        %v4669 = vunpack.c.l.b16 %v4155
        %v4670 = vunpack.c.l.b16 %v4169
        %v4671 = vunpack.c.l.b16 %v4179
        %v4672 = vunpack.c.l.b16 %v4193
        %v4673 = vunpack.c.l.b16 %v4203
        %v4674 = vunpack.c.l.b16 %v4217
        %v4675 = vunpack.c.l.b16 %v4227
        %v4676 = vunpack.c.l.b16 %v4241
        %v4677 = vunpack.c.l.b16 %v4251
        %v4678 = vunpack.c.l.b16 %v4265
        %v4679 = vunpack.c.l.b16 %v4275
        %v4680 = vunpack.c.l.b16 %v4289
        %v4681 = vunpack.c.l.b16 %v4299
        %v4682 = vunpack.c.l.b16 %v4313
        %v4683 = vunpack.c.l.b16 %v4323
        %v4684 = vunpack.c.l.b16 %v4337
        %v4685 = vunpack.c.l.b16 %v4347
        %v4686 = vunpack.c.l.b16 %v4361
        %v4687 = vunpack.c.l.b16 %v4371
        %v4688 = vunpack.c.l.b16 %v4385
        %v4689 = vunpack.c.l.b16 %v4395
        %v4690 = vunpack.c.l.b16 %v4409
        %v4691 = vunpack.c.l.b16 %v4419
        %v4692 = vpack.c.b16 %v4661, %v4660
        %v4693 = vpack.c.b16 %v4663, %v4662
        %v4694 = vpack.c.b16 %v4665, %v4664
        %v4695 = vpack.c.b16 %v4667, %v4666
        %v4696 = vpack.c.b16 %v4669, %v4668
        %v4697 = vpack.c.b16 %v4671, %v4670
        %v4698 = vpack.c.b16 %v4673, %v4672
        %v4699 = vpack.c.b16 %v4675, %v4674
        %v4700 = vpack.c.b16 %v4677, %v4676
        %v4701 = vpack.c.b16 %v4679, %v4678
        %v4702 = vpack.c.b16 %v4681, %v4680
        %v4703 = vpack.c.b16 %v4683, %v4682
        %v4704 = vpack.c.b16 %v4685, %v4684
        %v4705 = vpack.c.b16 %v4687, %v4686
        %v4706 = vpack.c.b16 %v4689, %v4688
        %v4707 = vpack.c.b16 %v4691, %v4690
        %4708 = vrot.lane.b32.xlu0 %v4692, 32
        %v4709 = vpop.permute.xlu0 %4708
        %4710 = vrot.lane.b32.xlu0 %v4693, 32
        %v4711 = vpop.permute.xlu0 %4710
        %4712 = vrot.lane.b32.xlu0 %v4694, 32
        %v4713 = vpop.permute.xlu0 %4712
        %4714 = vrot.lane.b32.xlu0 %v4695, 32
        %v4715 = vpop.permute.xlu0 %4714
        %4716 = vrot.lane.b32.xlu0 %v4696, 32
        %v4717 = vpop.permute.xlu0 %4716
        %4718 = vrot.lane.b32.xlu0 %v4697, 32
        %v4719 = vpop.permute.xlu0 %4718
        %4720 = vrot.lane.b32.xlu0 %v4698, 32
        %v4721 = vpop.permute.xlu0 %4720
        %4722 = vrot.lane.b32.xlu0 %v4699, 32
        %v4723 = vpop.permute.xlu0 %4722
        %4724 = vrot.lane.b32.xlu0 %v4700, 32
        %v4725 = vpop.permute.xlu0 %4724
        %4726 = vrot.lane.b32.xlu0 %v4701, 32
        %v4727 = vpop.permute.xlu0 %4726
        %4728 = vrot.lane.b32.xlu0 %v4702, 32
        %v4729 = vpop.permute.xlu0 %4728
        %4730 = vrot.lane.b32.xlu0 %v4703, 32
        %v4731 = vpop.permute.xlu0 %4730
        %4732 = vrot.lane.b32.xlu0 %v4704, 32
        %v4733 = vpop.permute.xlu0 %4732
        %4734 = vrot.lane.b32.xlu0 %v4705, 32
        %v4735 = vpop.permute.xlu0 %4734
        %4736 = vrot.lane.b32.xlu0 %v4706, 32
        %v4737 = vpop.permute.xlu0 %4736
        %4738 = vrot.lane.b32.xlu0 %v4707, 32
        %v4739 = vpop.permute.xlu0 %4738
        %v4740 = vunpack.c.l.b16 %v4487
        %v4741 = vunpack.c.l.b16 %v4490
        %v4742 = vunpack.c.l.b16 %v4494
        %v4743 = vunpack.c.l.b16 %v4497
        %v4744 = vunpack.c.l.b16 %v4501
        %v4745 = vunpack.c.l.b16 %v4504
        %v4746 = vunpack.c.l.b16 %v4508
        %v4747 = vunpack.c.l.b16 %v4511
        %v4748 = vunpack.c.l.b16 %v4515
        %v4749 = vunpack.c.l.b16 %v4518
        %v4750 = vunpack.c.l.b16 %v4522
        %v4751 = vunpack.c.l.b16 %v4525
        %v4752 = vunpack.c.l.b16 %v4529
        %v4753 = vunpack.c.l.b16 %v4532
        %v4754 = vunpack.c.l.b16 %v4536
        %v4755 = vunpack.c.l.b16 %v4539
        %v4756 = vunpack.c.l.b16 %v4543
        %v4757 = vunpack.c.l.b16 %v4546
        %v4758 = vunpack.c.l.b16 %v4550
        %v4759 = vunpack.c.l.b16 %v4553
        %v4760 = vunpack.c.l.b16 %v4557
        %v4761 = vunpack.c.l.b16 %v4560
        %v4762 = vunpack.c.l.b16 %v4564
        %v4763 = vunpack.c.l.b16 %v4567
        %v4764 = vunpack.c.l.b16 %v4571
        %v4765 = vunpack.c.l.b16 %v4574
        %v4766 = vunpack.c.l.b16 %v4578
        %v4767 = vunpack.c.l.b16 %v4581
        %v4768 = vunpack.c.l.b16 %v4585
        %v4769 = vunpack.c.l.b16 %v4588
        %v4770 = vunpack.c.l.b16 %v4592
        %v4771 = vunpack.c.l.b16 %v4595
        %v4772 = vpack.c.b16 %v4741, %v4740
        %v4773 = vpack.c.b16 %v4743, %v4742
        %v4774 = vpack.c.b16 %v4745, %v4744
        %v4775 = vpack.c.b16 %v4747, %v4746
        %v4776 = vpack.c.b16 %v4749, %v4748
        %v4777 = vpack.c.b16 %v4751, %v4750
        %v4778 = vpack.c.b16 %v4753, %v4752
        %v4779 = vpack.c.b16 %v4755, %v4754
        %v4780 = vpack.c.b16 %v4757, %v4756
        %v4781 = vpack.c.b16 %v4759, %v4758
        %v4782 = vpack.c.b16 %v4761, %v4760
        %v4783 = vpack.c.b16 %v4763, %v4762
        %v4784 = vpack.c.b16 %v4765, %v4764
        %v4785 = vpack.c.b16 %v4767, %v4766
        %v4786 = vpack.c.b16 %v4769, %v4768
        %v4787 = vpack.c.b16 %v4771, %v4770
        %4788 = vrot.lane.b32.xlu0 %v4772, 64
        %v4789 = vpop.permute.xlu0 %4788
        %4790 = vrot.lane.b32.xlu0 %v4773, 64
        %v4791 = vpop.permute.xlu0 %4790
        %4792 = vrot.lane.b32.xlu0 %v4774, 64
        %v4793 = vpop.permute.xlu0 %4792
        %4794 = vrot.lane.b32.xlu0 %v4775, 64
        %v4795 = vpop.permute.xlu0 %4794
        %4796 = vrot.lane.b32.xlu0 %v4776, 64
        %v4797 = vpop.permute.xlu0 %4796
        %4798 = vrot.lane.b32.xlu0 %v4777, 64
        %v4799 = vpop.permute.xlu0 %4798
        %4800 = vrot.lane.b32.xlu0 %v4778, 64
        %v4801 = vpop.permute.xlu0 %4800
        %4802 = vrot.lane.b32.xlu0 %v4779, 64
        %v4803 = vpop.permute.xlu0 %4802
        %4804 = vrot.lane.b32.xlu0 %v4780, 64
        %v4805 = vpop.permute.xlu0 %4804
        %4806 = vrot.lane.b32.xlu0 %v4781, 64
        %v4807 = vpop.permute.xlu0 %4806
        %4808 = vrot.lane.b32.xlu0 %v4782, 64
        %v4809 = vpop.permute.xlu0 %4808
        %4810 = vrot.lane.b32.xlu0 %v4783, 64
        %v4811 = vpop.permute.xlu0 %4810
        %4812 = vrot.lane.b32.xlu0 %v4784, 64
        %v4813 = vpop.permute.xlu0 %4812
        %4814 = vrot.lane.b32.xlu0 %v4785, 64
        %v4815 = vpop.permute.xlu0 %4814
        %4816 = vrot.lane.b32.xlu0 %v4786, 64
        %v4817 = vpop.permute.xlu0 %4816
        %4818 = vrot.lane.b32.xlu0 %v4787, 64
        %v4819 = vpop.permute.xlu0 %4818
        %v4822 = vsel %vm2141, %v4644, %v4709
        %v4825 = vsel %vm2141, %v4645, %v4711
        %v4828 = vsel %vm2141, %v4646, %v4713
        %v4831 = vsel %vm2141, %v4647, %v4715
        %v4834 = vsel %vm2141, %v4648, %v4717
        %v4837 = vsel %vm2141, %v4649, %v4719
        %v4840 = vsel %vm2141, %v4650, %v4721
        %v4843 = vsel %vm2141, %v4651, %v4723
        %v4846 = vsel %vm2141, %v4652, %v4725
        %v4849 = vsel %vm2141, %v4653, %v4727
        %v4852 = vsel %vm2141, %v4654, %v4729
        %v4855 = vsel %vm2141, %v4655, %v4731
        %v4858 = vsel %vm2141, %v4656, %v4733
        %v4861 = vsel %vm2141, %v4657, %v4735
        %v4864 = vsel %vm2141, %v4658, %v4737
        %v4867 = vsel %vm2141, %v4659, %v4739
        %v4869 = vsel %vm3943, %v4822, %v4789
        %v4871 = vsel %vm3943, %v4825, %v4791
        %v4873 = vsel %vm3943, %v4828, %v4793
        %v4875 = vsel %vm3943, %v4831, %v4795
        %v4877 = vsel %vm3943, %v4834, %v4797
        %v4879 = vsel %vm3943, %v4837, %v4799
        %v4881 = vsel %vm3943, %v4840, %v4801
        %v4883 = vsel %vm3943, %v4843, %v4803
        %v4885 = vsel %vm3943, %v4846, %v4805
        %v4887 = vsel %vm3943, %v4849, %v4807
        %v4889 = vsel %vm3943, %v4852, %v4809
        %v4891 = vsel %vm3943, %v4855, %v4811
        %v4893 = vsel %vm3943, %v4858, %v4813
        %v4895 = vsel %vm3943, %v4861, %v4815
        %v4897 = vsel %vm3943, %v4864, %v4817
        %v4899 = vsel %vm3943, %v4867, %v4819
        %v4900 = vld [vmem:[%s2 + $0x30] sm:$0xf]
        %v4901 = vld [vmem:[%s2 + $0x34] sm:$0xf]
        %v4902 = vld [vmem:[%s2 + $0x38] sm:$0xf]
        %v4903 = vld [vmem:[%s2 + $0x3c] sm:$0xf]
        %v4904 = vld [vmem:[%s2 + $0x40] sm:$0xf]
        %v4905 = vld [vmem:[%s2 + $0x44] sm:$0xf]
        %v4906 = vld [vmem:[%s2 + $0x48] sm:$0xf]
        %v4907 = vld [vmem:[%s2 + $0x4c] sm:$0xf]
        %v4908 = vld [vmem:[%s2 + $0x50] sm:$0xf]
        %v4909 = vld [vmem:[%s2 + $0x54] sm:$0xf]
        %v4910 = vld [vmem:[%s2 + $0x58] sm:$0xf]
        %v4911 = vld [vmem:[%s2 + $0x5c] sm:$0xf]
        %v4924 = vunpack.c.l.b16 %v4900
        %v4925 = vunpack.c.l.b16 %v4901
        %v4926 = vunpack.c.l.b16 %v4902
        %v4927 = vunpack.c.l.b16 %v4903
        %v4928 = vunpack.c.l.b16 %v4904
        %v4929 = vunpack.c.l.b16 %v4905
        %v4930 = vunpack.c.l.b16 %v4906
        %v4931 = vunpack.c.l.b16 %v4907
        %v4932 = vunpack.c.l.b16 %v4908
        %v4933 = vunpack.c.l.b16 %v4909
        %v4934 = vunpack.c.l.b16 %v4910
        %v4935 = vunpack.c.l.b16 %v4911
        %v4936 = vpack.c.b16 %v4925, %v4924
        %v4937 = vpack.c.b16 %v4927, %v4926
        %v4938 = vpack.c.b16 %v4929, %v4928
        %v4939 = vpack.c.b16 %v4931, %v4930
        %v4940 = vpack.c.b16 %v4933, %v4932
        %v4941 = vpack.c.b16 %v4935, %v4934
        %vm4948 = vcmask 785408
        %v4949 = vsel %vm4948, %v4869, 0
        %v4951 = vsel %vm4948, %v4871, 0
        %v4953 = vsel %vm4948, %v4873, 0
        %v4955 = vsel %vm4948, %v4875, 0
        %v4957 = vsel %vm4948, %v4877, 0
        %v4959 = vsel %vm4948, %v4879, 0
        %v4961 = vsel %vm4948, %v4881, 0
        %v4963 = vsel %vm4948, %v4883, 0
        %v4965 = vsel %vm4948, %v4885, 0
        %v4967 = vsel %vm4948, %v4887, 0
        %v4969 = vsel %vm4948, %v4889, 0
        %v4971 = vsel %vm4948, %v4891, 0
        %v4973 = vsel %vm4948, %v4893, 0
        %v4975 = vsel %vm4948, %v4895, 0
        %v4977 = vsel %vm4948, %v4897, 0
        %v4979 = vsel %vm4948, %v4899, 0
        %4981 = vmatpush.bf16.msra.mxu0 0
        %4982 = vmatpush.bf16.msra.mxu0 0
        %4983 = vmatpush.bf16.msra.mxu0 %v4941
        %4984 = vmatpush.bf16.msra.mxu0 %v4940
        %4985 = vmatpush.bf16.msra.mxu0 %v4939
        %4986 = vmatpush.bf16.msra.mxu0 %v4938
        %4987 = vmatpush.bf16.msra.mxu0 %v4937
        %4988 = vmatpush.bf16.msra.mxu0 %v4936
        %4989 = vmatmul.bf16.gmra.mxu0 %v4949
        %v4990 = vpop.f32.mrf.mxu0
        %v4991 = vadd.f32 0.0, %v4990
        %v4992 = vpop.f32.mrf.mxu0
        %v4993 = vadd.f32 0.0, %v4992
        %4994 = vmatmul.bf16.gmra.mxu0 %v4951
        %v4995 = vpop.f32.mrf.mxu0
        %v4996 = vadd.f32 0.0, %v4995
        %v4997 = vpop.f32.mrf.mxu0
        %v4998 = vadd.f32 0.0, %v4997
        %4999 = vmatmul.bf16.gmra.mxu0 %v4953
        %v5000 = vpop.f32.mrf.mxu0
        %v5001 = vadd.f32 0.0, %v5000
        %v5002 = vpop.f32.mrf.mxu0
        %v5003 = vadd.f32 0.0, %v5002
        %5004 = vmatmul.bf16.gmra.mxu0 %v4955
        %v5005 = vpop.f32.mrf.mxu0
        %v5006 = vadd.f32 0.0, %v5005
        %v5007 = vpop.f32.mrf.mxu0
        %v5008 = vadd.f32 0.0, %v5007
        %5009 = vmatmul.bf16.gmra.mxu0 %v4957
        %v5010 = vpop.f32.mrf.mxu0
        %v5011 = vadd.f32 0.0, %v5010
        %v5012 = vpop.f32.mrf.mxu0
        %v5013 = vadd.f32 0.0, %v5012
        %5014 = vmatmul.bf16.gmra.mxu0 %v4959
        %v5015 = vpop.f32.mrf.mxu0
        %v5016 = vadd.f32 0.0, %v5015
        %v5017 = vpop.f32.mrf.mxu0
        %v5018 = vadd.f32 0.0, %v5017
        %5019 = vmatmul.bf16.gmra.mxu0 %v4961
        %v5020 = vpop.f32.mrf.mxu0
        %v5021 = vadd.f32 0.0, %v5020
        %v5022 = vpop.f32.mrf.mxu0
        %v5023 = vadd.f32 0.0, %v5022
        %5024 = vmatmul.bf16.gmra.mxu0 %v4963
        %v5025 = vpop.f32.mrf.mxu0
        %v5026 = vadd.f32 0.0, %v5025
        %v5027 = vpop.f32.mrf.mxu0
        %v5028 = vadd.f32 0.0, %v5027
        %5029 = vmatmul.bf16.gmra.mxu0 %v4965
        %v5030 = vpop.f32.mrf.mxu0
        %v5031 = vadd.f32 0.0, %v5030
        %v5032 = vpop.f32.mrf.mxu0
        %v5033 = vadd.f32 0.0, %v5032
        %5034 = vmatmul.bf16.gmra.mxu0 %v4967
        %v5035 = vpop.f32.mrf.mxu0
        %v5036 = vadd.f32 0.0, %v5035
        %v5037 = vpop.f32.mrf.mxu0
        %v5038 = vadd.f32 0.0, %v5037
        %5039 = vmatmul.bf16.gmra.mxu0 %v4969
        %v5040 = vpop.f32.mrf.mxu0
        %v5041 = vadd.f32 0.0, %v5040
        %v5042 = vpop.f32.mrf.mxu0
        %v5043 = vadd.f32 0.0, %v5042
        %5044 = vmatmul.bf16.gmra.mxu0 %v4971
        %v5045 = vpop.f32.mrf.mxu0
        %v5046 = vadd.f32 0.0, %v5045
        %v5047 = vpop.f32.mrf.mxu0
        %v5048 = vadd.f32 0.0, %v5047
        %5049 = vmatmul.bf16.gmra.mxu0 %v4973
        %v5050 = vpop.f32.mrf.mxu0
        %v5051 = vadd.f32 0.0, %v5050
        %v5052 = vpop.f32.mrf.mxu0
        %v5053 = vadd.f32 0.0, %v5052
        %5054 = vmatmul.bf16.gmra.mxu0 %v4975
        %v5055 = vpop.f32.mrf.mxu0
        %v5056 = vadd.f32 0.0, %v5055
        %v5057 = vpop.f32.mrf.mxu0
        %v5058 = vadd.f32 0.0, %v5057
        %5059 = vmatmul.bf16.gmra.mxu0 %v4977
        %v5060 = vpop.f32.mrf.mxu0
        %v5061 = vadd.f32 0.0, %v5060
        %v5062 = vpop.f32.mrf.mxu0
        %v5063 = vadd.f32 0.0, %v5062
        %5064 = vmatmul.bf16.gmra.mxu0 %v4979
        %v5065 = vpop.f32.mrf.mxu0
        %v5066 = vadd.f32 0.0, %v5065
        %v5067 = vpop.f32.mrf.mxu0
        %v5068 = vadd.f32 0.0, %v5067
        %5069 = vdwg.mxu0
        %v5082 = vunpack.c.l.b16 %v3976
        %v5083 = vunpack.c.l.b16 %v3977
        %v5084 = vunpack.c.l.b16 %v3978
        %v5085 = vunpack.c.l.b16 %v3979
        %v5086 = vunpack.c.l.b16 %v3980
        %v5087 = vunpack.c.l.b16 %v3981
        %v5088 = vunpack.c.l.b16 %v3982
        %v5089 = vunpack.c.l.b16 %v3983
        %v5090 = vunpack.c.l.b16 %v3984
        %v5091 = vunpack.c.l.b16 %v3985
        %v5092 = vunpack.c.l.b16 %v3986
        %v5093 = vunpack.c.l.b16 %v3987
        %v5094 = vpack.c.b16 %v5083, %v5082
        %v5095 = vpack.c.b16 %v5085, %v5084
        %v5096 = vpack.c.b16 %v5087, %v5086
        %v5097 = vpack.c.b16 %v5089, %v5088
        %v5098 = vpack.c.b16 %v5091, %v5090
        %v5099 = vpack.c.b16 %v5093, %v5092
        %v5106 = vsel %vm4948, %v3945, 0
        %v5108 = vsel %vm4948, %v3947, 0
        %v5110 = vsel %vm4948, %v3949, 0
        %v5112 = vsel %vm4948, %v3951, 0
        %v5114 = vsel %vm4948, %v3953, 0
        %v5116 = vsel %vm4948, %v3955, 0
        %v5118 = vsel %vm4948, %v3957, 0
        %v5120 = vsel %vm4948, %v3959, 0
        %v5122 = vsel %vm4948, %v3961, 0
        %v5124 = vsel %vm4948, %v3963, 0
        %v5126 = vsel %vm4948, %v3965, 0
        %v5128 = vsel %vm4948, %v3967, 0
        %v5130 = vsel %vm4948, %v3969, 0
        %v5132 = vsel %vm4948, %v3971, 0
        %v5134 = vsel %vm4948, %v3973, 0
        %v5136 = vsel %vm4948, %v3975, 0
        %5138 = vmatpush.bf16.msra.mxu0 0
        %5139 = vmatpush.bf16.msra.mxu0 0
        %5140 = vmatpush.bf16.msra.mxu0 %v5099
        %5141 = vmatpush.bf16.msra.mxu0 %v5098
        %5142 = vmatpush.bf16.msra.mxu0 %v5097
        %5143 = vmatpush.bf16.msra.mxu0 %v5096
        %5144 = vmatpush.bf16.msra.mxu0 %v5095
        %5145 = vmatpush.bf16.msra.mxu0 %v5094
        %5146 = vmatmul.bf16.gmra.mxu0 %v5106
        %v5147 = vpop.f32.mrf.mxu0
        %v5148 = vadd.f32 %v4991, %v5147
        %v5149 = vpop.f32.mrf.mxu0
        %v5150 = vadd.f32 %v4993, %v5149
        %5151 = vmatmul.bf16.gmra.mxu0 %v5108
        %v5152 = vpop.f32.mrf.mxu0
        %v5153 = vadd.f32 %v4996, %v5152
        %v5154 = vpop.f32.mrf.mxu0
        %v5155 = vadd.f32 %v4998, %v5154
        %5156 = vmatmul.bf16.gmra.mxu0 %v5110
        %v5157 = vpop.f32.mrf.mxu0
        %v5158 = vadd.f32 %v5001, %v5157
        %v5159 = vpop.f32.mrf.mxu0
        %v5160 = vadd.f32 %v5003, %v5159
        %5161 = vmatmul.bf16.gmra.mxu0 %v5112
        %v5162 = vpop.f32.mrf.mxu0
        %v5163 = vadd.f32 %v5006, %v5162
        %v5164 = vpop.f32.mrf.mxu0
        %v5165 = vadd.f32 %v5008, %v5164
        %5166 = vmatmul.bf16.gmra.mxu0 %v5114
        %v5167 = vpop.f32.mrf.mxu0
        %v5168 = vadd.f32 %v5011, %v5167
        %v5169 = vpop.f32.mrf.mxu0
        %v5170 = vadd.f32 %v5013, %v5169
        %5171 = vmatmul.bf16.gmra.mxu0 %v5116
        %v5172 = vpop.f32.mrf.mxu0
        %v5173 = vadd.f32 %v5016, %v5172
        %v5174 = vpop.f32.mrf.mxu0
        %v5175 = vadd.f32 %v5018, %v5174
        %5176 = vmatmul.bf16.gmra.mxu0 %v5118
        %v5177 = vpop.f32.mrf.mxu0
        %v5178 = vadd.f32 %v5021, %v5177
        %v5179 = vpop.f32.mrf.mxu0
        %v5180 = vadd.f32 %v5023, %v5179
        %5181 = vmatmul.bf16.gmra.mxu0 %v5120
        %v5182 = vpop.f32.mrf.mxu0
        %v5183 = vadd.f32 %v5026, %v5182
        %v5184 = vpop.f32.mrf.mxu0
        %v5185 = vadd.f32 %v5028, %v5184
        %5186 = vmatmul.bf16.gmra.mxu0 %v5122
        %v5187 = vpop.f32.mrf.mxu0
        %v5188 = vadd.f32 %v5031, %v5187
        %v5189 = vpop.f32.mrf.mxu0
        %v5190 = vadd.f32 %v5033, %v5189
        %5191 = vmatmul.bf16.gmra.mxu0 %v5124
        %v5192 = vpop.f32.mrf.mxu0
        %v5193 = vadd.f32 %v5036, %v5192
        %v5194 = vpop.f32.mrf.mxu0
        %v5195 = vadd.f32 %v5038, %v5194
        %5196 = vmatmul.bf16.gmra.mxu0 %v5126
        %v5197 = vpop.f32.mrf.mxu0
        %v5198 = vadd.f32 %v5041, %v5197
        %v5199 = vpop.f32.mrf.mxu0
        %v5200 = vadd.f32 %v5043, %v5199
        %5201 = vmatmul.bf16.gmra.mxu0 %v5128
        %v5202 = vpop.f32.mrf.mxu0
        %v5203 = vadd.f32 %v5046, %v5202
        %v5204 = vpop.f32.mrf.mxu0
        %v5205 = vadd.f32 %v5048, %v5204
        %5206 = vmatmul.bf16.gmra.mxu0 %v5130
        %v5207 = vpop.f32.mrf.mxu0
        %v5208 = vadd.f32 %v5051, %v5207
        %v5209 = vpop.f32.mrf.mxu0
        %v5210 = vadd.f32 %v5053, %v5209
        %5211 = vmatmul.bf16.gmra.mxu0 %v5132
        %v5212 = vpop.f32.mrf.mxu0
        %v5213 = vadd.f32 %v5056, %v5212
        %v5214 = vpop.f32.mrf.mxu0
        %v5215 = vadd.f32 %v5058, %v5214
        %5216 = vmatmul.bf16.gmra.mxu0 %v5134
        %v5217 = vpop.f32.mrf.mxu0
        %v5218 = vadd.f32 %v5061, %v5217
        %v5219 = vpop.f32.mrf.mxu0
        %v5220 = vadd.f32 %v5063, %v5219
        %5221 = vmatmul.bf16.gmra.mxu0 %v5136
        %v5222 = vpop.f32.mrf.mxu0
        %v5223 = vadd.f32 %v5066, %v5222
        %v5224 = vpop.f32.mrf.mxu0
        %v5225 = vadd.f32 %v5068, %v5224
        %5226 = vdwg.mxu0
        %s5227 = scalar_lea.vmem [#allocation3], 24
        %v5228 = vld [vmem:[%s5227] sm:$0xf]
        %v5229 = vld [vmem:[%s5227 + $0x4] sm:$0xf]
        %v5230 = vld [vmem:[%s5227 + $0xc] sm:$0xf]
        %v5231 = vld [vmem:[%s5227 + $0x10] sm:$0xf]
        %v5232 = vld [vmem:[%s5227 + $0x18] sm:$0xf]
        %v5233 = vld [vmem:[%s5227 + $0x1c] sm:$0xf]
        %v5234 = vld [vmem:[%s5227 + $0x24] sm:$0xf]
        %v5235 = vld [vmem:[%s5227 + $0x28] sm:$0xf]
        %v5236 = vld [vmem:[%s5227 + $0x30] sm:$0xf]
        %v5237 = vld [vmem:[%s5227 + $0x34] sm:$0xf]
        %v5238 = vld [vmem:[%s5227 + $0x3c] sm:$0xf]
        %v5239 = vld [vmem:[%s5227 + $0x40] sm:$0xf]
        %v5240 = vld [vmem:[%s5227 + $0x48] sm:$0xf]
        %v5241 = vld [vmem:[%s5227 + $0x4c] sm:$0xf]
        %v5242 = vld [vmem:[%s5227 + $0x54] sm:$0xf]
        %v5243 = vld [vmem:[%s5227 + $0x58] sm:$0xf]
        %v5244 = vld [vmem:[%s5227 + $0x60] sm:$0xf]
        %v5245 = vld [vmem:[%s5227 + $0x64] sm:$0xf]
        %v5246 = vld [vmem:[%s5227 + $0x6c] sm:$0xf]
        %v5247 = vld [vmem:[%s5227 + $0x70] sm:$0xf]
        %v5248 = vld [vmem:[%s5227 + $0x78] sm:$0xf]
        %v5249 = vld [vmem:[%s5227 + $0x7c] sm:$0xf]
        %v5250 = vld [vmem:[%s5227 + $0x84] sm:$0xf]
        %v5251 = vld [vmem:[%s5227 + $0x88] sm:$0xf]
        %v5252 = vld [vmem:[%s5227 + $0x90] sm:$0xf]
        %v5253 = vld [vmem:[%s5227 + $0x94] sm:$0xf]
        %v5254 = vld [vmem:[%s5227 + $0x9c] sm:$0xf]
        %v5255 = vld [vmem:[%s5227 + $0xa0] sm:$0xf]
        %v5256 = vld [vmem:[%s5227 + $0xa8] sm:$0xf]
        %v5257 = vld [vmem:[%s5227 + $0xac] sm:$0xf]
        %v5258 = vld [vmem:[%s5227 + $0xb4] sm:$0xf]
        %v5259 = vld [vmem:[%s5227 + $0xb8] sm:$0xf]
        %v5260 = vld [vmem:[%s5227 + $0x8] sm:$0x1]
        %v5261 = vld [vmem:[%s5227 + $0x14] sm:$0x1]
        %v5262 = vld [vmem:[%s5227 + $0x20] sm:$0x1]
        %v5263 = vld [vmem:[%s5227 + $0x2c] sm:$0x1]
        %v5264 = vld [vmem:[%s5227 + $0x38] sm:$0x1]
        %v5265 = vld [vmem:[%s5227 + $0x44] sm:$0x1]
        %v5266 = vld [vmem:[%s5227 + $0x50] sm:$0x1]
        %v5267 = vld [vmem:[%s5227 + $0x5c] sm:$0x1]
        %v5268 = vld [vmem:[%s5227 + $0x68] sm:$0x1]
        %v5269 = vld [vmem:[%s5227 + $0x74] sm:$0x1]
        %v5270 = vld [vmem:[%s5227 + $0x80] sm:$0x1]
        %v5271 = vld [vmem:[%s5227 + $0x8c] sm:$0x1]
        %v5272 = vld [vmem:[%s5227 + $0x98] sm:$0x1]
        %v5273 = vld [vmem:[%s5227 + $0xa4] sm:$0x1]
        %v5274 = vld [vmem:[%s5227 + $0xb0] sm:$0x1]
        %v5275 = vld [vmem:[%s5227 + $0xbc] sm:$0x1]
        %v5277 = vshrl.u32 %v5228, 16
        %v5279 = vrot.slane %v5277, 4
        %v5280 = vshll.u32 %v5228, 16
        %v5282 = vrot.slane %v5280, 5
        %v5283 = vor.u32 %v5279, %v5282
        %v5284 = vrot.slane %v5283, 4
        %v5286 = vshll.u32 %v5229, 16
        %v5288 = vrot.slane %v5286, 5
        %v5289 = vsel %vm3107, %v5284, %v5288
        %v5290 = vshrl.u32 %v5229, 16
        %v5292 = vrot.slane %v5290, 4
        %v5293 = vor.u32 %v5292, %v5288
        %v5294 = vrot.slane %v5293, 4
        %v5296 = vshll.u32 %v5260, 16
        %v5298 = vrot.slane %v5296, 5
        %v5299 = vsel %vm3107, %v5294, %v5298
        %v5301 = vshrl.u32 %v5230, 16
        %v5303 = vrot.slane %v5301, 4
        %v5304 = vshll.u32 %v5230, 16
        %v5306 = vrot.slane %v5304, 5
        %v5307 = vor.u32 %v5303, %v5306
        %v5308 = vrot.slane %v5307, 4
        %v5310 = vshll.u32 %v5231, 16
        %v5312 = vrot.slane %v5310, 5
        %v5313 = vsel %vm3107, %v5308, %v5312
        %v5314 = vshrl.u32 %v5231, 16
        %v5316 = vrot.slane %v5314, 4
        %v5317 = vor.u32 %v5316, %v5312
        %v5318 = vrot.slane %v5317, 4
        %v5320 = vshll.u32 %v5261, 16
        %v5322 = vrot.slane %v5320, 5
        %v5323 = vsel %vm3107, %v5318, %v5322
        %v5325 = vshrl.u32 %v5232, 16
        %v5327 = vrot.slane %v5325, 4
        %v5328 = vshll.u32 %v5232, 16
        %v5330 = vrot.slane %v5328, 5
        %v5331 = vor.u32 %v5327, %v5330
        %v5332 = vrot.slane %v5331, 4
        %v5334 = vshll.u32 %v5233, 16
        %v5336 = vrot.slane %v5334, 5
        %v5337 = vsel %vm3107, %v5332, %v5336
        %v5338 = vshrl.u32 %v5233, 16
        %v5340 = vrot.slane %v5338, 4
        %v5341 = vor.u32 %v5340, %v5336
        %v5342 = vrot.slane %v5341, 4
        %v5344 = vshll.u32 %v5262, 16
        %v5346 = vrot.slane %v5344, 5
        %v5347 = vsel %vm3107, %v5342, %v5346
        %v5349 = vshrl.u32 %v5234, 16
        %v5351 = vrot.slane %v5349, 4
        %v5352 = vshll.u32 %v5234, 16
        %v5354 = vrot.slane %v5352, 5
        %v5355 = vor.u32 %v5351, %v5354
        %v5356 = vrot.slane %v5355, 4
        %v5358 = vshll.u32 %v5235, 16
        %v5360 = vrot.slane %v5358, 5
        %v5361 = vsel %vm3107, %v5356, %v5360
        %v5362 = vshrl.u32 %v5235, 16
        %v5364 = vrot.slane %v5362, 4
        %v5365 = vor.u32 %v5364, %v5360
        %v5366 = vrot.slane %v5365, 4
        %v5368 = vshll.u32 %v5263, 16
        %v5370 = vrot.slane %v5368, 5
        %v5371 = vsel %vm3107, %v5366, %v5370
        %v5373 = vshrl.u32 %v5236, 16
        %v5375 = vrot.slane %v5373, 4
        %v5376 = vshll.u32 %v5236, 16
        %v5378 = vrot.slane %v5376, 5
        %v5379 = vor.u32 %v5375, %v5378
        %v5380 = vrot.slane %v5379, 4
        %v5382 = vshll.u32 %v5237, 16
        %v5384 = vrot.slane %v5382, 5
        %v5385 = vsel %vm3107, %v5380, %v5384
        %v5386 = vshrl.u32 %v5237, 16
        %v5388 = vrot.slane %v5386, 4
        %v5389 = vor.u32 %v5388, %v5384
        %v5390 = vrot.slane %v5389, 4
        %v5392 = vshll.u32 %v5264, 16
        %v5394 = vrot.slane %v5392, 5
        %v5395 = vsel %vm3107, %v5390, %v5394
        %v5397 = vshrl.u32 %v5238, 16
        %v5399 = vrot.slane %v5397, 4
        %v5400 = vshll.u32 %v5238, 16
        %v5402 = vrot.slane %v5400, 5
        %v5403 = vor.u32 %v5399, %v5402
        %v5404 = vrot.slane %v5403, 4
        %v5406 = vshll.u32 %v5239, 16
        %v5408 = vrot.slane %v5406, 5
        %v5409 = vsel %vm3107, %v5404, %v5408
        %v5410 = vshrl.u32 %v5239, 16
        %v5412 = vrot.slane %v5410, 4
        %v5413 = vor.u32 %v5412, %v5408
        %v5414 = vrot.slane %v5413, 4
        %v5416 = vshll.u32 %v5265, 16
        %v5418 = vrot.slane %v5416, 5
        %v5419 = vsel %vm3107, %v5414, %v5418
        %v5421 = vshrl.u32 %v5240, 16
        %v5423 = vrot.slane %v5421, 4
        %v5424 = vshll.u32 %v5240, 16
        %v5426 = vrot.slane %v5424, 5
        %v5427 = vor.u32 %v5423, %v5426
        %v5428 = vrot.slane %v5427, 4
        %v5430 = vshll.u32 %v5241, 16
        %v5432 = vrot.slane %v5430, 5
        %v5433 = vsel %vm3107, %v5428, %v5432
        %v5434 = vshrl.u32 %v5241, 16
        %v5436 = vrot.slane %v5434, 4
        %v5437 = vor.u32 %v5436, %v5432
        %v5438 = vrot.slane %v5437, 4
        %v5440 = vshll.u32 %v5266, 16
        %v5442 = vrot.slane %v5440, 5
        %v5443 = vsel %vm3107, %v5438, %v5442
        %v5445 = vshrl.u32 %v5242, 16
        %v5447 = vrot.slane %v5445, 4
        %v5448 = vshll.u32 %v5242, 16
        %v5450 = vrot.slane %v5448, 5
        %v5451 = vor.u32 %v5447, %v5450
        %v5452 = vrot.slane %v5451, 4
        %v5454 = vshll.u32 %v5243, 16
        %v5456 = vrot.slane %v5454, 5
        %v5457 = vsel %vm3107, %v5452, %v5456
        %v5458 = vshrl.u32 %v5243, 16
        %v5460 = vrot.slane %v5458, 4
        %v5461 = vor.u32 %v5460, %v5456
        %v5462 = vrot.slane %v5461, 4
        %v5464 = vshll.u32 %v5267, 16
        %v5466 = vrot.slane %v5464, 5
        %v5467 = vsel %vm3107, %v5462, %v5466
        %v5469 = vshrl.u32 %v5244, 16
        %v5471 = vrot.slane %v5469, 4
        %v5472 = vshll.u32 %v5244, 16
        %v5474 = vrot.slane %v5472, 5
        %v5475 = vor.u32 %v5471, %v5474
        %v5476 = vrot.slane %v5475, 4
        %v5478 = vshll.u32 %v5245, 16
        %v5480 = vrot.slane %v5478, 5
        %v5481 = vsel %vm3107, %v5476, %v5480
        %v5482 = vshrl.u32 %v5245, 16
        %v5484 = vrot.slane %v5482, 4
        %v5485 = vor.u32 %v5484, %v5480
        %v5486 = vrot.slane %v5485, 4
        %v5488 = vshll.u32 %v5268, 16
        %v5490 = vrot.slane %v5488, 5
        %v5491 = vsel %vm3107, %v5486, %v5490
        %v5493 = vshrl.u32 %v5246, 16
        %v5495 = vrot.slane %v5493, 4
        %v5496 = vshll.u32 %v5246, 16
        %v5498 = vrot.slane %v5496, 5
        %v5499 = vor.u32 %v5495, %v5498
        %v5500 = vrot.slane %v5499, 4
        %v5502 = vshll.u32 %v5247, 16
        %v5504 = vrot.slane %v5502, 5
        %v5505 = vsel %vm3107, %v5500, %v5504
        %v5506 = vshrl.u32 %v5247, 16
        %v5508 = vrot.slane %v5506, 4
        %v5509 = vor.u32 %v5508, %v5504
        %v5510 = vrot.slane %v5509, 4
        %v5512 = vshll.u32 %v5269, 16
        %v5514 = vrot.slane %v5512, 5
        %v5515 = vsel %vm3107, %v5510, %v5514
        %v5517 = vshrl.u32 %v5248, 16
        %v5519 = vrot.slane %v5517, 4
        %v5520 = vshll.u32 %v5248, 16
        %v5522 = vrot.slane %v5520, 5
        %v5523 = vor.u32 %v5519, %v5522
        %v5524 = vrot.slane %v5523, 4
        %v5526 = vshll.u32 %v5249, 16
        %v5528 = vrot.slane %v5526, 5
        %v5529 = vsel %vm3107, %v5524, %v5528
        %v5530 = vshrl.u32 %v5249, 16
        %v5532 = vrot.slane %v5530, 4
        %v5533 = vor.u32 %v5532, %v5528
        %v5534 = vrot.slane %v5533, 4
        %v5536 = vshll.u32 %v5270, 16
        %v5538 = vrot.slane %v5536, 5
        %v5539 = vsel %vm3107, %v5534, %v5538
        %v5541 = vshrl.u32 %v5250, 16
        %v5543 = vrot.slane %v5541, 4
        %v5544 = vshll.u32 %v5250, 16
        %v5546 = vrot.slane %v5544, 5
        %v5547 = vor.u32 %v5543, %v5546
        %v5548 = vrot.slane %v5547, 4
        %v5550 = vshll.u32 %v5251, 16
        %v5552 = vrot.slane %v5550, 5
        %v5553 = vsel %vm3107, %v5548, %v5552
        %v5554 = vshrl.u32 %v5251, 16
        %v5556 = vrot.slane %v5554, 4
        %v5557 = vor.u32 %v5556, %v5552
        %v5558 = vrot.slane %v5557, 4
        %v5560 = vshll.u32 %v5271, 16
        %v5562 = vrot.slane %v5560, 5
        %v5563 = vsel %vm3107, %v5558, %v5562
        %v5565 = vshrl.u32 %v5252, 16
        %v5567 = vrot.slane %v5565, 4
        %v5568 = vshll.u32 %v5252, 16
        %v5570 = vrot.slane %v5568, 5
        %v5571 = vor.u32 %v5567, %v5570
        %v5572 = vrot.slane %v5571, 4
        %v5574 = vshll.u32 %v5253, 16
        %v5576 = vrot.slane %v5574, 5
        %v5577 = vsel %vm3107, %v5572, %v5576
        %v5578 = vshrl.u32 %v5253, 16
        %v5580 = vrot.slane %v5578, 4
        %v5581 = vor.u32 %v5580, %v5576
        %v5582 = vrot.slane %v5581, 4
        %v5584 = vshll.u32 %v5272, 16
        %v5586 = vrot.slane %v5584, 5
        %v5587 = vsel %vm3107, %v5582, %v5586
        %v5589 = vshrl.u32 %v5254, 16
        %v5591 = vrot.slane %v5589, 4
        %v5592 = vshll.u32 %v5254, 16
        %v5594 = vrot.slane %v5592, 5
        %v5595 = vor.u32 %v5591, %v5594
        %v5596 = vrot.slane %v5595, 4
        %v5598 = vshll.u32 %v5255, 16
        %v5600 = vrot.slane %v5598, 5
        %v5601 = vsel %vm3107, %v5596, %v5600
        %v5602 = vshrl.u32 %v5255, 16
        %v5604 = vrot.slane %v5602, 4
        %v5605 = vor.u32 %v5604, %v5600
        %v5606 = vrot.slane %v5605, 4
        %v5608 = vshll.u32 %v5273, 16
        %v5610 = vrot.slane %v5608, 5
        %v5611 = vsel %vm3107, %v5606, %v5610
        %v5613 = vshrl.u32 %v5256, 16
        %v5615 = vrot.slane %v5613, 4
        %v5616 = vshll.u32 %v5256, 16
        %v5618 = vrot.slane %v5616, 5
        %v5619 = vor.u32 %v5615, %v5618
        %v5620 = vrot.slane %v5619, 4
        %v5622 = vshll.u32 %v5257, 16
        %v5624 = vrot.slane %v5622, 5
        %v5625 = vsel %vm3107, %v5620, %v5624
        %v5626 = vshrl.u32 %v5257, 16
        %v5628 = vrot.slane %v5626, 4
        %v5629 = vor.u32 %v5628, %v5624
        %v5630 = vrot.slane %v5629, 4
        %v5632 = vshll.u32 %v5274, 16
        %v5634 = vrot.slane %v5632, 5
        %v5635 = vsel %vm3107, %v5630, %v5634
        %v5637 = vshrl.u32 %v5258, 16
        %v5639 = vrot.slane %v5637, 4
        %v5640 = vshll.u32 %v5258, 16
        %v5642 = vrot.slane %v5640, 5
        %v5643 = vor.u32 %v5639, %v5642
        %v5644 = vrot.slane %v5643, 4
        %v5646 = vshll.u32 %v5259, 16
        %v5648 = vrot.slane %v5646, 5
        %v5649 = vsel %vm3107, %v5644, %v5648
        %v5650 = vshrl.u32 %v5259, 16
        %v5652 = vrot.slane %v5650, 4
        %v5653 = vor.u32 %v5652, %v5648
        %v5654 = vrot.slane %v5653, 4
        %v5656 = vshll.u32 %v5275, 16
        %v5658 = vrot.slane %v5656, 5
        %v5659 = vsel %vm3107, %v5654, %v5658
        %v5660 = vld [vmem:[%s5227] sm:$0xe]
        %v5661 = vld [vmem:[%s5227 + $0xc] sm:$0xe]
        %v5662 = vld [vmem:[%s5227 + $0x18] sm:$0xe]
        %v5663 = vld [vmem:[%s5227 + $0x24] sm:$0xe]
        %v5664 = vld [vmem:[%s5227 + $0x30] sm:$0xe]
        %v5665 = vld [vmem:[%s5227 + $0x3c] sm:$0xe]
        %v5666 = vld [vmem:[%s5227 + $0x48] sm:$0xe]
        %v5667 = vld [vmem:[%s5227 + $0x54] sm:$0xe]
        %v5668 = vld [vmem:[%s5227 + $0x60] sm:$0xe]
        %v5669 = vld [vmem:[%s5227 + $0x6c] sm:$0xe]
        %v5670 = vld [vmem:[%s5227 + $0x78] sm:$0xe]
        %v5671 = vld [vmem:[%s5227 + $0x84] sm:$0xe]
        %v5672 = vld [vmem:[%s5227 + $0x90] sm:$0xe]
        %v5673 = vld [vmem:[%s5227 + $0x9c] sm:$0xe]
        %v5674 = vld [vmem:[%s5227 + $0xa8] sm:$0xe]
        %v5675 = vld [vmem:[%s5227 + $0xb4] sm:$0xe]
        %v5724 = vrot.slane %v5660, 5
        %v5725 = vrot.slane %v5724, 4
        %v5726 = vrot.slane %v5229, 5
        %v5727 = vsel %vm3558, %v5725, %v5726
        %v5728 = vrot.slane %v5726, 4
        %v5729 = vrot.slane %v5260, 5
        %v5730 = vsel %vm3558, %v5728, %v5729
        %v5731 = vrot.slane %v5661, 5
        %v5732 = vrot.slane %v5731, 4
        %v5733 = vrot.slane %v5231, 5
        %v5734 = vsel %vm3558, %v5732, %v5733
        %v5735 = vrot.slane %v5733, 4
        %v5736 = vrot.slane %v5261, 5
        %v5737 = vsel %vm3558, %v5735, %v5736
        %v5738 = vrot.slane %v5662, 5
        %v5739 = vrot.slane %v5738, 4
        %v5740 = vrot.slane %v5233, 5
        %v5741 = vsel %vm3558, %v5739, %v5740
        %v5742 = vrot.slane %v5740, 4
        %v5743 = vrot.slane %v5262, 5
        %v5744 = vsel %vm3558, %v5742, %v5743
        %v5745 = vrot.slane %v5663, 5
        %v5746 = vrot.slane %v5745, 4
        %v5747 = vrot.slane %v5235, 5
        %v5748 = vsel %vm3558, %v5746, %v5747
        %v5749 = vrot.slane %v5747, 4
        %v5750 = vrot.slane %v5263, 5
        %v5751 = vsel %vm3558, %v5749, %v5750
        %v5752 = vrot.slane %v5664, 5
        %v5753 = vrot.slane %v5752, 4
        %v5754 = vrot.slane %v5237, 5
        %v5755 = vsel %vm3558, %v5753, %v5754
        %v5756 = vrot.slane %v5754, 4
        %v5757 = vrot.slane %v5264, 5
        %v5758 = vsel %vm3558, %v5756, %v5757
        %v5759 = vrot.slane %v5665, 5
        %v5760 = vrot.slane %v5759, 4
        %v5761 = vrot.slane %v5239, 5
        %v5762 = vsel %vm3558, %v5760, %v5761
        %v5763 = vrot.slane %v5761, 4
        %v5764 = vrot.slane %v5265, 5
        %v5765 = vsel %vm3558, %v5763, %v5764
        %v5766 = vrot.slane %v5666, 5
        %v5767 = vrot.slane %v5766, 4
        %v5768 = vrot.slane %v5241, 5
        %v5769 = vsel %vm3558, %v5767, %v5768
        %v5770 = vrot.slane %v5768, 4
        %v5771 = vrot.slane %v5266, 5
        %v5772 = vsel %vm3558, %v5770, %v5771
        %v5773 = vrot.slane %v5667, 5
        %v5774 = vrot.slane %v5773, 4
        %v5775 = vrot.slane %v5243, 5
        %v5776 = vsel %vm3558, %v5774, %v5775
        %v5777 = vrot.slane %v5775, 4
        %v5778 = vrot.slane %v5267, 5
        %v5779 = vsel %vm3558, %v5777, %v5778
        %v5780 = vrot.slane %v5668, 5
        %v5781 = vrot.slane %v5780, 4
        %v5782 = vrot.slane %v5245, 5
        %v5783 = vsel %vm3558, %v5781, %v5782
        %v5784 = vrot.slane %v5782, 4
        %v5785 = vrot.slane %v5268, 5
        %v5786 = vsel %vm3558, %v5784, %v5785
        %v5787 = vrot.slane %v5669, 5
        %v5788 = vrot.slane %v5787, 4
        %v5789 = vrot.slane %v5247, 5
        %v5790 = vsel %vm3558, %v5788, %v5789
        %v5791 = vrot.slane %v5789, 4
        %v5792 = vrot.slane %v5269, 5
        %v5793 = vsel %vm3558, %v5791, %v5792
        %v5794 = vrot.slane %v5670, 5
        %v5795 = vrot.slane %v5794, 4
        %v5796 = vrot.slane %v5249, 5
        %v5797 = vsel %vm3558, %v5795, %v5796
        %v5798 = vrot.slane %v5796, 4
        %v5799 = vrot.slane %v5270, 5
        %v5800 = vsel %vm3558, %v5798, %v5799
        %v5801 = vrot.slane %v5671, 5
        %v5802 = vrot.slane %v5801, 4
        %v5803 = vrot.slane %v5251, 5
        %v5804 = vsel %vm3558, %v5802, %v5803
        %v5805 = vrot.slane %v5803, 4
        %v5806 = vrot.slane %v5271, 5
        %v5807 = vsel %vm3558, %v5805, %v5806
        %v5808 = vrot.slane %v5672, 5
        %v5809 = vrot.slane %v5808, 4
        %v5810 = vrot.slane %v5253, 5
        %v5811 = vsel %vm3558, %v5809, %v5810
        %v5812 = vrot.slane %v5810, 4
        %v5813 = vrot.slane %v5272, 5
        %v5814 = vsel %vm3558, %v5812, %v5813
        %v5815 = vrot.slane %v5673, 5
        %v5816 = vrot.slane %v5815, 4
        %v5817 = vrot.slane %v5255, 5
        %v5818 = vsel %vm3558, %v5816, %v5817
        %v5819 = vrot.slane %v5817, 4
        %v5820 = vrot.slane %v5273, 5
        %v5821 = vsel %vm3558, %v5819, %v5820
        %v5822 = vrot.slane %v5674, 5
        %v5823 = vrot.slane %v5822, 4
        %v5824 = vrot.slane %v5257, 5
        %v5825 = vsel %vm3558, %v5823, %v5824
        %v5826 = vrot.slane %v5824, 4
        %v5827 = vrot.slane %v5274, 5
        %v5828 = vsel %vm3558, %v5826, %v5827
        %v5829 = vrot.slane %v5675, 5
        %v5830 = vrot.slane %v5829, 4
        %v5831 = vrot.slane %v5259, 5
        %v5832 = vsel %vm3558, %v5830, %v5831
        %v5833 = vrot.slane %v5831, 4
        %v5834 = vrot.slane %v5275, 5
        %v5835 = vsel %vm3558, %v5833, %v5834
        %v5852 = vunpack.c.l.b16 %v5228
        %v5853 = vunpack.c.l.b16 %v5229
        %v5854 = vunpack.c.l.b16 %v5230
        %v5855 = vunpack.c.l.b16 %v5231
        %v5856 = vunpack.c.l.b16 %v5232
        %v5857 = vunpack.c.l.b16 %v5233
        %v5858 = vunpack.c.l.b16 %v5234
        %v5859 = vunpack.c.l.b16 %v5235
        %v5860 = vunpack.c.l.b16 %v5236
        %v5861 = vunpack.c.l.b16 %v5237
        %v5862 = vunpack.c.l.b16 %v5238
        %v5863 = vunpack.c.l.b16 %v5239
        %v5864 = vunpack.c.l.b16 %v5240
        %v5865 = vunpack.c.l.b16 %v5241
        %v5866 = vunpack.c.l.b16 %v5242
        %v5867 = vunpack.c.l.b16 %v5243
        %v5868 = vunpack.c.l.b16 %v5244
        %v5869 = vunpack.c.l.b16 %v5245
        %v5870 = vunpack.c.l.b16 %v5246
        %v5871 = vunpack.c.l.b16 %v5247
        %v5872 = vunpack.c.l.b16 %v5248
        %v5873 = vunpack.c.l.b16 %v5249
        %v5874 = vunpack.c.l.b16 %v5250
        %v5875 = vunpack.c.l.b16 %v5251
        %v5876 = vunpack.c.l.b16 %v5252
        %v5877 = vunpack.c.l.b16 %v5253
        %v5878 = vunpack.c.l.b16 %v5254
        %v5879 = vunpack.c.l.b16 %v5255
        %v5880 = vunpack.c.l.b16 %v5256
        %v5881 = vunpack.c.l.b16 %v5257
        %v5882 = vunpack.c.l.b16 %v5258
        %v5883 = vunpack.c.l.b16 %v5259
        %v5884 = vpack.c.b16 %v5853, %v5852
        %v5885 = vpack.c.b16 %v5855, %v5854
        %v5886 = vpack.c.b16 %v5857, %v5856
        %v5887 = vpack.c.b16 %v5859, %v5858
        %v5888 = vpack.c.b16 %v5861, %v5860
        %v5889 = vpack.c.b16 %v5863, %v5862
        %v5890 = vpack.c.b16 %v5865, %v5864
        %v5891 = vpack.c.b16 %v5867, %v5866
        %v5892 = vpack.c.b16 %v5869, %v5868
        %v5893 = vpack.c.b16 %v5871, %v5870
        %v5894 = vpack.c.b16 %v5873, %v5872
        %v5895 = vpack.c.b16 %v5875, %v5874
        %v5896 = vpack.c.b16 %v5877, %v5876
        %v5897 = vpack.c.b16 %v5879, %v5878
        %v5898 = vpack.c.b16 %v5881, %v5880
        %v5899 = vpack.c.b16 %v5883, %v5882
        %v5900 = vunpack.c.l.b16 %v5289
        %v5901 = vunpack.c.l.b16 %v5299
        %v5902 = vunpack.c.l.b16 %v5313
        %v5903 = vunpack.c.l.b16 %v5323
        %v5904 = vunpack.c.l.b16 %v5337
        %v5905 = vunpack.c.l.b16 %v5347
        %v5906 = vunpack.c.l.b16 %v5361
        %v5907 = vunpack.c.l.b16 %v5371
        %v5908 = vunpack.c.l.b16 %v5385
        %v5909 = vunpack.c.l.b16 %v5395
        %v5910 = vunpack.c.l.b16 %v5409
        %v5911 = vunpack.c.l.b16 %v5419
        %v5912 = vunpack.c.l.b16 %v5433
        %v5913 = vunpack.c.l.b16 %v5443
        %v5914 = vunpack.c.l.b16 %v5457
        %v5915 = vunpack.c.l.b16 %v5467
        %v5916 = vunpack.c.l.b16 %v5481
        %v5917 = vunpack.c.l.b16 %v5491
        %v5918 = vunpack.c.l.b16 %v5505
        %v5919 = vunpack.c.l.b16 %v5515
        %v5920 = vunpack.c.l.b16 %v5529
        %v5921 = vunpack.c.l.b16 %v5539
        %v5922 = vunpack.c.l.b16 %v5553
        %v5923 = vunpack.c.l.b16 %v5563
        %v5924 = vunpack.c.l.b16 %v5577
        %v5925 = vunpack.c.l.b16 %v5587
        %v5926 = vunpack.c.l.b16 %v5601
        %v5927 = vunpack.c.l.b16 %v5611
        %v5928 = vunpack.c.l.b16 %v5625
        %v5929 = vunpack.c.l.b16 %v5635
        %v5930 = vunpack.c.l.b16 %v5649
        %v5931 = vunpack.c.l.b16 %v5659
        %v5932 = vpack.c.b16 %v5901, %v5900
        %v5933 = vpack.c.b16 %v5903, %v5902
        %v5934 = vpack.c.b16 %v5905, %v5904
        %v5935 = vpack.c.b16 %v5907, %v5906
        %v5936 = vpack.c.b16 %v5909, %v5908
        %v5937 = vpack.c.b16 %v5911, %v5910
        %v5938 = vpack.c.b16 %v5913, %v5912
        %v5939 = vpack.c.b16 %v5915, %v5914
        %v5940 = vpack.c.b16 %v5917, %v5916
        %v5941 = vpack.c.b16 %v5919, %v5918
        %v5942 = vpack.c.b16 %v5921, %v5920
        %v5943 = vpack.c.b16 %v5923, %v5922
        %v5944 = vpack.c.b16 %v5925, %v5924
        %v5945 = vpack.c.b16 %v5927, %v5926
        %v5946 = vpack.c.b16 %v5929, %v5928
        %v5947 = vpack.c.b16 %v5931, %v5930
        %5948 = vrot.lane.b32.xlu0 %v5932, 32
        %v5949 = vpop.permute.xlu0 %5948
        %5950 = vrot.lane.b32.xlu0 %v5933, 32
        %v5951 = vpop.permute.xlu0 %5950
        %5952 = vrot.lane.b32.xlu0 %v5934, 32
        %v5953 = vpop.permute.xlu0 %5952
        %5954 = vrot.lane.b32.xlu0 %v5935, 32
        %v5955 = vpop.permute.xlu0 %5954
        %5956 = vrot.lane.b32.xlu0 %v5936, 32
        %v5957 = vpop.permute.xlu0 %5956
        %5958 = vrot.lane.b32.xlu0 %v5937, 32
        %v5959 = vpop.permute.xlu0 %5958
        %5960 = vrot.lane.b32.xlu0 %v5938, 32
        %v5961 = vpop.permute.xlu0 %5960
        %5962 = vrot.lane.b32.xlu0 %v5939, 32
        %v5963 = vpop.permute.xlu0 %5962
        %5964 = vrot.lane.b32.xlu0 %v5940, 32
        %v5965 = vpop.permute.xlu0 %5964
        %5966 = vrot.lane.b32.xlu0 %v5941, 32
        %v5967 = vpop.permute.xlu0 %5966
        %5968 = vrot.lane.b32.xlu0 %v5942, 32
        %v5969 = vpop.permute.xlu0 %5968
        %5970 = vrot.lane.b32.xlu0 %v5943, 32
        %v5971 = vpop.permute.xlu0 %5970
        %5972 = vrot.lane.b32.xlu0 %v5944, 32
        %v5973 = vpop.permute.xlu0 %5972
        %5974 = vrot.lane.b32.xlu0 %v5945, 32
        %v5975 = vpop.permute.xlu0 %5974
        %5976 = vrot.lane.b32.xlu0 %v5946, 32
        %v5977 = vpop.permute.xlu0 %5976
        %5978 = vrot.lane.b32.xlu0 %v5947, 32
        %v5979 = vpop.permute.xlu0 %5978
        %v5980 = vunpack.c.l.b16 %v5727
        %v5981 = vunpack.c.l.b16 %v5730
        %v5982 = vunpack.c.l.b16 %v5734
        %v5983 = vunpack.c.l.b16 %v5737
        %v5984 = vunpack.c.l.b16 %v5741
        %v5985 = vunpack.c.l.b16 %v5744
        %v5986 = vunpack.c.l.b16 %v5748
        %v5987 = vunpack.c.l.b16 %v5751
        %v5988 = vunpack.c.l.b16 %v5755
        %v5989 = vunpack.c.l.b16 %v5758
        %v5990 = vunpack.c.l.b16 %v5762
        %v5991 = vunpack.c.l.b16 %v5765
        %v5992 = vunpack.c.l.b16 %v5769
        %v5993 = vunpack.c.l.b16 %v5772
        %v5994 = vunpack.c.l.b16 %v5776
        %v5995 = vunpack.c.l.b16 %v5779
        %v5996 = vunpack.c.l.b16 %v5783
        %v5997 = vunpack.c.l.b16 %v5786
        %v5998 = vunpack.c.l.b16 %v5790
        %v5999 = vunpack.c.l.b16 %v5793
        %v6000 = vunpack.c.l.b16 %v5797
        %v6001 = vunpack.c.l.b16 %v5800
        %v6002 = vunpack.c.l.b16 %v5804
        %v6003 = vunpack.c.l.b16 %v5807
        %v6004 = vunpack.c.l.b16 %v5811
        %v6005 = vunpack.c.l.b16 %v5814
        %v6006 = vunpack.c.l.b16 %v5818
        %v6007 = vunpack.c.l.b16 %v5821
        %v6008 = vunpack.c.l.b16 %v5825
        %v6009 = vunpack.c.l.b16 %v5828
        %v6010 = vunpack.c.l.b16 %v5832
        %v6011 = vunpack.c.l.b16 %v5835
        %v6012 = vpack.c.b16 %v5981, %v5980
        %v6013 = vpack.c.b16 %v5983, %v5982
        %v6014 = vpack.c.b16 %v5985, %v5984
        %v6015 = vpack.c.b16 %v5987, %v5986
        %v6016 = vpack.c.b16 %v5989, %v5988
        %v6017 = vpack.c.b16 %v5991, %v5990
        %v6018 = vpack.c.b16 %v5993, %v5992
        %v6019 = vpack.c.b16 %v5995, %v5994
        %v6020 = vpack.c.b16 %v5997, %v5996
        %v6021 = vpack.c.b16 %v5999, %v5998
        %v6022 = vpack.c.b16 %v6001, %v6000
        %v6023 = vpack.c.b16 %v6003, %v6002
        %v6024 = vpack.c.b16 %v6005, %v6004
        %v6025 = vpack.c.b16 %v6007, %v6006
        %v6026 = vpack.c.b16 %v6009, %v6008
        %v6027 = vpack.c.b16 %v6011, %v6010
        %6028 = vrot.lane.b32.xlu0 %v6012, 64
        %v6029 = vpop.permute.xlu0 %6028
        %6030 = vrot.lane.b32.xlu0 %v6013, 64
        %v6031 = vpop.permute.xlu0 %6030
        %6032 = vrot.lane.b32.xlu0 %v6014, 64
        %v6033 = vpop.permute.xlu0 %6032
        %6034 = vrot.lane.b32.xlu0 %v6015, 64
        %v6035 = vpop.permute.xlu0 %6034
        %6036 = vrot.lane.b32.xlu0 %v6016, 64
        %v6037 = vpop.permute.xlu0 %6036
        %6038 = vrot.lane.b32.xlu0 %v6017, 64
        %v6039 = vpop.permute.xlu0 %6038
        %6040 = vrot.lane.b32.xlu0 %v6018, 64
        %v6041 = vpop.permute.xlu0 %6040
        %6042 = vrot.lane.b32.xlu0 %v6019, 64
        %v6043 = vpop.permute.xlu0 %6042
        %6044 = vrot.lane.b32.xlu0 %v6020, 64
        %v6045 = vpop.permute.xlu0 %6044
        %6046 = vrot.lane.b32.xlu0 %v6021, 64
        %v6047 = vpop.permute.xlu0 %6046
        %6048 = vrot.lane.b32.xlu0 %v6022, 64
        %v6049 = vpop.permute.xlu0 %6048
        %6050 = vrot.lane.b32.xlu0 %v6023, 64
        %v6051 = vpop.permute.xlu0 %6050
        %6052 = vrot.lane.b32.xlu0 %v6024, 64
        %v6053 = vpop.permute.xlu0 %6052
        %6054 = vrot.lane.b32.xlu0 %v6025, 64
        %v6055 = vpop.permute.xlu0 %6054
        %6056 = vrot.lane.b32.xlu0 %v6026, 64
        %v6057 = vpop.permute.xlu0 %6056
        %6058 = vrot.lane.b32.xlu0 %v6027, 64
        %v6059 = vpop.permute.xlu0 %6058
        %v6062 = vsel %vm2141, %v5884, %v5949
        %v6065 = vsel %vm2141, %v5885, %v5951
        %v6068 = vsel %vm2141, %v5886, %v5953
        %v6071 = vsel %vm2141, %v5887, %v5955
        %v6074 = vsel %vm2141, %v5888, %v5957
        %v6077 = vsel %vm2141, %v5889, %v5959
        %v6080 = vsel %vm2141, %v5890, %v5961
        %v6083 = vsel %vm2141, %v5891, %v5963
        %v6086 = vsel %vm2141, %v5892, %v5965
        %v6089 = vsel %vm2141, %v5893, %v5967
        %v6092 = vsel %vm2141, %v5894, %v5969
        %v6095 = vsel %vm2141, %v5895, %v5971
        %v6098 = vsel %vm2141, %v5896, %v5973
        %v6101 = vsel %vm2141, %v5897, %v5975
        %v6104 = vsel %vm2141, %v5898, %v5977
        %v6107 = vsel %vm2141, %v5899, %v5979
        %v6109 = vsel %vm3943, %v6062, %v6029
        %v6111 = vsel %vm3943, %v6065, %v6031
        %v6113 = vsel %vm3943, %v6068, %v6033
        %v6115 = vsel %vm3943, %v6071, %v6035
        %v6117 = vsel %vm3943, %v6074, %v6037
        %v6119 = vsel %vm3943, %v6077, %v6039
        %v6121 = vsel %vm3943, %v6080, %v6041
        %v6123 = vsel %vm3943, %v6083, %v6043
        %v6125 = vsel %vm3943, %v6086, %v6045
        %v6127 = vsel %vm3943, %v6089, %v6047
        %v6129 = vsel %vm3943, %v6092, %v6049
        %v6131 = vsel %vm3943, %v6095, %v6051
        %v6133 = vsel %vm3943, %v6098, %v6053
        %v6135 = vsel %vm3943, %v6101, %v6055
        %v6137 = vsel %vm3943, %v6104, %v6057
        %v6139 = vsel %vm3943, %v6107, %v6059
        %v6140 = vld [vmem:[%s2 + $0x60] sm:$0xf]
        %v6141 = vld [vmem:[%s2 + $0x64] sm:$0xf]
        %v6142 = vld [vmem:[%s2 + $0x68] sm:$0xf]
        %v6143 = vld [vmem:[%s2 + $0x6c] sm:$0xf]
        %v6144 = vld [vmem:[%s2 + $0x70] sm:$0xf]
        %v6145 = vld [vmem:[%s2 + $0x74] sm:$0xf]
        %v6146 = vld [vmem:[%s2 + $0x78] sm:$0xf]
        %v6147 = vld [vmem:[%s2 + $0x7c] sm:$0xf]
        %v6148 = vld [vmem:[%s2 + $0x80] sm:$0xf]
        %v6149 = vld [vmem:[%s2 + $0x84] sm:$0xf]
        %v6150 = vld [vmem:[%s2 + $0x88] sm:$0xf]
        %v6151 = vld [vmem:[%s2 + $0x8c] sm:$0xf]
        %v6164 = vunpack.c.l.b16 %v6140
        %v6165 = vunpack.c.l.b16 %v6141
        %v6166 = vunpack.c.l.b16 %v6142
        %v6167 = vunpack.c.l.b16 %v6143
        %v6168 = vunpack.c.l.b16 %v6144
        %v6169 = vunpack.c.l.b16 %v6145
        %v6170 = vunpack.c.l.b16 %v6146
        %v6171 = vunpack.c.l.b16 %v6147
        %v6172 = vunpack.c.l.b16 %v6148
        %v6173 = vunpack.c.l.b16 %v6149
        %v6174 = vunpack.c.l.b16 %v6150
        %v6175 = vunpack.c.l.b16 %v6151
        %v6176 = vpack.c.b16 %v6165, %v6164
        %v6177 = vpack.c.b16 %v6167, %v6166
        %v6178 = vpack.c.b16 %v6169, %v6168
        %v6179 = vpack.c.b16 %v6171, %v6170
        %v6180 = vpack.c.b16 %v6173, %v6172
        %v6181 = vpack.c.b16 %v6175, %v6174
        %v6188 = vsel %vm4948, %v6109, 0
        %v6190 = vsel %vm4948, %v6111, 0
        %v6192 = vsel %vm4948, %v6113, 0
        %v6194 = vsel %vm4948, %v6115, 0
        %v6196 = vsel %vm4948, %v6117, 0
        %v6198 = vsel %vm4948, %v6119, 0
        %v6200 = vsel %vm4948, %v6121, 0
        %v6202 = vsel %vm4948, %v6123, 0
        %v6204 = vsel %vm4948, %v6125, 0
        %v6206 = vsel %vm4948, %v6127, 0
        %v6208 = vsel %vm4948, %v6129, 0
        %v6210 = vsel %vm4948, %v6131, 0
        %v6212 = vsel %vm4948, %v6133, 0
        %v6214 = vsel %vm4948, %v6135, 0
        %v6216 = vsel %vm4948, %v6137, 0
        %v6218 = vsel %vm4948, %v6139, 0
        %6220 = vmatpush.bf16.msra.mxu0 0
        %6221 = vmatpush.bf16.msra.mxu0 0
        %6222 = vmatpush.bf16.msra.mxu0 %v6181
        %6223 = vmatpush.bf16.msra.mxu0 %v6180
        %6224 = vmatpush.bf16.msra.mxu0 %v6179
        %6225 = vmatpush.bf16.msra.mxu0 %v6178
        %6226 = vmatpush.bf16.msra.mxu0 %v6177
        %6227 = vmatpush.bf16.msra.mxu0 %v6176
        %6228 = vmatmul.bf16.gmra.mxu0 %v6188
        %v6229 = vpop.f32.mrf.mxu0
        %v6230 = vadd.f32 0.0, %v6229
        %v6231 = vpop.f32.mrf.mxu0
        %v6232 = vadd.f32 0.0, %v6231
        %6233 = vmatmul.bf16.gmra.mxu0 %v6190
        %v6234 = vpop.f32.mrf.mxu0
        %v6235 = vadd.f32 0.0, %v6234
        %v6236 = vpop.f32.mrf.mxu0
        %v6237 = vadd.f32 0.0, %v6236
        %6238 = vmatmul.bf16.gmra.mxu0 %v6192
        %v6239 = vpop.f32.mrf.mxu0
        %v6240 = vadd.f32 0.0, %v6239
        %v6241 = vpop.f32.mrf.mxu0
        %v6242 = vadd.f32 0.0, %v6241
        %6243 = vmatmul.bf16.gmra.mxu0 %v6194
        %v6244 = vpop.f32.mrf.mxu0
        %v6245 = vadd.f32 0.0, %v6244
        %v6246 = vpop.f32.mrf.mxu0
        %v6247 = vadd.f32 0.0, %v6246
        %6248 = vmatmul.bf16.gmra.mxu0 %v6196
        %v6249 = vpop.f32.mrf.mxu0
        %v6250 = vadd.f32 0.0, %v6249
        %v6251 = vpop.f32.mrf.mxu0
        %v6252 = vadd.f32 0.0, %v6251
        %6253 = vmatmul.bf16.gmra.mxu0 %v6198
        %v6254 = vpop.f32.mrf.mxu0
        %v6255 = vadd.f32 0.0, %v6254
        %v6256 = vpop.f32.mrf.mxu0
        %v6257 = vadd.f32 0.0, %v6256
        %6258 = vmatmul.bf16.gmra.mxu0 %v6200
        %v6259 = vpop.f32.mrf.mxu0
        %v6260 = vadd.f32 0.0, %v6259
        %v6261 = vpop.f32.mrf.mxu0
        %v6262 = vadd.f32 0.0, %v6261
        %6263 = vmatmul.bf16.gmra.mxu0 %v6202
        %v6264 = vpop.f32.mrf.mxu0
        %v6265 = vadd.f32 0.0, %v6264
        %v6266 = vpop.f32.mrf.mxu0
        %v6267 = vadd.f32 0.0, %v6266
        %6268 = vmatmul.bf16.gmra.mxu0 %v6204
        %v6269 = vpop.f32.mrf.mxu0
        %v6270 = vadd.f32 0.0, %v6269
        %v6271 = vpop.f32.mrf.mxu0
        %v6272 = vadd.f32 0.0, %v6271
        %6273 = vmatmul.bf16.gmra.mxu0 %v6206
        %v6274 = vpop.f32.mrf.mxu0
        %v6275 = vadd.f32 0.0, %v6274
        %v6276 = vpop.f32.mrf.mxu0
        %v6277 = vadd.f32 0.0, %v6276
        %6278 = vmatmul.bf16.gmra.mxu0 %v6208
        %v6279 = vpop.f32.mrf.mxu0
        %v6280 = vadd.f32 0.0, %v6279
        %v6281 = vpop.f32.mrf.mxu0
        %v6282 = vadd.f32 0.0, %v6281
        %6283 = vmatmul.bf16.gmra.mxu0 %v6210
        %v6284 = vpop.f32.mrf.mxu0
        %v6285 = vadd.f32 0.0, %v6284
        %v6286 = vpop.f32.mrf.mxu0
        %v6287 = vadd.f32 0.0, %v6286
        %6288 = vmatmul.bf16.gmra.mxu0 %v6212
        %v6289 = vpop.f32.mrf.mxu0
        %v6290 = vadd.f32 0.0, %v6289
        %v6291 = vpop.f32.mrf.mxu0
        %v6292 = vadd.f32 0.0, %v6291
        %6293 = vmatmul.bf16.gmra.mxu0 %v6214
        %v6294 = vpop.f32.mrf.mxu0
        %v6295 = vadd.f32 0.0, %v6294
        %v6296 = vpop.f32.mrf.mxu0
        %v6297 = vadd.f32 0.0, %v6296
        %6298 = vmatmul.bf16.gmra.mxu0 %v6216
        %v6299 = vpop.f32.mrf.mxu0
        %v6300 = vadd.f32 0.0, %v6299
        %v6301 = vpop.f32.mrf.mxu0
        %v6302 = vadd.f32 0.0, %v6301
        %6303 = vmatmul.bf16.gmra.mxu0 %v6218
        %v6304 = vpop.f32.mrf.mxu0
        %v6305 = vadd.f32 0.0, %v6304
        %v6306 = vpop.f32.mrf.mxu0
        %v6307 = vadd.f32 0.0, %v6306
        %6308 = vdwg.mxu0
        %v6309 = vadd.f32 %v5148, %v6230
        %v6310 = vadd.f32 %v5150, %v6232
        %v6311 = vadd.f32 %v5153, %v6235
        %v6312 = vadd.f32 %v5155, %v6237
        %v6313 = vadd.f32 %v5158, %v6240
        %v6314 = vadd.f32 %v5160, %v6242
        %v6315 = vadd.f32 %v5163, %v6245
        %v6316 = vadd.f32 %v5165, %v6247
        %v6317 = vadd.f32 %v5168, %v6250
        %v6318 = vadd.f32 %v5170, %v6252
        %v6319 = vadd.f32 %v5173, %v6255
        %v6320 = vadd.f32 %v5175, %v6257
        %v6321 = vadd.f32 %v5178, %v6260
        %v6322 = vadd.f32 %v5180, %v6262
        %v6323 = vadd.f32 %v5183, %v6265
        %v6324 = vadd.f32 %v5185, %v6267
        %v6325 = vadd.f32 %v5188, %v6270
        %v6326 = vadd.f32 %v5190, %v6272
        %v6327 = vadd.f32 %v5193, %v6275
        %v6328 = vadd.f32 %v5195, %v6277
        %v6329 = vadd.f32 %v5198, %v6280
        %v6330 = vadd.f32 %v5200, %v6282
        %v6331 = vadd.f32 %v5203, %v6285
        %v6332 = vadd.f32 %v5205, %v6287
        %v6333 = vadd.f32 %v5208, %v6290
        %v6334 = vadd.f32 %v5210, %v6292
        %v6335 = vadd.f32 %v5213, %v6295
        %v6336 = vadd.f32 %v5215, %v6297
        %v6337 = vadd.f32 %v5218, %v6300
        %v6338 = vadd.f32 %v5220, %v6302
        %v6339 = vadd.f32 %v5223, %v6305
        %v6340 = vadd.f32 %v5225, %v6307
        %v6341 = vsel %vm2141, %v6309, 0.0
        %v6342 = vsel %vm2141, %v6310, 0.0
        %v6343 = vadd.f32 %v6341, %v6342
        %v6344 = vsel %vm2141, %v6311, 0.0
        %v6345 = vadd.f32 %v6343, %v6344
        %v6346 = vsel %vm2141, %v6312, 0.0
        %v6347 = vadd.f32 %v6345, %v6346
        %v6348 = vsel %vm2141, %v6313, 0.0
        %v6349 = vadd.f32 %v6347, %v6348
        %v6350 = vsel %vm2141, %v6314, 0.0
        %v6351 = vadd.f32 %v6349, %v6350
        %v6352 = vsel %vm2141, %v6315, 0.0
        %v6353 = vadd.f32 %v6351, %v6352
        %v6354 = vsel %vm2141, %v6316, 0.0
        %v6355 = vadd.f32 %v6353, %v6354
        %v6356 = vsel %vm2141, %v6317, 0.0
        %v6357 = vadd.f32 %v6355, %v6356
        %v6358 = vsel %vm2141, %v6318, 0.0
        %v6359 = vadd.f32 %v6357, %v6358
        %v6360 = vsel %vm2141, %v6319, 0.0
        %v6361 = vadd.f32 %v6359, %v6360
        %v6362 = vsel %vm2141, %v6320, 0.0
        %v6363 = vadd.f32 %v6361, %v6362
        %v6364 = vsel %vm2141, %v6321, 0.0
        %v6365 = vadd.f32 %v6363, %v6364
        %v6366 = vsel %vm2141, %v6322, 0.0
        %v6367 = vadd.f32 %v6365, %v6366
        %v6368 = vsel %vm2141, %v6323, 0.0
        %v6369 = vadd.f32 %v6367, %v6368
        %v6370 = vsel %vm2141, %v6324, 0.0
        %v6371 = vadd.f32 %v6369, %v6370
        %v6372 = vsel %vm2141, %v6325, 0.0
        %v6373 = vadd.f32 %v6371, %v6372
        %v6374 = vsel %vm2141, %v6326, 0.0
        %v6375 = vadd.f32 %v6373, %v6374
        %v6376 = vsel %vm2141, %v6327, 0.0
        %v6377 = vadd.f32 %v6375, %v6376
        %v6378 = vsel %vm2141, %v6328, 0.0
        %v6379 = vadd.f32 %v6377, %v6378
        %v6380 = vsel %vm2141, %v6329, 0.0
        %v6381 = vadd.f32 %v6379, %v6380
        %v6382 = vsel %vm2141, %v6330, 0.0
        %v6383 = vadd.f32 %v6381, %v6382
        %v6384 = vsel %vm2141, %v6331, 0.0
        %v6385 = vadd.f32 %v6383, %v6384
        %v6386 = vsel %vm2141, %v6332, 0.0
        %v6387 = vadd.f32 %v6385, %v6386
        %v6388 = vsel %vm2141, %v6333, 0.0
        %v6389 = vadd.f32 %v6387, %v6388
        %v6390 = vsel %vm2141, %v6334, 0.0
        %v6391 = vadd.f32 %v6389, %v6390
        %v6392 = vsel %vm2141, %v6335, 0.0
        %v6393 = vadd.f32 %v6391, %v6392
        %v6394 = vsel %vm2141, %v6336, 0.0
        %v6395 = vadd.f32 %v6393, %v6394
        %v6396 = vsel %vm2141, %v6337, 0.0
        %v6397 = vadd.f32 %v6395, %v6396
        %v6398 = vsel %vm2141, %v6338, 0.0
        %v6399 = vadd.f32 %v6397, %v6398
        %v6400 = vsel %vm2141, %v6339, 0.0
        %v6401 = vadd.f32 %v6399, %v6400
        %v6402 = vsel %vm2141, %v6340, 0.0
        %v6403 = vadd.f32 %v6401, %v6402
        %v6404 = vrot.slane %v6403, 4
        %v6405 = vadd.f32 %v6403, %v6404
        %v6406 = vrot.slane %v6405, 2
        %v6407 = vadd.f32 %v6405, %v6406
        %v6408 = vrot.slane %v6407, 1
        %v6409 = vadd.f32 %v6407, %v6408
        %v6410 = vmul.f32 %v6409, %v2217
        %v6411 = vsub.f32 %v6309, %v6410
        %v6412 = vsub.f32 %v6310, %v6410
        %v6413 = vsub.f32 %v6311, %v6410
        %v6414 = vsub.f32 %v6312, %v6410
        %v6415 = vsub.f32 %v6313, %v6410
        %v6416 = vsub.f32 %v6314, %v6410
        %v6417 = vsub.f32 %v6315, %v6410
        %v6418 = vsub.f32 %v6316, %v6410
        %v6419 = vsub.f32 %v6317, %v6410
        %v6420 = vsub.f32 %v6318, %v6410
        %v6421 = vsub.f32 %v6319, %v6410
        %v6422 = vsub.f32 %v6320, %v6410
        %v6423 = vsub.f32 %v6321, %v6410
        %v6424 = vsub.f32 %v6322, %v6410
        %v6425 = vsub.f32 %v6323, %v6410
        %v6426 = vsub.f32 %v6324, %v6410
        %v6427 = vsub.f32 %v6325, %v6410
        %v6428 = vsub.f32 %v6326, %v6410
        %v6429 = vsub.f32 %v6327, %v6410
        %v6430 = vsub.f32 %v6328, %v6410
        %v6431 = vsub.f32 %v6329, %v6410
        %v6432 = vsub.f32 %v6330, %v6410
        %v6433 = vsub.f32 %v6331, %v6410
        %v6434 = vsub.f32 %v6332, %v6410
        %v6435 = vsub.f32 %v6333, %v6410
        %v6436 = vsub.f32 %v6334, %v6410
        %v6437 = vsub.f32 %v6335, %v6410
        %v6438 = vsub.f32 %v6336, %v6410
        %v6439 = vsub.f32 %v6337, %v6410
        %v6440 = vsub.f32 %v6338, %v6410
        %v6441 = vsub.f32 %v6339, %v6410
        %v6442 = vsub.f32 %v6340, %v6410
        %v6443 = vmul.f32 %v6411, %v6411
        %v6444 = vmul.f32 %v6412, %v6412
        %v6445 = vmul.f32 %v6413, %v6413
        %v6446 = vmul.f32 %v6414, %v6414
        %v6447 = vmul.f32 %v6415, %v6415
        %v6448 = vmul.f32 %v6416, %v6416
        %v6449 = vmul.f32 %v6417, %v6417
        %v6450 = vmul.f32 %v6418, %v6418
        %v6451 = vmul.f32 %v6419, %v6419
        %v6452 = vmul.f32 %v6420, %v6420
        %v6453 = vmul.f32 %v6421, %v6421
        %v6454 = vmul.f32 %v6422, %v6422
        %v6455 = vmul.f32 %v6423, %v6423
        %v6456 = vmul.f32 %v6424, %v6424
        %v6457 = vmul.f32 %v6425, %v6425
        %v6458 = vmul.f32 %v6426, %v6426
        %v6459 = vmul.f32 %v6427, %v6427
        %v6460 = vmul.f32 %v6428, %v6428
        %v6461 = vmul.f32 %v6429, %v6429
        %v6462 = vmul.f32 %v6430, %v6430
        %v6463 = vmul.f32 %v6431, %v6431
        %v6464 = vmul.f32 %v6432, %v6432
        %v6465 = vmul.f32 %v6433, %v6433
        %v6466 = vmul.f32 %v6434, %v6434
        %v6467 = vmul.f32 %v6435, %v6435
        %v6468 = vmul.f32 %v6436, %v6436
        %v6469 = vmul.f32 %v6437, %v6437
        %v6470 = vmul.f32 %v6438, %v6438
        %v6471 = vmul.f32 %v6439, %v6439
        %v6472 = vmul.f32 %v6440, %v6440
        %v6473 = vmul.f32 %v6441, %v6441
        %v6474 = vmul.f32 %v6442, %v6442
        %v6475 = vsel %vm2141, %v6443, 0.0
        %v6476 = vsel %vm2141, %v6444, 0.0
        %v6477 = vadd.f32 %v6475, %v6476
        %v6478 = vsel %vm2141, %v6445, 0.0
        %v6479 = vadd.f32 %v6477, %v6478
        %v6480 = vsel %vm2141, %v6446, 0.0
        %v6481 = vadd.f32 %v6479, %v6480
        %v6482 = vsel %vm2141, %v6447, 0.0
        %v6483 = vadd.f32 %v6481, %v6482
        %v6484 = vsel %vm2141, %v6448, 0.0
        %v6485 = vadd.f32 %v6483, %v6484
        %v6486 = vsel %vm2141, %v6449, 0.0
        %v6487 = vadd.f32 %v6485, %v6486
        %v6488 = vsel %vm2141, %v6450, 0.0
        %v6489 = vadd.f32 %v6487, %v6488
        %v6490 = vsel %vm2141, %v6451, 0.0
        %v6491 = vadd.f32 %v6489, %v6490
        %v6492 = vsel %vm2141, %v6452, 0.0
        %v6493 = vadd.f32 %v6491, %v6492
        %v6494 = vsel %vm2141, %v6453, 0.0
        %v6495 = vadd.f32 %v6493, %v6494
        %v6496 = vsel %vm2141, %v6454, 0.0
        %v6497 = vadd.f32 %v6495, %v6496
        %v6498 = vsel %vm2141, %v6455, 0.0
        %v6499 = vadd.f32 %v6497, %v6498
        %v6500 = vsel %vm2141, %v6456, 0.0
        %v6501 = vadd.f32 %v6499, %v6500
        %v6502 = vsel %vm2141, %v6457, 0.0
        %v6503 = vadd.f32 %v6501, %v6502
        %v6504 = vsel %vm2141, %v6458, 0.0
        %v6505 = vadd.f32 %v6503, %v6504
        %v6506 = vsel %vm2141, %v6459, 0.0
        %v6507 = vadd.f32 %v6505, %v6506
        %v6508 = vsel %vm2141, %v6460, 0.0
        %v6509 = vadd.f32 %v6507, %v6508
        %v6510 = vsel %vm2141, %v6461, 0.0
        %v6511 = vadd.f32 %v6509, %v6510
        %v6512 = vsel %vm2141, %v6462, 0.0
        %v6513 = vadd.f32 %v6511, %v6512
        %v6514 = vsel %vm2141, %v6463, 0.0
        %v6515 = vadd.f32 %v6513, %v6514
        %v6516 = vsel %vm2141, %v6464, 0.0
        %v6517 = vadd.f32 %v6515, %v6516
        %v6518 = vsel %vm2141, %v6465, 0.0
        %v6519 = vadd.f32 %v6517, %v6518
        %v6520 = vsel %vm2141, %v6466, 0.0
        %v6521 = vadd.f32 %v6519, %v6520
        %v6522 = vsel %vm2141, %v6467, 0.0
        %v6523 = vadd.f32 %v6521, %v6522
        %v6524 = vsel %vm2141, %v6468, 0.0
        %v6525 = vadd.f32 %v6523, %v6524
        %v6526 = vsel %vm2141, %v6469, 0.0
        %v6527 = vadd.f32 %v6525, %v6526
        %v6528 = vsel %vm2141, %v6470, 0.0
        %v6529 = vadd.f32 %v6527, %v6528
        %v6530 = vsel %vm2141, %v6471, 0.0
        %v6531 = vadd.f32 %v6529, %v6530
        %v6532 = vsel %vm2141, %v6472, 0.0
        %v6533 = vadd.f32 %v6531, %v6532
        %v6534 = vsel %vm2141, %v6473, 0.0
        %v6535 = vadd.f32 %v6533, %v6534
        %v6536 = vsel %vm2141, %v6474, 0.0
        %v6537 = vadd.f32 %v6535, %v6536
        %v6538 = vrot.slane %v6537, 4
        %v6539 = vadd.f32 %v6537, %v6538
        %v6540 = vrot.slane %v6539, 2
        %v6541 = vadd.f32 %v6539, %v6540
        %v6542 = vrot.slane %v6541, 1
        %v6543 = vadd.f32 %v6541, %v6542
        %v6544 = vmul.f32 %v6543, %v2217
        %v6545 = vadd.f32 %v6544, 1e-05
        %v6546 = vrsqrt.pop %v6545
        %v6547 = vmul.f32 %v6546, %v6545
        %v6548 = vmul.f32 %v6547, %v6546
        %v6549 = vmul.f32 0.5, %v6548
        %v6550 = vsub.f32 1.5, %v6549
        %v6551 = vmul.f32 %v6546, %v6550
        %vm6552 = vweird.f32 %v6545
        %vm6553 = vweird.f32 %v6546
        %vm6554 = vmor %vm6552, %vm6553
        %v6555 = vsel %vm6554, %v6546, %v6551
        %v6556 = vmul.f32 %v6411, %v6555
        %v6557 = vmul.f32 %v6412, %v6555
        %v6558 = vmul.f32 %v6413, %v6555
        %v6559 = vmul.f32 %v6414, %v6555
        %v6560 = vmul.f32 %v6415, %v6555
        %v6561 = vmul.f32 %v6416, %v6555
        %v6562 = vmul.f32 %v6417, %v6555
        %v6563 = vmul.f32 %v6418, %v6555
        %v6564 = vmul.f32 %v6419, %v6555
        %v6565 = vmul.f32 %v6420, %v6555
        %v6566 = vmul.f32 %v6421, %v6555
        %v6567 = vmul.f32 %v6422, %v6555
        %v6568 = vmul.f32 %v6423, %v6555
        %v6569 = vmul.f32 %v6424, %v6555
        %v6570 = vmul.f32 %v6425, %v6555
        %v6571 = vmul.f32 %v6426, %v6555
        %v6572 = vmul.f32 %v6427, %v6555
        %v6573 = vmul.f32 %v6428, %v6555
        %v6574 = vmul.f32 %v6429, %v6555
        %v6575 = vmul.f32 %v6430, %v6555
        %v6576 = vmul.f32 %v6431, %v6555
        %v6577 = vmul.f32 %v6432, %v6555
        %v6578 = vmul.f32 %v6433, %v6555
        %v6579 = vmul.f32 %v6434, %v6555
        %v6580 = vmul.f32 %v6435, %v6555
        %v6581 = vmul.f32 %v6436, %v6555
        %v6582 = vmul.f32 %v6437, %v6555
        %v6583 = vmul.f32 %v6438, %v6555
        %v6584 = vmul.f32 %v6439, %v6555
        %v6585 = vmul.f32 %v6440, %v6555
        %v6586 = vmul.f32 %v6441, %v6555
        %v6587 = vmul.f32 %v6442, %v6555
        %v6588 = vmax.f32 %v6556, 0.0
        %v6589 = vmax.f32 %v6557, 0.0
        %v6590 = vmax.f32 %v6558, 0.0
        %v6591 = vmax.f32 %v6559, 0.0
        %v6592 = vmax.f32 %v6560, 0.0
        %v6593 = vmax.f32 %v6561, 0.0
        %v6594 = vmax.f32 %v6562, 0.0
        %v6595 = vmax.f32 %v6563, 0.0
        %v6596 = vmax.f32 %v6564, 0.0
        %v6597 = vmax.f32 %v6565, 0.0
        %v6598 = vmax.f32 %v6566, 0.0
        %v6599 = vmax.f32 %v6567, 0.0
        %v6600 = vmax.f32 %v6568, 0.0
        %v6601 = vmax.f32 %v6569, 0.0
        %v6602 = vmax.f32 %v6570, 0.0
        %v6603 = vmax.f32 %v6571, 0.0
        %v6604 = vmax.f32 %v6572, 0.0
        %v6605 = vmax.f32 %v6573, 0.0
        %v6606 = vmax.f32 %v6574, 0.0
        %v6607 = vmax.f32 %v6575, 0.0
        %v6608 = vmax.f32 %v6576, 0.0
        %v6609 = vmax.f32 %v6577, 0.0
        %v6610 = vmax.f32 %v6578, 0.0
        %v6611 = vmax.f32 %v6579, 0.0
        %v6612 = vmax.f32 %v6580, 0.0
        %v6613 = vmax.f32 %v6581, 0.0
        %v6614 = vmax.f32 %v6582, 0.0
        %v6615 = vmax.f32 %v6583, 0.0
        %v6616 = vmax.f32 %v6584, 0.0
        %v6617 = vmax.f32 %v6585, 0.0
        %v6618 = vmax.f32 %v6586, 0.0
        %v6619 = vmax.f32 %v6587, 0.0
        %6652 = vrot.lane.b32.xlu0 %v2434, 96
        %v6653 = vpop.permute.xlu0 %6652
        %6654 = vrot.lane.b32.xlu0 %v2435, 96
        %v6655 = vpop.permute.xlu0 %6654
        %6656 = vrot.lane.b32.xlu0 %v2436, 96
        %v6657 = vpop.permute.xlu0 %6656
        %6658 = vrot.lane.b32.xlu0 %v2437, 96
        %v6659 = vpop.permute.xlu0 %6658
        %6660 = vrot.lane.b32.xlu0 %v2438, 96
        %v6661 = vpop.permute.xlu0 %6660
        %6662 = vrot.lane.b32.xlu0 %v2439, 96
        %v6663 = vpop.permute.xlu0 %6662
        %6664 = vrot.lane.b32.xlu0 %v2440, 96
        %v6665 = vpop.permute.xlu0 %6664
        %6666 = vrot.lane.b32.xlu0 %v2441, 96
        %v6667 = vpop.permute.xlu0 %6666
        %6668 = vrot.lane.b32.xlu0 %v2442, 96
        %v6669 = vpop.permute.xlu0 %6668
        %6670 = vrot.lane.b32.xlu0 %v2443, 96
        %v6671 = vpop.permute.xlu0 %6670
        %6672 = vrot.lane.b32.xlu0 %v2444, 96
        %v6673 = vpop.permute.xlu0 %6672
        %6674 = vrot.lane.b32.xlu0 %v2445, 96
        %v6675 = vpop.permute.xlu0 %6674
        %6676 = vrot.lane.b32.xlu0 %v2446, 96
        %v6677 = vpop.permute.xlu0 %6676
        %6678 = vrot.lane.b32.xlu0 %v2447, 96
        %v6679 = vpop.permute.xlu0 %6678
        %6680 = vrot.lane.b32.xlu0 %v2448, 96
        %v6681 = vpop.permute.xlu0 %6680
        %6682 = vrot.lane.b32.xlu0 %v2449, 96
        %v6683 = vpop.permute.xlu0 %6682
        %6684 = vrot.lane.b32.xlu0 %v2450, 96
        %v6685 = vpop.permute.xlu0 %6684
        %6686 = vrot.lane.b32.xlu0 %v2451, 96
        %v6687 = vpop.permute.xlu0 %6686
        %6688 = vrot.lane.b32.xlu0 %v2452, 96
        %v6689 = vpop.permute.xlu0 %6688
        %6690 = vrot.lane.b32.xlu0 %v2453, 96
        %v6691 = vpop.permute.xlu0 %6690
        %6692 = vrot.lane.b32.xlu0 %v2454, 96
        %v6693 = vpop.permute.xlu0 %6692
        %6694 = vrot.lane.b32.xlu0 %v2455, 96
        %v6695 = vpop.permute.xlu0 %6694
        %6696 = vrot.lane.b32.xlu0 %v2456, 96
        %v6697 = vpop.permute.xlu0 %6696
        %6698 = vrot.lane.b32.xlu0 %v2457, 96
        %v6699 = vpop.permute.xlu0 %6698
        %6700 = vrot.lane.b32.xlu0 %v2458, 96
        %v6701 = vpop.permute.xlu0 %6700
        %6702 = vrot.lane.b32.xlu0 %v2459, 96
        %v6703 = vpop.permute.xlu0 %6702
        %6704 = vrot.lane.b32.xlu0 %v2460, 96
        %v6705 = vpop.permute.xlu0 %6704
        %6706 = vrot.lane.b32.xlu0 %v2461, 96
        %v6707 = vpop.permute.xlu0 %6706
        %6708 = vrot.lane.b32.xlu0 %v2462, 96
        %v6709 = vpop.permute.xlu0 %6708
        %6710 = vrot.lane.b32.xlu0 %v2463, 96
        %v6711 = vpop.permute.xlu0 %6710
        %6712 = vrot.lane.b32.xlu0 %v2464, 96
        %v6713 = vpop.permute.xlu0 %6712
        %6714 = vrot.lane.b32.xlu0 %v2465, 96
        %v6715 = vpop.permute.xlu0 %6714
        %v6748 = vadd.f32 %v6588, %v6653
        %v6749 = vadd.f32 %v6589, %v6655
        %v6750 = vadd.f32 %v6590, %v6657
        %v6751 = vadd.f32 %v6591, %v6659
        %v6752 = vadd.f32 %v6592, %v6661
        %v6753 = vadd.f32 %v6593, %v6663
        %v6754 = vadd.f32 %v6594, %v6665
        %v6755 = vadd.f32 %v6595, %v6667
        %v6756 = vadd.f32 %v6596, %v6669
        %v6757 = vadd.f32 %v6597, %v6671
        %v6758 = vadd.f32 %v6598, %v6673
        %v6759 = vadd.f32 %v6599, %v6675
        %v6760 = vadd.f32 %v6600, %v6677
        %v6761 = vadd.f32 %v6601, %v6679
        %v6762 = vadd.f32 %v6602, %v6681
        %v6763 = vadd.f32 %v6603, %v6683
        %v6764 = vadd.f32 %v6604, %v6685
        %v6765 = vadd.f32 %v6605, %v6687
        %v6766 = vadd.f32 %v6606, %v6689
        %v6767 = vadd.f32 %v6607, %v6691
        %v6768 = vadd.f32 %v6608, %v6693
        %v6769 = vadd.f32 %v6609, %v6695
        %v6770 = vadd.f32 %v6610, %v6697
        %v6771 = vadd.f32 %v6611, %v6699
        %v6772 = vadd.f32 %v6612, %v6701
        %v6773 = vadd.f32 %v6613, %v6703
        %v6774 = vadd.f32 %v6614, %v6705
        %v6775 = vadd.f32 %v6615, %v6707
        %v6776 = vadd.f32 %v6616, %v6709
        %v6777 = vadd.f32 %v6617, %v6711
        %v6778 = vadd.f32 %v6618, %v6713
        %v6779 = vadd.f32 %v6619, %v6715
        %6780 = vxpose.xlu0.b32.start [1/16] %v6748, 128
        %6781 = vxpose.xlu0.b32.cont [2/16] %v6749, 128
        %6782 = vxpose.xlu0.b32.cont [3/16] %v6750, 128
        %6783 = vxpose.xlu0.b32.cont [4/16] %v6751, 128
        %6784 = vxpose.xlu0.b32.cont [5/16] %v6752, 128
        %6785 = vxpose.xlu0.b32.cont [6/16] %v6753, 128
        %6786 = vxpose.xlu0.b32.cont [7/16] %v6754, 128
        %6787 = vxpose.xlu0.b32.cont [8/16] %v6755, 128
        %6788 = vxpose.xlu0.b32.cont [9/16] %v6756, 128
        %6789 = vxpose.xlu0.b32.cont [10/16] %v6757, 128
        %6790 = vxpose.xlu0.b32.cont [11/16] %v6758, 128
        %6791 = vxpose.xlu0.b32.cont [12/16] %v6759, 128
        %6792 = vxpose.xlu0.b32.cont [13/16] %v6760, 128
        %6793 = vxpose.xlu0.b32.cont [14/16] %v6761, 128
        %6794 = vxpose.xlu0.b32.cont [15/16] %v6762, 128
        %6795 = vxpose.xlu0.b32.end [16/16] %v6763, 128
        %v6796 = vpop.trf.xlu0
        %v6797 = vpop.trf.xlu0
        %v6798 = vpop.trf.xlu0
        %v6799 = vpop.trf.xlu0
        %v6800 = vpop.trf.xlu0
        %v6801 = vpop.trf.xlu0
        %v6802 = vpop.trf.xlu0
        %v6803 = vpop.trf.xlu0
        %v6804 = vpop.trf.xlu0
        %v6805 = vpop.trf.xlu0
        %v6806 = vpop.trf.xlu0
        %v6807 = vpop.trf.xlu0
        %v6808 = vpop.trf.xlu0
        %v6809 = vpop.trf.xlu0
        %v6810 = vpop.trf.xlu0
        %v6811 = vpop.trf.xlu0
        %6812 = vxpose.xlu0.b32.start [1/16] %v6764, 128
        %6813 = vxpose.xlu0.b32.cont [2/16] %v6765, 128
        %6814 = vxpose.xlu0.b32.cont [3/16] %v6766, 128
        %6815 = vxpose.xlu0.b32.cont [4/16] %v6767, 128
        %6816 = vxpose.xlu0.b32.cont [5/16] %v6768, 128
        %6817 = vxpose.xlu0.b32.cont [6/16] %v6769, 128
        %6818 = vxpose.xlu0.b32.cont [7/16] %v6770, 128
        %6819 = vxpose.xlu0.b32.cont [8/16] %v6771, 128
        %6820 = vxpose.xlu0.b32.cont [9/16] %v6772, 128
        %6821 = vxpose.xlu0.b32.cont [10/16] %v6773, 128
        %6822 = vxpose.xlu0.b32.cont [11/16] %v6774, 128
        %6823 = vxpose.xlu0.b32.cont [12/16] %v6775, 128
        %6824 = vxpose.xlu0.b32.cont [13/16] %v6776, 128
        %6825 = vxpose.xlu0.b32.cont [14/16] %v6777, 128
        %6826 = vxpose.xlu0.b32.cont [15/16] %v6778, 128
        %6827 = vxpose.xlu0.b32.end [16/16] %v6779, 128
        %v6828 = vpop.trf.xlu0
        %v6829 = vpop.trf.xlu0
        %v6830 = vpop.trf.xlu0
        %v6831 = vpop.trf.xlu0
        %v6832 = vpop.trf.xlu0
        %v6833 = vpop.trf.xlu0
        %v6834 = vpop.trf.xlu0
        %v6835 = vpop.trf.xlu0
        %v6836 = vpop.trf.xlu0
        %v6837 = vpop.trf.xlu0
        %v6838 = vpop.trf.xlu0
        %v6839 = vpop.trf.xlu0
        %v6840 = vpop.trf.xlu0
        %v6841 = vpop.trf.xlu0
        %v6842 = vpop.trf.xlu0
        %v6843 = vpop.trf.xlu0
        %6844 = vst [vmem:[%s190] sm:$0xff] %v6796
        %6845 = vst [vmem:[%s190 + $0x8] sm:$0xff] %v6828
        %6846 = vst [vmem:[%s190 + $0x10] sm:$0xff] %v6797
        %6847 = vst [vmem:[%s190 + $0x18] sm:$0xff] %v6829
        %6848 = vst [vmem:[%s190 + $0x20] sm:$0xff] %v6798
        %6849 = vst [vmem:[%s190 + $0x28] sm:$0xff] %v6830
        %6850 = vst [vmem:[%s190 + $0x30] sm:$0xff] %v6799
        %6851 = vst [vmem:[%s190 + $0x38] sm:$0xff] %v6831
        %s6852 = sand.u32 %s115, 1
        %s6853 = scalar_lea.sflag [#allocation5], %s6852
        %s6854 = sand.u32 %s115, 1
        %s6855 = smul.addr %s6854, 64
        %s6856 = scalar_lea.vmem [#allocation4], %s6855
        // Predicated region
        $region37: #{tpu_custom_call.1} parent=35 // pred_check
          %p6857 = pneg %p125
        $region38: #{tpu_custom_call.1} parent=35 // pred_check_branch
          %6859 = sbr.rel (%p6857) target = $region40
        $region39: #{tpu_custom_call.1} parent=35 // pred_region
          %6861 = vsyncadd %s6853, 0
          %s6862 = smul.addr %s18, 8
          %s6863 = smul.addr %s6862, 8
          %s6864 = scalar_lea.hbm %s4, %s6863
          %s6865 = sshll.u32 %s6856, 4
          %s6866 = int_to_ptr.vmem [resolvable:$true] %s6865
          %s6867 = sshll.u32 %s6864, 4
          %s6868 = int_to_ptr.hbm [resolvable:$true] %s6867
          %6873 = dma.vmem_to_hbm [thread:$0]  %s6866, 1024, %s6868, %s6853, 256, 256, 16
        $region40: #{tpu_custom_call.1} parent=35 // pred_fallthru
          _
      $region36: #{tpu_custom_call.1} parent=5 // pred_fallthru
        _
      %p6874 = scmp.le.s32.totalorder 2, %s13
      // Predicated region
      $region41: #{tpu_custom_call.1} parent=5 // pred_check
        %p6875 = pneg %p6874
      $region42: #{tpu_custom_call.1} parent=5 // pred_check_branch
        %6877 = sbr.rel (%p6875) target = $region44
      $region43: #{tpu_custom_call.1} parent=5 // pred_region
        %s6878 = ssub.s32 %s13, 2
        // Predicated region
        $region45: #{tpu_custom_call.1} parent=43 // pred_check
          %p6879 = pneg %p131
        $region46: #{tpu_custom_call.1} parent=43 // pred_check_branch
          %6881 = sbr.rel (%p6879) target = $region48
        $region47: #{tpu_custom_call.1} parent=43 // pred_region
          %s6882 = sand.u32 %s116, 1
          %s6883 = scalar_lea.sflag [#allocation5], %s6882
          %s6884 = sand.u32 %s116, 1
          %s6885 = smul.addr %s6884, 64
          %s6886 = scalar_lea.vmem [#allocation4], %s6885
          %6888 = dma.done %s6883, 1024
        $region48: #{tpu_custom_call.1} parent=43 // pred_fallthru
          _
      $region44: #{tpu_custom_call.1} parent=5 // pred_fallthru
        _
    $region6: #{tpu_custom_call.1} parent=1 // loop_footer
      %s17 = sadd.s32 1, %s13
    $region7: #{tpu_custom_call.1} parent=1 // loop_footer_branch
      %12 = sbr.rel target = $region3
    $region8: #{tpu_custom_call.1} parent=1 // loop_exit
      _
    %6889 = vsyncpa [#allocation5], 1
    %s6890 = scalar_lea.sflag [#allocation5], 1
    %6891 = vsyncpa %s6890, 1

</llo_original>
